<compile_context>
chip_gen: v7x
topology: tpu7x:2x2x1
jax: 0.10.0
libtpu: 0.0.40
codegen_flags: <defaults>
</compile_context>

<pallas_src>
import functools

import jax
import jax.numpy as jnp
from jax import lax
from jax.experimental import pallas as pl
from jax.experimental.pallas import tpu as pltpu

BN_EPS = 1e-5
VMEM_LIMIT = 32 * 1024 * 1024   # explicit scoped-VMEM budget (safe on v5e/v6e/v7x)


def _choose_tile(n):
    """Points-per-tile: keep >=2 tiles when possible (v7x has 2 TensorCores
    sharing the 'parallel' grid), larger tiles for large N to amortize the
    ~0.35us/step overhead.  Per-tile VMEM stays well under the scoped limit."""
    if n >= 4096:
        return 1024
    if n >= 1024:
        return 512
    if n > 256:
        return 256
    return 128


def _replicated(shape):
    """BlockSpec for a grid-invariant array kept resident in VMEM."""
    zeros = (0,) * len(shape)
    return pl.BlockSpec(shape, lambda *_: zeros)


def _conv1_vpu(p, w1, b1):
    """(TN,3) x (3,64) pointwise conv+relu as 3 broadcast-FMAs on the VPU (f32)."""
    h = b1 + p[:, 0:1] * w1[0:1, :] + p[:, 1:2] * w1[1:2, :] + p[:, 2:3] * w1[2:3, :]
    return jnp.maximum(h, 0.0)


# ----------------------------- kernels --------------------------------------

def _encoder_kernel(info_ref, batch_ref, pos_ref, w1_ref, b1_ref, w2_ref, b2_ref,
                    w3_ref, b3_ref, pmax_ref, *, num_graphs):
    # conv1+bn1+relu (VPU, f32); conv2+bn2+relu and conv3+bn3 on the MXU with
    # bf16 operands and f32 accumulation.  The (TN,1024) point feature never
    # leaves VMEM; it is reduced to per-tile/per-graph maxima.
    h1 = _conv1_vpu(pos_ref[...], w1_ref[...], b1_ref[...])
    h2 = jnp.maximum(
        jnp.dot(h1.astype(jnp.bfloat16), w2_ref[...],
                preferred_element_type=jnp.float32) + b2_ref[...], 0.0)
    pf = jnp.dot(h2.astype(jnp.bfloat16), w3_ref[...],
                 preferred_element_type=jnp.float32) + b3_ref[...]

    # Segment max restricted to the graphs actually present in this tile
    # (scalar-prefetched [g_lo, g_hi]) -> O(graphs-in-tile), not O(num_graphs).
    i = pl.program_id(0)
    g_lo = info_ref[i, 0]
    g_hi = info_ref[i, 1]
    bidx = batch_ref[...]                                      # (TN, 1) int32
    row_ids = lax.broadcasted_iota(jnp.int32, (num_graphs, 1), 0)

    def body(g, acc):
        m = jnp.max(jnp.where(bidx == g, pf, -jnp.inf), axis=0, keepdims=True)
        return jnp.where(row_ids == g, m, acc)                 # write row g

    init = jnp.full((num_graphs, 1024), -jnp.inf, jnp.float32)
    pmax = lax.fori_loop(g_lo, g_hi + 1, body, init)
    # Single dense store of the whole (1, G, 1024) block.
    pmax_ref[...] = pmax[None]


def _decoder_kernel(batch_ref, pos_ref, w1_ref, b1_ref, gf_ref, w4b_ref, b4_ref,
                    w4a_ref, w5_ref, b5_ref, w6_ref, b6_ref, w7_ref, b7_ref,
                    out_ref, *, num_graphs):
    # Recompute local feature h1 from pos (3 VPU FMAs) -> no (N,64) HBM trip.
    h1 = _conv1_vpu(pos_ref[...], w1_ref[...], b1_ref[...])

    # Hoisted 1024->512 half of conv4, recomputed per tile from the per-graph
    # global feature (tiny), then scattered to points with a one-hot
    # (TN,G)@(G,512) MXU matmul.  Padded points (graph id == num_graphs) get an
    # all-zero one-hot row -> zero global contribution.
    gb4 = jnp.dot(gf_ref[...], w4b_ref[...],
                  preferred_element_type=jnp.float32) + b4_ref[...]      # (G, 512)
    bidx = batch_ref[...]                                                # (TN, 1)
    onehot = (bidx == lax.broadcasted_iota(jnp.int32, (1, num_graphs), 1)
              ).astype(jnp.float32)                                      # (TN, G)
    gb = jnp.dot(onehot, gb4, preferred_element_type=jnp.float32)        # (TN, 512)

    # concat([h1, global]) @ W4.T == h1 @ W4a.T + global @ W4b.T
    h4 = jnp.maximum(
        jnp.dot(h1.astype(jnp.bfloat16), w4a_ref[...],
                preferred_element_type=jnp.float32) + gb, 0.0)
    h5 = jnp.maximum(
        jnp.dot(h4.astype(jnp.bfloat16), w5_ref[...],
                preferred_element_type=jnp.float32) + b5_ref[...], 0.0)
    h6 = jnp.maximum(
        jnp.dot(h5.astype(jnp.bfloat16), w6_ref[...],
                preferred_element_type=jnp.float32) + b6_ref[...], 0.0)
    # Dropout(p=0.3) is identity in eval mode; conv7 + log_softmax stay f32.
    logits = jnp.dot(h6, w7_ref[...], preferred_element_type=jnp.float32) + b7_ref[...]
    m = jnp.max(logits, axis=-1, keepdims=True)
    z = logits - m
    out_ref[...] = z - jnp.log(jnp.sum(jnp.exp(z), axis=-1, keepdims=True))


# ----------------------------- wrapper ---------------------------------------

def _fold_bn(W, b, bn, eps=BN_EPS):
    gamma, beta, mean, var = bn
    s = gamma / jnp.sqrt(var + eps)
    return W * s[:, None], (b - mean) * s + beta


def pointnet_forward(pos, batch, params, num_classes, num_graphs, tn=None):
    N = pos.shape[0]
    if tn is None:
        tn = _choose_tile(N)
    n_pad = ((N + tn - 1) // tn) * tn
    nt = n_pad // tn

    if n_pad != N:
        # Padded points get an out-of-range graph id so they never win a
        # segment max and never pick up a global-feature row.
        pos = jnp.pad(pos, ((0, n_pad - N), (0, 0)))
        batch = jnp.pad(batch, (0, n_pad - N), constant_values=num_graphs)
    batch = batch.astype(jnp.int32)
    batch2d = batch.reshape(n_pad, 1)

    # Per-tile graph-id range for the encoder segment max (scalar-prefetched).
    bt = batch.reshape(nt, tn)
    valid = bt < num_graphs
    g_lo = jnp.min(jnp.where(valid, bt, num_graphs), axis=1)
    g_hi = jnp.max(jnp.where(valid, bt, -1), axis=1)
    tile_info = jnp.stack([g_lo, g_hi], axis=1).astype(jnp.int32)        # (nt, 2)

    # Fold eval-mode BN into conv weights; transpose so conv == X @ Wt + b.
    # Large matmul weights are stored bf16 (f32 accumulation in-kernel).
    W1, b1 = _fold_bn(params["W1"], params["b1"], params["bn1"])
    W2, b2 = _fold_bn(params["W2"], params["b2"], params["bn2"])
    W3, b3 = _fold_bn(params["W3"], params["b3"], params["bn3"])
    W4, b4 = _fold_bn(params["W4"], params["b4"], params["bn5"])
    W5, b5 = _fold_bn(params["W5"], params["b5"], params["bn6"])
    W6, b6 = _fold_bn(params["W6"], params["b6"], params["bn7"])
    W7, b7 = params["W7"], params["b7"]

    bf = lambda a: a.astype(jnp.bfloat16)
    w1t = W1.T                                        # f32 (VPU conv1)
    w2t, w3t = bf(W2.T), bf(W3.T)
    w4a_t, w4b_t = bf(W4[:, :64].T), bf(W4[:, 64:].T)  # concat split (64 + 1024)
    w5t, w6t = bf(W5.T), bf(W6.T)
    w7t = W7.T                                        # f32 (tiny; keeps tail f32)
    r = lambda v: v.reshape(1, -1)

    # ---- stage 1: per-point encoder fused with segment-max partials ----
    partials = pl.pallas_call(
        functools.partial(_encoder_kernel, num_graphs=num_graphs),
        out_shape=jax.ShapeDtypeStruct((nt, num_graphs, 1024), jnp.float32),
        grid_spec=pltpu.PrefetchScalarGridSpec(
            num_scalar_prefetch=1,
            grid=(nt,),
            in_specs=[pl.BlockSpec((tn, 1), lambda i, info: (i, 0)),
                      pl.BlockSpec((tn, 3), lambda i, info: (i, 0)),
                      _replicated((3, 64)), _replicated((1, 64)),
                      _replicated((64, 128)), _replicated((1, 128)),
                      _replicated((128, 1024)), _replicated((1, 1024))],
            out_specs=pl.BlockSpec((1, num_graphs, 1024), lambda i, info: (i, 0, 0))),
        compiler_params=pltpu.CompilerParams(
            dimension_semantics=("parallel",),
            vmem_limit_bytes=VMEM_LIMIT),
    )(tile_info, batch2d, pos, w1t, r(b1), w2t, r(b2), w3t, r(b3))

    # ---- tiny per-graph glue ----
    global_feat = jnp.max(partials, axis=0)                    # (G, 1024)
    # Empty graphs produce -inf rows (segment_max semantics); zero them so the
    # in-kernel gb4 matmul / one-hot select never sees inf * 0 -> NaN.
    global_feat = jnp.where(jnp.isfinite(global_feat), global_feat, 0.0)
    global_feat_bf = global_feat.astype(jnp.bfloat16)

    # ---- stage 2: decoder head (conv4..conv7 + log_softmax) ----
    out = pl.pallas_call(
        functools.partial(_decoder_kernel, num_graphs=num_graphs),
        out_shape=jax.ShapeDtypeStruct((n_pad, num_classes), jnp.float32),
        grid=(nt,),
        in_specs=[pl.BlockSpec((tn, 1), lambda i: (i, 0)),
                  pl.BlockSpec((tn, 3), lambda i: (i, 0)),
                  _replicated((3, 64)), _replicated((1, 64)),
                  _replicated((num_graphs, 1024)),
                  _replicated((1024, 512)), _replicated((1, 512)),
                  _replicated((64, 512)),
                  _replicated((512, 256)), _replicated((1, 256)),
                  _replicated((256, 128)), _replicated((1, 128)),
                  _replicated((128, num_classes)), _replicated((1, num_classes))],
        out_specs=pl.BlockSpec((tn, num_classes), lambda i: (i, 0)),
        compiler_params=pltpu.CompilerParams(
            dimension_semantics=("parallel",),
            vmem_limit_bytes=VMEM_LIMIT),
    )(batch2d, pos, w1t, r(b1), global_feat_bf, w4b_t, r(b4), w4a_t,
      w5t, r(b5), w6t, r(b6), w7t, r(b7))

    return out if n_pad == N else out[:N]


# ----------------------- deterministic parameter init ------------------------

def init_params(key, num_classes):
    def conv(k, cout, cin):
        k1, k2 = jax.random.split(k)
        s = 1.0 / jnp.sqrt(cin)
        return (jax.random.uniform(k1, (cout, cin), jnp.float32, -s, s),
                jax.random.uniform(k2, (cout,), jnp.float32, -s, s))

    def bn(k, c):
        k1, k2, k3, k4 = jax.random.split(k, 4)
        return (jax.random.uniform(k1, (c,), jnp.float32, 0.5, 1.5),   # gamma
                0.1 * jax.random.normal(k2, (c,), jnp.float32),        # beta
                0.1 * jax.random.normal(k3, (c,), jnp.float32),        # running_mean
                jax.random.uniform(k4, (c,), jnp.float32, 0.5, 1.5))   # running_var

    ks = jax.random.split(key, 13)
    p = {}
    p["W1"], p["b1"] = conv(ks[0], 64, 3)
    p["W2"], p["b2"] = conv(ks[1], 128, 64)
    p["W3"], p["b3"] = conv(ks[2], 1024, 128)
    p["W4"], p["b4"] = conv(ks[3], 512, 1088)
    p["W5"], p["b5"] = conv(ks[4], 256, 512)
    p["W6"], p["b6"] = conv(ks[5], 128, 256)
    p["W7"], p["b7"] = conv(ks[6], num_classes, 128)
    p["bn1"] = bn(ks[7], 64)
    p["bn2"] = bn(ks[8], 128)
    p["bn3"] = bn(ks[9], 1024)
    p["bn5"] = bn(ks[10], 512)
    p["bn6"] = bn(ks[11], 256)
    p["bn7"] = bn(ks[12], 128)
    # TODO(synk): fc1/bn4 exist in __init__ but are never used in forward; omitted.
    return p


# ----------------------------- pure-JAX reference ----------------------------

def reference_forward(pos, batch, params, num_classes, num_graphs):
    def bn(x, p):
        g, be, mu, var = p
        return g * (x - mu) / jnp.sqrt(var + BN_EPS) + be

    h1 = jax.nn.relu(bn(pos @ params["W1"].T + params["b1"], params["bn1"]))
    h2 = jax.nn.relu(bn(h1 @ params["W2"].T + params["b2"], params["bn2"]))
    pf = bn(h2 @ params["W3"].T + params["b3"], params["bn3"])
    gf = jax.ops.segment_max(pf, batch, num_segments=num_graphs)
    cat = jnp.concatenate([h1, gf[batch]], axis=1)
    h4 = jax.nn.relu(bn(cat @ params["W4"].T + params["b4"], params["bn5"]))
    h5 = jax.nn.relu(bn(h4 @ params["W5"].T + params["b5"], params["bn6"]))
    h6 = jax.nn.relu(bn(h5 @ params["W6"].T + params["b6"], params["bn7"]))
    logits = h6 @ params["W7"].T + params["b7"]
    return jax.nn.log_softmax(logits, axis=-1)


if __name__ == "__main__":
    key = jax.random.PRNGKey(0)
    num_classes = 16
    num_graphs = 2
    N = 1000                                    # two graphs of 500 points (exercises padding)

    kparams, kpos = jax.random.split(key)
    params = init_params(kparams, num_classes)
    pos = jax.random.normal(kpos, (N, 3), jnp.float32)
    batch = jnp.repeat(jnp.arange(num_graphs, dtype=jnp.int32), N // num_graphs)

    out = pointnet_forward(pos, batch, params, num_classes, num_graphs)
    out = jax.block_until_ready(out)

    ref = reference_forward(pos, batch, params, num_classes, num_graphs)
    assert out.shape == (N, num_classes)
    # Tolerance loosened vs the pure-f32 version: big matmuls now use bf16
    # operands (f32 accumulation), per the performance review.
    assert bool(jnp.allclose(out, ref, atol=3e-2, rtol=3e-2)), "mismatch vs reference"
    print("KERNEL_OK")
</pallas_src>

<mosaic_0001>
module attributes {stable_mosaic.version = 11 : i64} {
  func.func @_encoder_kernel(%arg0: i32, %arg1: memref<4x2xi32, #tpu.memory_space<smem>>, %arg2: memref<256x1xi32, #tpu.memory_space<vmem>>, %arg3: memref<256x3xf32, #tpu.memory_space<vmem>>, %arg4: memref<3x64xf32, #tpu.memory_space<vmem>>, %arg5: memref<1x64xf32, #tpu.memory_space<vmem>>, %arg6: memref<64x128xbf16, #tpu.memory_space<vmem>>, %arg7: memref<1x128xf32, #tpu.memory_space<vmem>>, %arg8: memref<128x1024xbf16, #tpu.memory_space<vmem>>, %arg9: memref<1x1024xf32, #tpu.memory_space<vmem>>, %arg10: memref<1x2x1024xf32, #tpu.memory_space<vmem>>) attributes {dimension_semantics = [#tpu.dimension_semantics<parallel>], iteration_bounds = array<i64: 4>, scalar_prefetch = 1 : i64, scratch_operands = 0 : i64, tpu.core_type = #tpu.core_type<tc>, window_params = [{transform_indices = @transform_0, window_bounds = array<i64: 256, 1>}, {transform_indices = @transform_1, window_bounds = array<i64: 256, 3>}, {pipeline_mode = #tpu.pipeline_mode<synchronous>, transform_indices = @transform_2, window_bounds = array<i64: 3, 64>}, {pipeline_mode = #tpu.pipeline_mode<synchronous>, transform_indices = @transform_3, window_bounds = array<i64: 1, 64>}, {pipeline_mode = #tpu.pipeline_mode<synchronous>, transform_indices = @transform_4, window_bounds = array<i64: 64, 128>}, {pipeline_mode = #tpu.pipeline_mode<synchronous>, transform_indices = @transform_5, window_bounds = array<i64: 1, 128>}, {pipeline_mode = #tpu.pipeline_mode<synchronous>, transform_indices = @transform_6, window_bounds = array<i64: 128, 1024>}, {pipeline_mode = #tpu.pipeline_mode<synchronous>, transform_indices = @transform_7, window_bounds = array<i64: 1, 1024>}, {transform_indices = @transform_8, window_bounds = array<i64: 1, 2, 1024>}]} {
    %c0 = arith.constant 0 : index
    %c0_0 = arith.constant 0 : index
    %0 = vector.load %arg3[%c0, %c0_0] : memref<256x3xf32, #tpu.memory_space<vmem>>, vector<256x3xf32>
    %c0_1 = arith.constant 0 : index
    %c0_2 = arith.constant 0 : index
    %1 = vector.load %arg4[%c0_1, %c0_2] : memref<3x64xf32, #tpu.memory_space<vmem>>, vector<3x64xf32>
    %c0_3 = arith.constant 0 : index
    %c0_4 = arith.constant 0 : index
    %2 = vector.load %arg5[%c0_3, %c0_4] : memref<1x64xf32, #tpu.memory_space<vmem>>, vector<1x64xf32>
    %3 = vector.extract_strided_slice %0 {offsets = [0, 0], sizes = [256, 1], strides = [1, 1]} : vector<256x3xf32> to vector<256x1xf32>
    %4 = vector.extract_strided_slice %1 {offsets = [0, 0], sizes = [1, 64], strides = [1, 1]} : vector<3x64xf32> to vector<1x64xf32>
    %5 = vector.broadcast %3 : vector<256x1xf32> to vector<256x64xf32>
    %6 = vector.broadcast %4 : vector<1x64xf32> to vector<256x64xf32>
    %7 = arith.mulf %5, %6 : vector<256x64xf32>
    %8 = vector.broadcast %2 : vector<1x64xf32> to vector<256x64xf32>
    %9 = arith.addf %8, %7 : vector<256x64xf32>
    %10 = vector.extract_strided_slice %0 {offsets = [0, 1], sizes = [256, 1], strides = [1, 1]} : vector<256x3xf32> to vector<256x1xf32>
    %11 = vector.extract_strided_slice %1 {offsets = [1, 0], sizes = [1, 64], strides = [1, 1]} : vector<3x64xf32> to vector<1x64xf32>
    %12 = vector.broadcast %10 : vector<256x1xf32> to vector<256x64xf32>
    %13 = vector.broadcast %11 : vector<1x64xf32> to vector<256x64xf32>
    %14 = arith.mulf %12, %13 : vector<256x64xf32>
    %15 = arith.addf %9, %14 : vector<256x64xf32>
    %16 = vector.extract_strided_slice %0 {offsets = [0, 2], sizes = [256, 1], strides = [1, 1]} : vector<256x3xf32> to vector<256x1xf32>
    %17 = vector.extract_strided_slice %1 {offsets = [2, 0], sizes = [1, 64], strides = [1, 1]} : vector<3x64xf32> to vector<1x64xf32>
    %18 = vector.broadcast %16 : vector<256x1xf32> to vector<256x64xf32>
    %19 = vector.broadcast %17 : vector<1x64xf32> to vector<256x64xf32>
    %20 = arith.mulf %18, %19 : vector<256x64xf32>
    %21 = arith.addf %15, %20 : vector<256x64xf32>
    %cst = arith.constant 0.000000e+00 : f32
    %22 = vector.broadcast %cst : f32 to vector<256x64xf32>
    %23 = arith.maximumf %21, %22 : vector<256x64xf32>
    %24 = arith.truncf %23 : vector<256x64xf32> to vector<256x64xbf16>
    %c0_5 = arith.constant 0 : index
    %c0_6 = arith.constant 0 : index
    %25 = vector.load %arg6[%c0_5, %c0_6] : memref<64x128xbf16, #tpu.memory_space<vmem>>, vector<64x128xbf16>
    %cst_7 = arith.constant dense<0.000000e+00> : vector<256x128xf32>
    %26 = tpu.matmul %24, %25, %cst_7 {dimension_numbers = #tpu.dot_dimension_numbers<[1], [0], [0], [1], [0, 0, 1, 1], [], []>} : vector<256x64xbf16>, vector<64x128xbf16>, vector<256x128xf32> -> vector<256x128xf32>
    %c0_8 = arith.constant 0 : index
    %c0_9 = arith.constant 0 : index
    %27 = vector.load %arg7[%c0_8, %c0_9] : memref<1x128xf32, #tpu.memory_space<vmem>>, vector<1x128xf32>
    %28 = vector.broadcast %27 : vector<1x128xf32> to vector<256x128xf32>
    %29 = arith.addf %26, %28 : vector<256x128xf32>
    %cst_10 = arith.constant 0.000000e+00 : f32
    %30 = vector.broadcast %cst_10 : f32 to vector<256x128xf32>
    %31 = arith.maximumf %29, %30 : vector<256x128xf32>
    %32 = arith.truncf %31 : vector<256x128xf32> to vector<256x128xbf16>
    %c0_11 = arith.constant 0 : index
    %c0_12 = arith.constant 0 : index
    %33 = vector.load %arg8[%c0_11, %c0_12] : memref<128x1024xbf16, #tpu.memory_space<vmem>>, vector<128x1024xbf16>
    %cst_13 = arith.constant dense<0.000000e+00> : vector<256x1024xf32>
    %34 = tpu.matmul %32, %33, %cst_13 {dimension_numbers = #tpu.dot_dimension_numbers<[1], [0], [0], [1], [0, 0, 1, 1], [], []>} : vector<256x128xbf16>, vector<128x1024xbf16>, vector<256x1024xf32> -> vector<256x1024xf32>
    %c0_14 = arith.constant 0 : index
    %c0_15 = arith.constant 0 : index
    %35 = vector.load %arg9[%c0_14, %c0_15] : memref<1x1024xf32, #tpu.memory_space<vmem>>, vector<1x1024xf32>
    %36 = vector.broadcast %35 : vector<1x1024xf32> to vector<256x1024xf32>
    %37 = arith.addf %34, %36 : vector<256x1024xf32>
    %38 = arith.index_cast %arg0 : i32 to index
    %c0_16 = arith.constant 0 : index
    %39 = memref.load %arg1[%38, %c0_16] : memref<4x2xi32, #tpu.memory_space<smem>>
    %40 = arith.index_cast %arg0 : i32 to index
    %c1 = arith.constant 1 : index
    %41 = memref.load %arg1[%40, %c1] : memref<4x2xi32, #tpu.memory_space<smem>>
    %c0_17 = arith.constant 0 : index
    %c0_18 = arith.constant 0 : index
    %42 = vector.load %arg2[%c0_17, %c0_18] : memref<256x1xi32, #tpu.memory_space<vmem>>, vector<256x1xi32>
    %43 = tpu.iota {dimensions = array<i32: 0>} : vector<2x1xi32>
    %cst_19 = arith.constant 0xFF800000 : f32
    %44 = vector.broadcast %cst_19 : f32 to vector<2x1024xf32>
    %c1_i32 = arith.constant 1 : i32
    %45 = arith.addi %41, %c1_i32 : i32
    %46 = arith.subi %45, %39 : i32
    %47 = arith.addi %39, %46 : i32
    %c1_i32_20 = arith.constant 1 : i32
    %48 = scf.for %arg11 = %39 to %47 step %c1_i32_20 iter_args(%arg12 = %44) -> (vector<2x1024xf32>)  : i32 {
      %51 = vector.broadcast %arg11 : i32 to vector<256x1xi32>
      %52 = arith.cmpi eq, %42, %51 : vector<256x1xi32>
      %cst_24 = arith.constant 0xFF800000 : f32
      %53 = vector.shape_cast %52 : vector<256x1xi1> to vector<256x1xi1>
      %54 = vector.broadcast %53 : vector<256x1xi1> to vector<256x1024xi1>
      %55 = vector.broadcast %cst_24 : f32 to vector<256x1024xf32>
      %56 = arith.select %54, %37, %55 : vector<256x1024xi1>, vector<256x1024xf32>
      %cst_25 = arith.constant dense<0xFF800000> : vector<1024xf32>
      %57 = vector.multi_reduction <maximumf>, %56, %cst_25 [0] : vector<256x1024xf32> to vector<1024xf32>
      %58 = vector.shape_cast %57 : vector<1024xf32> to vector<1x1024xf32>
      %59 = vector.broadcast %arg11 : i32 to vector<2x1xi32>
      %60 = arith.cmpi eq, %43, %59 : vector<2x1xi32>
      %61 = vector.shape_cast %60 : vector<2x1xi1> to vector<2x1xi1>
      %62 = vector.broadcast %61 : vector<2x1xi1> to vector<2x1024xi1>
      %63 = vector.shape_cast %58 : vector<1x1024xf32> to vector<1x1024xf32>
      %64 = vector.broadcast %63 : vector<1x1024xf32> to vector<2x1024xf32>
      %65 = arith.select %62, %64, %arg12 : vector<2x1024xi1>, vector<2x1024xf32>
      scf.yield %65 : vector<2x1024xf32>
    }
    %49 = vector.shape_cast %48 : vector<2x1024xf32> to vector<1x2x1024xf32>
    %c0_21 = arith.constant 0 : index
    %c0_22 = arith.constant 0 : index
    %c0_23 = arith.constant 0 : index
    %50 = vector.load %arg10[%c0_21, %c0_22, %c0_23] : memref<1x2x1024xf32, #tpu.memory_space<vmem>>, vector<1x2x1024xf32>
    tpu.vector_store %arg10[%c0_21, %c0_22, %c0_23], %49 {strides = array<i32>} : memref<1x2x1024xf32, #tpu.memory_space<vmem>>, vector<1x2x1024xf32>,
    return
  }
  func.func @transform_0(%arg0: i32, %arg1: memref<4x2xi32, #tpu.memory_space<smem>>) -> (i32, i32) {
    %c0_i32 = arith.constant 0 : i32
    %c0_i32_0 = arith.constant 0 : i32
    return %arg0, %c0_i32 : i32, i32
  }
  func.func @transform_1(%arg0: i32, %arg1: memref<4x2xi32, #tpu.memory_space<smem>>) -> (i32, i32) {
    %c0_i32 = arith.constant 0 : i32
    %c0_i32_0 = arith.constant 0 : i32
    return %arg0, %c0_i32 : i32, i32
  }
  func.func @transform_2(%arg0: i32, %arg1: memref<4x2xi32, #tpu.memory_space<smem>>) -> (i32, i32) {
    %c0_i32 = arith.constant 0 : i32
    %c0_i32_0 = arith.constant 0 : i32
    %c0_i32_1 = arith.constant 0 : i32
    return %c0_i32, %c0_i32_0 : i32, i32
  }
  func.func @transform_3(%arg0: i32, %arg1: memref<4x2xi32, #tpu.memory_space<smem>>) -> (i32, i32) {
    %c0_i32 = arith.constant 0 : i32
    %c0_i32_0 = arith.constant 0 : i32
    %c0_i32_1 = arith.constant 0 : i32
    return %c0_i32, %c0_i32_0 : i32, i32
  }
  func.func @transform_4(%arg0: i32, %arg1: memref<4x2xi32, #tpu.memory_space<smem>>) -> (i32, i32) {
    %c0_i32 = arith.constant 0 : i32
    %c0_i32_0 = arith.constant 0 : i32
    %c0_i32_1 = arith.constant 0 : i32
    return %c0_i32, %c0_i32_0 : i32, i32
  }
  func.func @transform_5(%arg0: i32, %arg1: memref<4x2xi32, #tpu.memory_space<smem>>) -> (i32, i32) {
    %c0_i32 = arith.constant 0 : i32
    %c0_i32_0 = arith.constant 0 : i32
    %c0_i32_1 = arith.constant 0 : i32
    return %c0_i32, %c0_i32_0 : i32, i32
  }
  func.func @transform_6(%arg0: i32, %arg1: memref<4x2xi32, #tpu.memory_space<smem>>) -> (i32, i32) {
    %c0_i32 = arith.constant 0 : i32
    %c0_i32_0 = arith.constant 0 : i32
    %c0_i32_1 = arith.constant 0 : i32
    return %c0_i32, %c0_i32_0 : i32, i32
  }
  func.func @transform_7(%arg0: i32, %arg1: memref<4x2xi32, #tpu.memory_space<smem>>) -> (i32, i32) {
    %c0_i32 = arith.constant 0 : i32
    %c0_i32_0 = arith.constant 0 : i32
    %c0_i32_1 = arith.constant 0 : i32
    return %c0_i32, %c0_i32_0 : i32, i32
  }
  func.func @transform_8(%arg0: i32, %arg1: memref<4x2xi32, #tpu.memory_space<smem>>) -> (i32, i32, i32) {
    %c0_i32 = arith.constant 0 : i32
    %c0_i32_0 = arith.constant 0 : i32
    %c0_i32_1 = arith.constant 0 : i32
    return %arg0, %c0_i32, %c0_i32_0 : i32, i32, i32
  }
}

</mosaic_0001>

<llo_original>
// kernel: tpu_custom_call.1
$region0: #{tpu_custom_call.1}
  #allocation0 [shape = 'u32[]', space=smem, size = 0x4, offset = 0x4, fixed_abs, tag = 'smem constant byte address 0x4 - core index']
  #allocation1 [shape = 'u32[144,128]{1,0:T(1,128)}', space=vmem, size = 0x12000, scoped, tag = 'internal scratch']
  #allocation2 [shape = 's32[1]{0}', space=sflag, size = 0x4, scoped, tag = 'scoped memory for tpu_custom_call.1']
  #allocation3 [shape = 'u8[2048]{0}', space=smem, size = 0x800, scoped, tag = 'prefetched SMEM operand 0']
  %s0 = inlined_call_operand.vmem [shape: s32[4,2], index: 0, kind: input, shape index: {}]
  %s1 = inlined_call_operand.vmem [shape: s32[1024,1], index: 1, kind: input, shape index: {}]
  %s2 = inlined_call_operand.vmem [shape: f32[1024,3], index: 2, kind: input, shape index: {}]
  %s3 = inlined_call_operand.vmem [shape: f32[3,64], index: 3, kind: input, shape index: {}]
  %s4 = inlined_call_operand.vmem [shape: f32[1,64], index: 4, kind: input, shape index: {}]
  %s5 = inlined_call_operand.vmem [shape: bf16[64,128], index: 5, kind: input, shape index: {}]
  %s6 = inlined_call_operand.vmem [shape: f32[1,128], index: 6, kind: input, shape index: {}]
  %s7 = inlined_call_operand.vmem [shape: bf16[128,1024], index: 7, kind: input, shape index: {}]
  %s8 = inlined_call_operand.vmem [shape: f32[1,1024], index: 8, kind: input, shape index: {}]
  %s9 = inlined_call_operand.hbm [shape: f32[4,2,1024], index: 9, kind: output, shape index: {}]
  %s10 = sld [smem:[#allocation0]]
  $region72: #{tpu_custom_call.1} parent=0
    _
  %s12 = ssub.s32 1, %s10
  %s13 = scalar_select 0, %s12, %s10
  %s14 = sshll.u32 %s0, 4
  %s15 = int_to_ptr.vmem [resolvable:$true] %s14
  %17 = dma.vmem_to_smem %s15, 64, [#allocation3], [#allocation2]
  %18 = dma.done [#allocation2], 64
  %19 = sfence
  $region1: #{tpu_custom_call.1} parent=0
    #allocation4 [shape = 'u8[16384]{0}', space=vmem, size = 0x4000, scoped, tag = 'output window, operand 0']
    #allocation5 [shape = 's32[2]{0}', space=sflag, size = 0x8, scoped, tag = 'scoped memory for tpu_custom_call.1']
    %20 = vsyncpa [#allocation5], 0
    %s21 = scalar_lea.sflag [#allocation5], 1
    %22 = vsyncpa %s21, 0
    loop: start=0, step=1, limit=6
    $region2: #{tpu_custom_call.1} parent=1 // loop_pre_header
      _
    $region3: #{tpu_custom_call.1} parent=1 // loop_header
      %s24 = sphi 0, %s28
      %p25 = scmp.ge.s32.totalorder %s24, 6
      %s34 = sphi 0, %s36
      %s37 = sphi 0, %s34
      %s38 = sphi 0, %s37
      %s54 = sphi 0, %s38
      %s60 = sphi 0, %s62
      %s63 = sphi 0, %s60
      %s64 = sphi 0, %s63
      %s80 = sphi 0, %s64
      %s84 = sphi 0, %s84
      %s86 = sphi 0, %s84
      %s87 = sphi 0, %s86
      %s101 = sphi 0, %s87
      %s105 = sphi 0, %s105
      %s107 = sphi 0, %s105
      %s108 = sphi 0, %s107
      %s122 = sphi 0, %s108
      %s126 = sphi 0, %s126
      %s128 = sphi 0, %s126
      %s129 = sphi 0, %s128
      %s143 = sphi 0, %s129
      %s147 = sphi 0, %s147
      %s149 = sphi 0, %s147
      %s150 = sphi 0, %s149
      %s164 = sphi 0, %s150
      %s168 = sphi 0, %s168
      %s170 = sphi 0, %s168
      %s171 = sphi 0, %s170
      %s185 = sphi 0, %s171
      %s189 = sphi 0, %s189
      %s191 = sphi 0, %s189
      %s192 = sphi 0, %s191
      %s206 = sphi 0, %s192
      %s212 = sphi 0, %s214
      %s215 = sphi 0, %s212
      %s216 = sphi 0, %s215
      %s232 = sphi 0, %s216
    $region4: #{tpu_custom_call.1} parent=1 // loop_header_branch
      %27 = sbr.rel (%p25) target = $region8
    $region5: #{tpu_custom_call.1} parent=1 // loop_body
      %s29 = ssub.s32 %s24, 1
      %s30 = ssub.s32 %s24, 2
      %s31 = sadd.s32 %s24, 1
      %s32 = ssub.s32 %s24, %s31
      %p33 = scmp.eq.s32.totalorder %s32, 0
      %s35 = sadd.s32 %s34, 1
      %s36 = scalar_select %p33, %s34, %s35
      %p39 = pneg %p33
      %p40 = scmp.eq.s32.totalorder %s24, 3
      %p41 = por %p39, %p40
      %p42 = scmp.ne.s32.totalorder %s34, %s37
      %p43 = scmp.eq.s32.totalorder %s24, 0
      %p44 = por %p42, %p43
      %p45 = scmp.ne.s32.totalorder %s34, %s37
      %p46 = scmp.eq.s32.totalorder %s29, 3
      %p47 = por %p45, %p46
      %p48 = scmp.ne.s32.totalorder %s37, %s38
      %p49 = scmp.eq.s32.totalorder %s29, 0
      %p50 = por %p48, %p49
      %p51 = scmp.ne.s32.totalorder %s37, %s38
      %p52 = scmp.eq.s32.totalorder %s30, 3
      %p53 = por %p51, %p52
      %p55 = scmp.ne.s32.totalorder %s38, %s54
      %p56 = scmp.eq.s32.totalorder %s30, 0
      %p57 = por %p55, %p56
      %s58 = ssub.s32 %s24, %s31
      %p59 = scmp.eq.s32.totalorder %s58, 0
      %s61 = sadd.s32 %s60, 1
      %s62 = scalar_select %p59, %s60, %s61
      %p65 = pneg %p59
      %p66 = scmp.eq.s32.totalorder %s24, 3
      %p67 = por %p65, %p66
      %p68 = scmp.ne.s32.totalorder %s60, %s63
      %p69 = scmp.eq.s32.totalorder %s24, 0
      %p70 = por %p68, %p69
      %p71 = scmp.ne.s32.totalorder %s60, %s63
      %p72 = scmp.eq.s32.totalorder %s29, 3
      %p73 = por %p71, %p72
      %p74 = scmp.ne.s32.totalorder %s63, %s64
      %p75 = scmp.eq.s32.totalorder %s29, 0
      %p76 = por %p74, %p75
      %p77 = scmp.ne.s32.totalorder %s63, %s64
      %p78 = scmp.eq.s32.totalorder %s30, 3
      %p79 = por %p77, %p78
      %p81 = scmp.ne.s32.totalorder %s64, %s80
      %p82 = scmp.eq.s32.totalorder %s30, 0
      %p83 = por %p81, %p82
      %s85 = sadd.s32 %s84, 1
      %p88 = scmp.eq.s32.totalorder %s24, 3
      %p89 = scmp.ne.s32.totalorder %s84, %s86
      %p90 = scmp.eq.s32.totalorder %s24, 0
      %p91 = por %p89, %p90
      %p92 = scmp.ne.s32.totalorder %s84, %s86
      %p93 = scmp.eq.s32.totalorder %s29, 3
      %p94 = por %p92, %p93
      %p95 = scmp.ne.s32.totalorder %s86, %s87
      %p96 = scmp.eq.s32.totalorder %s29, 0
      %p97 = por %p95, %p96
      %p98 = scmp.ne.s32.totalorder %s86, %s87
      %p99 = scmp.eq.s32.totalorder %s30, 3
      %p100 = por %p98, %p99
      %p102 = scmp.ne.s32.totalorder %s87, %s101
      %p103 = scmp.eq.s32.totalorder %s30, 0
      %p104 = por %p102, %p103
      %s106 = sadd.s32 %s105, 1
      %p109 = scmp.eq.s32.totalorder %s24, 3
      %p110 = scmp.ne.s32.totalorder %s105, %s107
      %p111 = scmp.eq.s32.totalorder %s24, 0
      %p112 = por %p110, %p111
      %p113 = scmp.ne.s32.totalorder %s105, %s107
      %p114 = scmp.eq.s32.totalorder %s29, 3
      %p115 = por %p113, %p114
      %p116 = scmp.ne.s32.totalorder %s107, %s108
      %p117 = scmp.eq.s32.totalorder %s29, 0
      %p118 = por %p116, %p117
      %p119 = scmp.ne.s32.totalorder %s107, %s108
      %p120 = scmp.eq.s32.totalorder %s30, 3
      %p121 = por %p119, %p120
      %p123 = scmp.ne.s32.totalorder %s108, %s122
      %p124 = scmp.eq.s32.totalorder %s30, 0
      %p125 = por %p123, %p124
      %s127 = sadd.s32 %s126, 1
      %p130 = scmp.eq.s32.totalorder %s24, 3
      %p131 = scmp.ne.s32.totalorder %s126, %s128
      %p132 = scmp.eq.s32.totalorder %s24, 0
      %p133 = por %p131, %p132
      %p134 = scmp.ne.s32.totalorder %s126, %s128
      %p135 = scmp.eq.s32.totalorder %s29, 3
      %p136 = por %p134, %p135
      %p137 = scmp.ne.s32.totalorder %s128, %s129
      %p138 = scmp.eq.s32.totalorder %s29, 0
      %p139 = por %p137, %p138
      %p140 = scmp.ne.s32.totalorder %s128, %s129
      %p141 = scmp.eq.s32.totalorder %s30, 3
      %p142 = por %p140, %p141
      %p144 = scmp.ne.s32.totalorder %s129, %s143
      %p145 = scmp.eq.s32.totalorder %s30, 0
      %p146 = por %p144, %p145
      %s148 = sadd.s32 %s147, 1
      %p151 = scmp.eq.s32.totalorder %s24, 3
      %p152 = scmp.ne.s32.totalorder %s147, %s149
      %p153 = scmp.eq.s32.totalorder %s24, 0
      %p154 = por %p152, %p153
      %p155 = scmp.ne.s32.totalorder %s147, %s149
      %p156 = scmp.eq.s32.totalorder %s29, 3
      %p157 = por %p155, %p156
      %p158 = scmp.ne.s32.totalorder %s149, %s150
      %p159 = scmp.eq.s32.totalorder %s29, 0
      %p160 = por %p158, %p159
      %p161 = scmp.ne.s32.totalorder %s149, %s150
      %p162 = scmp.eq.s32.totalorder %s30, 3
      %p163 = por %p161, %p162
      %p165 = scmp.ne.s32.totalorder %s150, %s164
      %p166 = scmp.eq.s32.totalorder %s30, 0
      %p167 = por %p165, %p166
      %s169 = sadd.s32 %s168, 1
      %p172 = scmp.eq.s32.totalorder %s24, 3
      %p173 = scmp.ne.s32.totalorder %s168, %s170
      %p174 = scmp.eq.s32.totalorder %s24, 0
      %p175 = por %p173, %p174
      %p176 = scmp.ne.s32.totalorder %s168, %s170
      %p177 = scmp.eq.s32.totalorder %s29, 3
      %p178 = por %p176, %p177
      %p179 = scmp.ne.s32.totalorder %s170, %s171
      %p180 = scmp.eq.s32.totalorder %s29, 0
      %p181 = por %p179, %p180
      %p182 = scmp.ne.s32.totalorder %s170, %s171
      %p183 = scmp.eq.s32.totalorder %s30, 3
      %p184 = por %p182, %p183
      %p186 = scmp.ne.s32.totalorder %s171, %s185
      %p187 = scmp.eq.s32.totalorder %s30, 0
      %p188 = por %p186, %p187
      %s190 = sadd.s32 %s189, 1
      %p193 = scmp.eq.s32.totalorder %s24, 3
      %p194 = scmp.ne.s32.totalorder %s189, %s191
      %p195 = scmp.eq.s32.totalorder %s24, 0
      %p196 = por %p194, %p195
      %p197 = scmp.ne.s32.totalorder %s189, %s191
      %p198 = scmp.eq.s32.totalorder %s29, 3
      %p199 = por %p197, %p198
      %p200 = scmp.ne.s32.totalorder %s191, %s192
      %p201 = scmp.eq.s32.totalorder %s29, 0
      %p202 = por %p200, %p201
      %p203 = scmp.ne.s32.totalorder %s191, %s192
      %p204 = scmp.eq.s32.totalorder %s30, 3
      %p205 = por %p203, %p204
      %p207 = scmp.ne.s32.totalorder %s192, %s206
      %p208 = scmp.eq.s32.totalorder %s30, 0
      %p209 = por %p207, %p208
      %s210 = ssub.s32 %s24, %s31
      %p211 = scmp.eq.s32.totalorder %s210, 0
      %s213 = sadd.s32 %s212, 1
      %s214 = scalar_select %p211, %s212, %s213
      %p217 = pneg %p211
      %p218 = scmp.eq.s32.totalorder %s24, 3
      %p219 = por %p217, %p218
      %p220 = scmp.ne.s32.totalorder %s212, %s215
      %p221 = scmp.eq.s32.totalorder %s24, 0
      %p222 = por %p220, %p221
      %p223 = scmp.ne.s32.totalorder %s212, %s215
      %p224 = scmp.eq.s32.totalorder %s29, 3
      %p225 = por %p223, %p224
      %p226 = scmp.ne.s32.totalorder %s215, %s216
      %p227 = scmp.eq.s32.totalorder %s29, 0
      %p228 = por %p226, %p227
      %p229 = scmp.ne.s32.totalorder %s215, %s216
      %p230 = scmp.eq.s32.totalorder %s30, 3
      %p231 = por %p229, %p230
      %p233 = scmp.ne.s32.totalorder %s216, %s232
      %p234 = scmp.eq.s32.totalorder %s30, 0
      %p235 = por %p233, %p234
      %p236 = scmp.le.s32.totalorder 1, %s24
      %p237 = scmp.lt.s32.totalorder %s24, 5
      %p238 = pnand %p236, %p237
      %p239 = pneg %p238
      // Predicated region
      $region9: #{tpu_custom_call.1} parent=5 // pred_check
        _
      $region10: #{tpu_custom_call.1} parent=5 // pred_check_branch
        %241 = sbr.rel (%p238) target = $region12
      $region11: #{tpu_custom_call.1} parent=5 // pred_region
        %s242 = ssub.s32 %s24, 1
        // Predicated region
        $region13: #{tpu_custom_call.1} parent=11 // pred_check
          %p243 = pneg %p97
        $region14: #{tpu_custom_call.1} parent=11 // pred_check_branch
          %245 = sbr.rel (%p243) target = $region16
        $region15: #{tpu_custom_call.1} parent=11 // pred_region
          _
        $region16: #{tpu_custom_call.1} parent=11 // pred_fallthru
          _
        // Predicated region
        $region17: #{tpu_custom_call.1} parent=11 // pred_check
          %p246 = pneg %p118
        $region18: #{tpu_custom_call.1} parent=11 // pred_check_branch
          %248 = sbr.rel (%p246) target = $region20
        $region19: #{tpu_custom_call.1} parent=11 // pred_region
          _
        $region20: #{tpu_custom_call.1} parent=11 // pred_fallthru
          _
        // Predicated region
        $region21: #{tpu_custom_call.1} parent=11 // pred_check
          %p249 = pneg %p139
        $region22: #{tpu_custom_call.1} parent=11 // pred_check_branch
          %251 = sbr.rel (%p249) target = $region24
        $region23: #{tpu_custom_call.1} parent=11 // pred_region
          _
        $region24: #{tpu_custom_call.1} parent=11 // pred_fallthru
          _
        // Predicated region
        $region25: #{tpu_custom_call.1} parent=11 // pred_check
          %p252 = pneg %p160
        $region26: #{tpu_custom_call.1} parent=11 // pred_check_branch
          %254 = sbr.rel (%p252) target = $region28
        $region27: #{tpu_custom_call.1} parent=11 // pred_region
          _
        $region28: #{tpu_custom_call.1} parent=11 // pred_fallthru
          _
        // Predicated region
        $region29: #{tpu_custom_call.1} parent=11 // pred_check
          %p255 = pneg %p181
        $region30: #{tpu_custom_call.1} parent=11 // pred_check_branch
          %257 = sbr.rel (%p255) target = $region32
        $region31: #{tpu_custom_call.1} parent=11 // pred_region
          _
        $region32: #{tpu_custom_call.1} parent=11 // pred_fallthru
          _
        // Predicated region
        $region33: #{tpu_custom_call.1} parent=11 // pred_check
          %p258 = pneg %p202
        $region34: #{tpu_custom_call.1} parent=11 // pred_check_branch
          %260 = sbr.rel (%p258) target = $region36
        $region35: #{tpu_custom_call.1} parent=11 // pred_region
          _
        $region36: #{tpu_custom_call.1} parent=11 // pred_fallthru
          _
      $region12: #{tpu_custom_call.1} parent=5 // pred_fallthru
        _
      %p261 = scmp.lt.s32.totalorder %s24, 4
      // Predicated region
      $region37: #{tpu_custom_call.1} parent=5 // pred_check
        %p262 = pneg %p261
      $region38: #{tpu_custom_call.1} parent=5 // pred_check_branch
        %264 = sbr.rel (%p262) target = $region40
      $region39: #{tpu_custom_call.1} parent=5 // pred_region
        // Predicated region
        $region41: #{tpu_custom_call.1} parent=39 // pred_check
          %p265 = pneg %p44
        $region42: #{tpu_custom_call.1} parent=39 // pred_check_branch
          %267 = sbr.rel (%p265) target = $region44
        $region43: #{tpu_custom_call.1} parent=39 // pred_region
          %s268 = smul.u32 32, %s24
          %p269 = scmp.lt.s32.totalorder %s268, 127
          %s270 = scalar_select %p269, %s268, 127
          %s271 = smul.addr %s270, 8
          %s272 = scalar_lea.vmem %s1, %s271
          %s273 = smul.u32 32, %s24
        $region44: #{tpu_custom_call.1} parent=39 // pred_fallthru
          _
        // Predicated region
        $region45: #{tpu_custom_call.1} parent=39 // pred_check
          %p274 = pneg %p70
        $region46: #{tpu_custom_call.1} parent=39 // pred_check_branch
          %276 = sbr.rel (%p274) target = $region48
        $region47: #{tpu_custom_call.1} parent=39 // pred_region
          %s277 = smul.u32 32, %s24
          %p278 = scmp.lt.s32.totalorder %s277, 127
          %s279 = scalar_select %p278, %s277, 127
          %s280 = smul.addr %s279, 8
          %s281 = scalar_lea.vmem %s2, %s280
          %s282 = smul.u32 32, %s24
        $region48: #{tpu_custom_call.1} parent=39 // pred_fallthru
          _
      $region40: #{tpu_custom_call.1} parent=5 // pred_fallthru
        _
      %p283 = scmp.le.s32.totalorder 1, %s24
      %p284 = scmp.lt.s32.totalorder %s24, 5
      %p285 = pnand %p283, %p284
      %p286 = pneg %p285
      // Predicated region
      $region49: #{tpu_custom_call.1} parent=5 // pred_check
        _
      $region50: #{tpu_custom_call.1} parent=5 // pred_check_branch
        %288 = sbr.rel (%p285) target = $region52
      $region51: #{tpu_custom_call.1} parent=5 // pred_region
        %s289 = ssub.s32 %s24, 1
        %s290 = smul.u32 32, %s29
        %p291 = scmp.lt.s32.totalorder %s290, 127
        %s292 = scalar_select %p291, %s290, 127
        %s293 = smul.addr %s292, 8
        %s294 = scalar_lea.vmem %s1, %s293
        %p295 = pneg %p50
        %p296 = pneg %p47
        %s297 = smul.u32 32, %s29
        %p298 = scmp.lt.s32.totalorder %s297, 127
        %s299 = scalar_select %p298, %s297, 127
        %s300 = smul.addr %s299, 8
        %s301 = scalar_lea.vmem %s2, %s300
        %p302 = pneg %p76
        %p303 = pneg %p73
        %p304 = pneg %p97
        %p305 = pneg %p94
        %p306 = pneg %p118
        %p307 = pneg %p115
        %p308 = pneg %p139
        %p309 = pneg %p136
        %p310 = pneg %p160
        %p311 = pneg %p157
        %p312 = pneg %p181
        %p313 = pneg %p178
        %p314 = pneg %p202
        %p315 = pneg %p199
        %p316 = pneg %p228
        %p317 = pneg %p225
        %s318 = sand.u32 %s215, 1
        %s319 = scalar_lea.sflag [#allocation5], %s318
        %s320 = sand.u32 %s215, 1
        %s321 = smul.addr %s320, 16
        %s322 = scalar_lea.vmem [#allocation4], %s321
        %s323 = smul.u32 32, %s29
        %p324 = scmp.lt.s32.totalorder %s323, 127
        %s325 = scalar_select %p324, %s323, 127
        %s326 = smul.addr %s325, 8
        %s327 = scalar_lea.vmem %s1, %s326
        %s328 = smul.u32 32, %s29
        %s329 = smul.u32 32, %s29
        %p330 = scmp.lt.s32.totalorder %s329, 127
        %s331 = scalar_select %p330, %s329, 127
        %s332 = smul.addr %s331, 8
        %s333 = scalar_lea.vmem %s2, %s332
        %s334 = smul.u32 32, %s29
        %v336 = vld [vmem:[%s333] sm:$0xff]
        %v337 = vld [vmem:[%s333 + $0x8] sm:$0xff]
        %v338 = vld [vmem:[%s333 + $0x10] sm:$0xff]
        %v339 = vld [vmem:[%s333 + $0x18] sm:$0xff]
        %v340 = vld [vmem:[%s333 + $0x20] sm:$0xff]
        %v341 = vld [vmem:[%s333 + $0x28] sm:$0xff]
        %v342 = vld [vmem:[%s333 + $0x30] sm:$0xff]
        %v343 = vld [vmem:[%s333 + $0x38] sm:$0xff]
        %v344 = vld [vmem:[%s333 + $0x40] sm:$0xff]
        %v345 = vld [vmem:[%s333 + $0x48] sm:$0xff]
        %v346 = vld [vmem:[%s333 + $0x50] sm:$0xff]
        %v347 = vld [vmem:[%s333 + $0x58] sm:$0xff]
        %v348 = vld [vmem:[%s333 + $0x60] sm:$0xff]
        %v349 = vld [vmem:[%s333 + $0x68] sm:$0xff]
        %v350 = vld [vmem:[%s333 + $0x70] sm:$0xff]
        %v351 = vld [vmem:[%s333 + $0x78] sm:$0xff]
        %v352 = vld [vmem:[%s333 + $0x80] sm:$0xff]
        %v353 = vld [vmem:[%s333 + $0x88] sm:$0xff]
        %v354 = vld [vmem:[%s333 + $0x90] sm:$0xff]
        %v355 = vld [vmem:[%s333 + $0x98] sm:$0xff]
        %v356 = vld [vmem:[%s333 + $0xa0] sm:$0xff]
        %v357 = vld [vmem:[%s333 + $0xa8] sm:$0xff]
        %v358 = vld [vmem:[%s333 + $0xb0] sm:$0xff]
        %v359 = vld [vmem:[%s333 + $0xb8] sm:$0xff]
        %v360 = vld [vmem:[%s333 + $0xc0] sm:$0xff]
        %v361 = vld [vmem:[%s333 + $0xc8] sm:$0xff]
        %v362 = vld [vmem:[%s333 + $0xd0] sm:$0xff]
        %v363 = vld [vmem:[%s333 + $0xd8] sm:$0xff]
        %v364 = vld [vmem:[%s333 + $0xe0] sm:$0xff]
        %v365 = vld [vmem:[%s333 + $0xe8] sm:$0xff]
        %v366 = vld [vmem:[%s333 + $0xf0] sm:$0xff]
        %v367 = vld [vmem:[%s333 + $0xf8] sm:$0xff]
        %v368 = vld [vmem:[%s3] sm:$0x7]
        %v369 = vld [vmem:[%s4] sm:$0x1]
        %371 = vset.pattern.permute.xlu0 0
        %372 = vperm.xlu0 %371, %v336
        %v373 = vpop.permute.xlu0 %372
        %376 = vset.pattern.permute.xlu0 0
        %377 = vperm.xlu0 %376, %v337
        %v378 = vpop.permute.xlu0 %377
        %381 = vset.pattern.permute.xlu0 0
        %382 = vperm.xlu0 %381, %v338
        %v383 = vpop.permute.xlu0 %382
        %386 = vset.pattern.permute.xlu0 0
        %387 = vperm.xlu0 %386, %v339
        %v388 = vpop.permute.xlu0 %387
        %391 = vset.pattern.permute.xlu0 0
        %392 = vperm.xlu0 %391, %v340
        %v393 = vpop.permute.xlu0 %392
        %396 = vset.pattern.permute.xlu0 0
        %397 = vperm.xlu0 %396, %v341
        %v398 = vpop.permute.xlu0 %397
        %401 = vset.pattern.permute.xlu0 0
        %402 = vperm.xlu0 %401, %v342
        %v403 = vpop.permute.xlu0 %402
        %406 = vset.pattern.permute.xlu0 0
        %407 = vperm.xlu0 %406, %v343
        %v408 = vpop.permute.xlu0 %407
        %411 = vset.pattern.permute.xlu0 0
        %412 = vperm.xlu0 %411, %v344
        %v413 = vpop.permute.xlu0 %412
        %416 = vset.pattern.permute.xlu0 0
        %417 = vperm.xlu0 %416, %v345
        %v418 = vpop.permute.xlu0 %417
        %421 = vset.pattern.permute.xlu0 0
        %422 = vperm.xlu0 %421, %v346
        %v423 = vpop.permute.xlu0 %422
        %426 = vset.pattern.permute.xlu0 0
        %427 = vperm.xlu0 %426, %v347
        %v428 = vpop.permute.xlu0 %427
        %431 = vset.pattern.permute.xlu0 0
        %432 = vperm.xlu0 %431, %v348
        %v433 = vpop.permute.xlu0 %432
        %436 = vset.pattern.permute.xlu0 0
        %437 = vperm.xlu0 %436, %v349
        %v438 = vpop.permute.xlu0 %437
        %441 = vset.pattern.permute.xlu0 0
        %442 = vperm.xlu0 %441, %v350
        %v443 = vpop.permute.xlu0 %442
        %446 = vset.pattern.permute.xlu0 0
        %447 = vperm.xlu0 %446, %v351
        %v448 = vpop.permute.xlu0 %447
        %451 = vset.pattern.permute.xlu0 0
        %452 = vperm.xlu0 %451, %v352
        %v453 = vpop.permute.xlu0 %452
        %456 = vset.pattern.permute.xlu0 0
        %457 = vperm.xlu0 %456, %v353
        %v458 = vpop.permute.xlu0 %457
        %461 = vset.pattern.permute.xlu0 0
        %462 = vperm.xlu0 %461, %v354
        %v463 = vpop.permute.xlu0 %462
        %466 = vset.pattern.permute.xlu0 0
        %467 = vperm.xlu0 %466, %v355
        %v468 = vpop.permute.xlu0 %467
        %471 = vset.pattern.permute.xlu0 0
        %472 = vperm.xlu0 %471, %v356
        %v473 = vpop.permute.xlu0 %472
        %476 = vset.pattern.permute.xlu0 0
        %477 = vperm.xlu0 %476, %v357
        %v478 = vpop.permute.xlu0 %477
        %481 = vset.pattern.permute.xlu0 0
        %482 = vperm.xlu0 %481, %v358
        %v483 = vpop.permute.xlu0 %482
        %486 = vset.pattern.permute.xlu0 0
        %487 = vperm.xlu0 %486, %v359
        %v488 = vpop.permute.xlu0 %487
        %491 = vset.pattern.permute.xlu0 0
        %492 = vperm.xlu0 %491, %v360
        %v493 = vpop.permute.xlu0 %492
        %496 = vset.pattern.permute.xlu0 0
        %497 = vperm.xlu0 %496, %v361
        %v498 = vpop.permute.xlu0 %497
        %501 = vset.pattern.permute.xlu0 0
        %502 = vperm.xlu0 %501, %v362
        %v503 = vpop.permute.xlu0 %502
        %506 = vset.pattern.permute.xlu0 0
        %507 = vperm.xlu0 %506, %v363
        %v508 = vpop.permute.xlu0 %507
        %511 = vset.pattern.permute.xlu0 0
        %512 = vperm.xlu0 %511, %v364
        %v513 = vpop.permute.xlu0 %512
        %516 = vset.pattern.permute.xlu0 0
        %517 = vperm.xlu0 %516, %v365
        %v518 = vpop.permute.xlu0 %517
        %521 = vset.pattern.permute.xlu0 0
        %522 = vperm.xlu0 %521, %v366
        %v523 = vpop.permute.xlu0 %522
        %526 = vset.pattern.permute.xlu0 0
        %527 = vperm.xlu0 %526, %v367
        %v528 = vpop.permute.xlu0 %527
        %v530 = vlaneseq
        %v531 = vshrl.u32 %v530, 7
        %v532 = vsub.s32 0, %v531
        %v533 = vrot.slane %v368, %v532
        %v534 = vmul.f32 %v373, %v533
        %v535 = vmul.f32 %v378, %v533
        %v536 = vmul.f32 %v383, %v533
        %v537 = vmul.f32 %v388, %v533
        %v538 = vmul.f32 %v393, %v533
        %v539 = vmul.f32 %v398, %v533
        %v540 = vmul.f32 %v403, %v533
        %v541 = vmul.f32 %v408, %v533
        %v542 = vmul.f32 %v413, %v533
        %v543 = vmul.f32 %v418, %v533
        %v544 = vmul.f32 %v423, %v533
        %v545 = vmul.f32 %v428, %v533
        %v546 = vmul.f32 %v433, %v533
        %v547 = vmul.f32 %v438, %v533
        %v548 = vmul.f32 %v443, %v533
        %v549 = vmul.f32 %v448, %v533
        %v550 = vmul.f32 %v453, %v533
        %v551 = vmul.f32 %v458, %v533
        %v552 = vmul.f32 %v463, %v533
        %v553 = vmul.f32 %v468, %v533
        %v554 = vmul.f32 %v473, %v533
        %v555 = vmul.f32 %v478, %v533
        %v556 = vmul.f32 %v483, %v533
        %v557 = vmul.f32 %v488, %v533
        %v558 = vmul.f32 %v493, %v533
        %v559 = vmul.f32 %v498, %v533
        %v560 = vmul.f32 %v503, %v533
        %v561 = vmul.f32 %v508, %v533
        %v562 = vmul.f32 %v513, %v533
        %v563 = vmul.f32 %v518, %v533
        %v564 = vmul.f32 %v523, %v533
        %v565 = vmul.f32 %v528, %v533
        %v567 = vlaneseq
        %v568 = vshrl.u32 %v567, 7
        %v569 = vsub.s32 0, %v568
        %v570 = vrot.slane %v369, %v569
        %v572 = vadd.f32 %v570, %v534
        %v573 = vadd.f32 %v570, %v535
        %v574 = vadd.f32 %v570, %v536
        %v575 = vadd.f32 %v570, %v537
        %v576 = vadd.f32 %v570, %v538
        %v577 = vadd.f32 %v570, %v539
        %v578 = vadd.f32 %v570, %v540
        %v579 = vadd.f32 %v570, %v541
        %v580 = vadd.f32 %v570, %v542
        %v581 = vadd.f32 %v570, %v543
        %v582 = vadd.f32 %v570, %v544
        %v583 = vadd.f32 %v570, %v545
        %v584 = vadd.f32 %v570, %v546
        %v585 = vadd.f32 %v570, %v547
        %v586 = vadd.f32 %v570, %v548
        %v587 = vadd.f32 %v570, %v549
        %v588 = vadd.f32 %v570, %v550
        %v589 = vadd.f32 %v570, %v551
        %v590 = vadd.f32 %v570, %v552
        %v591 = vadd.f32 %v570, %v553
        %v592 = vadd.f32 %v570, %v554
        %v593 = vadd.f32 %v570, %v555
        %v594 = vadd.f32 %v570, %v556
        %v595 = vadd.f32 %v570, %v557
        %v596 = vadd.f32 %v570, %v558
        %v597 = vadd.f32 %v570, %v559
        %v598 = vadd.f32 %v570, %v560
        %v599 = vadd.f32 %v570, %v561
        %v600 = vadd.f32 %v570, %v562
        %v601 = vadd.f32 %v570, %v563
        %v602 = vadd.f32 %v570, %v564
        %v603 = vadd.f32 %v570, %v565
        %604 = vset.pattern.permute.xlu0 1
        %605 = vperm.xlu0 %604, %v336
        %v606 = vpop.permute.xlu0 %605
        %608 = vset.pattern.permute.xlu0 1
        %609 = vperm.xlu0 %608, %v337
        %v610 = vpop.permute.xlu0 %609
        %612 = vset.pattern.permute.xlu0 1
        %613 = vperm.xlu0 %612, %v338
        %v614 = vpop.permute.xlu0 %613
        %616 = vset.pattern.permute.xlu0 1
        %617 = vperm.xlu0 %616, %v339
        %v618 = vpop.permute.xlu0 %617
        %620 = vset.pattern.permute.xlu0 1
        %621 = vperm.xlu0 %620, %v340
        %v622 = vpop.permute.xlu0 %621
        %624 = vset.pattern.permute.xlu0 1
        %625 = vperm.xlu0 %624, %v341
        %v626 = vpop.permute.xlu0 %625
        %628 = vset.pattern.permute.xlu0 1
        %629 = vperm.xlu0 %628, %v342
        %v630 = vpop.permute.xlu0 %629
        %632 = vset.pattern.permute.xlu0 1
        %633 = vperm.xlu0 %632, %v343
        %v634 = vpop.permute.xlu0 %633
        %636 = vset.pattern.permute.xlu0 1
        %637 = vperm.xlu0 %636, %v344
        %v638 = vpop.permute.xlu0 %637
        %640 = vset.pattern.permute.xlu0 1
        %641 = vperm.xlu0 %640, %v345
        %v642 = vpop.permute.xlu0 %641
        %644 = vset.pattern.permute.xlu0 1
        %645 = vperm.xlu0 %644, %v346
        %v646 = vpop.permute.xlu0 %645
        %648 = vset.pattern.permute.xlu0 1
        %649 = vperm.xlu0 %648, %v347
        %v650 = vpop.permute.xlu0 %649
        %652 = vset.pattern.permute.xlu0 1
        %653 = vperm.xlu0 %652, %v348
        %v654 = vpop.permute.xlu0 %653
        %656 = vset.pattern.permute.xlu0 1
        %657 = vperm.xlu0 %656, %v349
        %v658 = vpop.permute.xlu0 %657
        %660 = vset.pattern.permute.xlu0 1
        %661 = vperm.xlu0 %660, %v350
        %v662 = vpop.permute.xlu0 %661
        %664 = vset.pattern.permute.xlu0 1
        %665 = vperm.xlu0 %664, %v351
        %v666 = vpop.permute.xlu0 %665
        %668 = vset.pattern.permute.xlu0 1
        %669 = vperm.xlu0 %668, %v352
        %v670 = vpop.permute.xlu0 %669
        %672 = vset.pattern.permute.xlu0 1
        %673 = vperm.xlu0 %672, %v353
        %v674 = vpop.permute.xlu0 %673
        %676 = vset.pattern.permute.xlu0 1
        %677 = vperm.xlu0 %676, %v354
        %v678 = vpop.permute.xlu0 %677
        %680 = vset.pattern.permute.xlu0 1
        %681 = vperm.xlu0 %680, %v355
        %v682 = vpop.permute.xlu0 %681
        %684 = vset.pattern.permute.xlu0 1
        %685 = vperm.xlu0 %684, %v356
        %v686 = vpop.permute.xlu0 %685
        %688 = vset.pattern.permute.xlu0 1
        %689 = vperm.xlu0 %688, %v357
        %v690 = vpop.permute.xlu0 %689
        %692 = vset.pattern.permute.xlu0 1
        %693 = vperm.xlu0 %692, %v358
        %v694 = vpop.permute.xlu0 %693
        %696 = vset.pattern.permute.xlu0 1
        %697 = vperm.xlu0 %696, %v359
        %v698 = vpop.permute.xlu0 %697
        %700 = vset.pattern.permute.xlu0 1
        %701 = vperm.xlu0 %700, %v360
        %v702 = vpop.permute.xlu0 %701
        %704 = vset.pattern.permute.xlu0 1
        %705 = vperm.xlu0 %704, %v361
        %v706 = vpop.permute.xlu0 %705
        %708 = vset.pattern.permute.xlu0 1
        %709 = vperm.xlu0 %708, %v362
        %v710 = vpop.permute.xlu0 %709
        %712 = vset.pattern.permute.xlu0 1
        %713 = vperm.xlu0 %712, %v363
        %v714 = vpop.permute.xlu0 %713
        %716 = vset.pattern.permute.xlu0 1
        %717 = vperm.xlu0 %716, %v364
        %v718 = vpop.permute.xlu0 %717
        %720 = vset.pattern.permute.xlu0 1
        %721 = vperm.xlu0 %720, %v365
        %v722 = vpop.permute.xlu0 %721
        %724 = vset.pattern.permute.xlu0 1
        %725 = vperm.xlu0 %724, %v366
        %v726 = vpop.permute.xlu0 %725
        %728 = vset.pattern.permute.xlu0 1
        %729 = vperm.xlu0 %728, %v367
        %v730 = vpop.permute.xlu0 %729
        %v732 = vlaneseq
        %v733 = vshrl.u32 %v732, 7
        %v734 = vsub.s32 1, %v733
        %v735 = vrot.slane %v368, %v734
        %v736 = vmul.f32 %v606, %v735
        %v737 = vmul.f32 %v610, %v735
        %v738 = vmul.f32 %v614, %v735
        %v739 = vmul.f32 %v618, %v735
        %v740 = vmul.f32 %v622, %v735
        %v741 = vmul.f32 %v626, %v735
        %v742 = vmul.f32 %v630, %v735
        %v743 = vmul.f32 %v634, %v735
        %v744 = vmul.f32 %v638, %v735
        %v745 = vmul.f32 %v642, %v735
        %v746 = vmul.f32 %v646, %v735
        %v747 = vmul.f32 %v650, %v735
        %v748 = vmul.f32 %v654, %v735
        %v749 = vmul.f32 %v658, %v735
        %v750 = vmul.f32 %v662, %v735
        %v751 = vmul.f32 %v666, %v735
        %v752 = vmul.f32 %v670, %v735
        %v753 = vmul.f32 %v674, %v735
        %v754 = vmul.f32 %v678, %v735
        %v755 = vmul.f32 %v682, %v735
        %v756 = vmul.f32 %v686, %v735
        %v757 = vmul.f32 %v690, %v735
        %v758 = vmul.f32 %v694, %v735
        %v759 = vmul.f32 %v698, %v735
        %v760 = vmul.f32 %v702, %v735
        %v761 = vmul.f32 %v706, %v735
        %v762 = vmul.f32 %v710, %v735
        %v763 = vmul.f32 %v714, %v735
        %v764 = vmul.f32 %v718, %v735
        %v765 = vmul.f32 %v722, %v735
        %v766 = vmul.f32 %v726, %v735
        %v767 = vmul.f32 %v730, %v735
        %v768 = vadd.f32 %v572, %v736
        %v769 = vadd.f32 %v573, %v737
        %v770 = vadd.f32 %v574, %v738
        %v771 = vadd.f32 %v575, %v739
        %v772 = vadd.f32 %v576, %v740
        %v773 = vadd.f32 %v577, %v741
        %v774 = vadd.f32 %v578, %v742
        %v775 = vadd.f32 %v579, %v743
        %v776 = vadd.f32 %v580, %v744
        %v777 = vadd.f32 %v581, %v745
        %v778 = vadd.f32 %v582, %v746
        %v779 = vadd.f32 %v583, %v747
        %v780 = vadd.f32 %v584, %v748
        %v781 = vadd.f32 %v585, %v749
        %v782 = vadd.f32 %v586, %v750
        %v783 = vadd.f32 %v587, %v751
        %v784 = vadd.f32 %v588, %v752
        %v785 = vadd.f32 %v589, %v753
        %v786 = vadd.f32 %v590, %v754
        %v787 = vadd.f32 %v591, %v755
        %v788 = vadd.f32 %v592, %v756
        %v789 = vadd.f32 %v593, %v757
        %v790 = vadd.f32 %v594, %v758
        %v791 = vadd.f32 %v595, %v759
        %v792 = vadd.f32 %v596, %v760
        %v793 = vadd.f32 %v597, %v761
        %v794 = vadd.f32 %v598, %v762
        %v795 = vadd.f32 %v599, %v763
        %v796 = vadd.f32 %v600, %v764
        %v797 = vadd.f32 %v601, %v765
        %v798 = vadd.f32 %v602, %v766
        %v799 = vadd.f32 %v603, %v767
        %800 = vset.pattern.permute.xlu0 2
        %801 = vperm.xlu0 %800, %v336
        %v802 = vpop.permute.xlu0 %801
        %804 = vset.pattern.permute.xlu0 2
        %805 = vperm.xlu0 %804, %v337
        %v806 = vpop.permute.xlu0 %805
        %808 = vset.pattern.permute.xlu0 2
        %809 = vperm.xlu0 %808, %v338
        %v810 = vpop.permute.xlu0 %809
        %812 = vset.pattern.permute.xlu0 2
        %813 = vperm.xlu0 %812, %v339
        %v814 = vpop.permute.xlu0 %813
        %816 = vset.pattern.permute.xlu0 2
        %817 = vperm.xlu0 %816, %v340
        %v818 = vpop.permute.xlu0 %817
        %820 = vset.pattern.permute.xlu0 2
        %821 = vperm.xlu0 %820, %v341
        %v822 = vpop.permute.xlu0 %821
        %824 = vset.pattern.permute.xlu0 2
        %825 = vperm.xlu0 %824, %v342
        %v826 = vpop.permute.xlu0 %825
        %828 = vset.pattern.permute.xlu0 2
        %829 = vperm.xlu0 %828, %v343
        %v830 = vpop.permute.xlu0 %829
        %832 = vset.pattern.permute.xlu0 2
        %833 = vperm.xlu0 %832, %v344
        %v834 = vpop.permute.xlu0 %833
        %836 = vset.pattern.permute.xlu0 2
        %837 = vperm.xlu0 %836, %v345
        %v838 = vpop.permute.xlu0 %837
        %840 = vset.pattern.permute.xlu0 2
        %841 = vperm.xlu0 %840, %v346
        %v842 = vpop.permute.xlu0 %841
        %844 = vset.pattern.permute.xlu0 2
        %845 = vperm.xlu0 %844, %v347
        %v846 = vpop.permute.xlu0 %845
        %848 = vset.pattern.permute.xlu0 2
        %849 = vperm.xlu0 %848, %v348
        %v850 = vpop.permute.xlu0 %849
        %852 = vset.pattern.permute.xlu0 2
        %853 = vperm.xlu0 %852, %v349
        %v854 = vpop.permute.xlu0 %853
        %856 = vset.pattern.permute.xlu0 2
        %857 = vperm.xlu0 %856, %v350
        %v858 = vpop.permute.xlu0 %857
        %860 = vset.pattern.permute.xlu0 2
        %861 = vperm.xlu0 %860, %v351
        %v862 = vpop.permute.xlu0 %861
        %864 = vset.pattern.permute.xlu0 2
        %865 = vperm.xlu0 %864, %v352
        %v866 = vpop.permute.xlu0 %865
        %868 = vset.pattern.permute.xlu0 2
        %869 = vperm.xlu0 %868, %v353
        %v870 = vpop.permute.xlu0 %869
        %872 = vset.pattern.permute.xlu0 2
        %873 = vperm.xlu0 %872, %v354
        %v874 = vpop.permute.xlu0 %873
        %876 = vset.pattern.permute.xlu0 2
        %877 = vperm.xlu0 %876, %v355
        %v878 = vpop.permute.xlu0 %877
        %880 = vset.pattern.permute.xlu0 2
        %881 = vperm.xlu0 %880, %v356
        %v882 = vpop.permute.xlu0 %881
        %884 = vset.pattern.permute.xlu0 2
        %885 = vperm.xlu0 %884, %v357
        %v886 = vpop.permute.xlu0 %885
        %888 = vset.pattern.permute.xlu0 2
        %889 = vperm.xlu0 %888, %v358
        %v890 = vpop.permute.xlu0 %889
        %892 = vset.pattern.permute.xlu0 2
        %893 = vperm.xlu0 %892, %v359
        %v894 = vpop.permute.xlu0 %893
        %896 = vset.pattern.permute.xlu0 2
        %897 = vperm.xlu0 %896, %v360
        %v898 = vpop.permute.xlu0 %897
        %900 = vset.pattern.permute.xlu0 2
        %901 = vperm.xlu0 %900, %v361
        %v902 = vpop.permute.xlu0 %901
        %904 = vset.pattern.permute.xlu0 2
        %905 = vperm.xlu0 %904, %v362
        %v906 = vpop.permute.xlu0 %905
        %908 = vset.pattern.permute.xlu0 2
        %909 = vperm.xlu0 %908, %v363
        %v910 = vpop.permute.xlu0 %909
        %912 = vset.pattern.permute.xlu0 2
        %913 = vperm.xlu0 %912, %v364
        %v914 = vpop.permute.xlu0 %913
        %916 = vset.pattern.permute.xlu0 2
        %917 = vperm.xlu0 %916, %v365
        %v918 = vpop.permute.xlu0 %917
        %920 = vset.pattern.permute.xlu0 2
        %921 = vperm.xlu0 %920, %v366
        %v922 = vpop.permute.xlu0 %921
        %924 = vset.pattern.permute.xlu0 2
        %925 = vperm.xlu0 %924, %v367
        %v926 = vpop.permute.xlu0 %925
        %v928 = vlaneseq
        %v929 = vshrl.u32 %v928, 7
        %v930 = vsub.s32 2, %v929
        %v931 = vrot.slane %v368, %v930
        %v932 = vmul.f32 %v802, %v931
        %v933 = vmul.f32 %v806, %v931
        %v934 = vmul.f32 %v810, %v931
        %v935 = vmul.f32 %v814, %v931
        %v936 = vmul.f32 %v818, %v931
        %v937 = vmul.f32 %v822, %v931
        %v938 = vmul.f32 %v826, %v931
        %v939 = vmul.f32 %v830, %v931
        %v940 = vmul.f32 %v834, %v931
        %v941 = vmul.f32 %v838, %v931
        %v942 = vmul.f32 %v842, %v931
        %v943 = vmul.f32 %v846, %v931
        %v944 = vmul.f32 %v850, %v931
        %v945 = vmul.f32 %v854, %v931
        %v946 = vmul.f32 %v858, %v931
        %v947 = vmul.f32 %v862, %v931
        %v948 = vmul.f32 %v866, %v931
        %v949 = vmul.f32 %v870, %v931
        %v950 = vmul.f32 %v874, %v931
        %v951 = vmul.f32 %v878, %v931
        %v952 = vmul.f32 %v882, %v931
        %v953 = vmul.f32 %v886, %v931
        %v954 = vmul.f32 %v890, %v931
        %v955 = vmul.f32 %v894, %v931
        %v956 = vmul.f32 %v898, %v931
        %v957 = vmul.f32 %v902, %v931
        %v958 = vmul.f32 %v906, %v931
        %v959 = vmul.f32 %v910, %v931
        %v960 = vmul.f32 %v914, %v931
        %v961 = vmul.f32 %v918, %v931
        %v962 = vmul.f32 %v922, %v931
        %v963 = vmul.f32 %v926, %v931
        %v964 = vadd.f32 %v768, %v932
        %v965 = vadd.f32 %v769, %v933
        %v966 = vadd.f32 %v770, %v934
        %v967 = vadd.f32 %v771, %v935
        %v968 = vadd.f32 %v772, %v936
        %v969 = vadd.f32 %v773, %v937
        %v970 = vadd.f32 %v774, %v938
        %v971 = vadd.f32 %v775, %v939
        %v972 = vadd.f32 %v776, %v940
        %v973 = vadd.f32 %v777, %v941
        %v974 = vadd.f32 %v778, %v942
        %v975 = vadd.f32 %v779, %v943
        %v976 = vadd.f32 %v780, %v944
        %v977 = vadd.f32 %v781, %v945
        %v978 = vadd.f32 %v782, %v946
        %v979 = vadd.f32 %v783, %v947
        %v980 = vadd.f32 %v784, %v948
        %v981 = vadd.f32 %v785, %v949
        %v982 = vadd.f32 %v786, %v950
        %v983 = vadd.f32 %v787, %v951
        %v984 = vadd.f32 %v788, %v952
        %v985 = vadd.f32 %v789, %v953
        %v986 = vadd.f32 %v790, %v954
        %v987 = vadd.f32 %v791, %v955
        %v988 = vadd.f32 %v792, %v956
        %v989 = vadd.f32 %v793, %v957
        %v990 = vadd.f32 %v794, %v958
        %v991 = vadd.f32 %v795, %v959
        %v992 = vadd.f32 %v796, %v960
        %v993 = vadd.f32 %v797, %v961
        %v994 = vadd.f32 %v798, %v962
        %v995 = vadd.f32 %v799, %v963
        %v996 = vmax.f32 %v964, 0.0
        %v997 = vmax.f32 %v965, 0.0
        %v998 = vmax.f32 %v966, 0.0
        %v999 = vmax.f32 %v967, 0.0
        %v1000 = vmax.f32 %v968, 0.0
        %v1001 = vmax.f32 %v969, 0.0
        %v1002 = vmax.f32 %v970, 0.0
        %v1003 = vmax.f32 %v971, 0.0
        %v1004 = vmax.f32 %v972, 0.0
        %v1005 = vmax.f32 %v973, 0.0
        %v1006 = vmax.f32 %v974, 0.0
        %v1007 = vmax.f32 %v975, 0.0
        %v1008 = vmax.f32 %v976, 0.0
        %v1009 = vmax.f32 %v977, 0.0
        %v1010 = vmax.f32 %v978, 0.0
        %v1011 = vmax.f32 %v979, 0.0
        %v1012 = vmax.f32 %v980, 0.0
        %v1013 = vmax.f32 %v981, 0.0
        %v1014 = vmax.f32 %v982, 0.0
        %v1015 = vmax.f32 %v983, 0.0
        %v1016 = vmax.f32 %v984, 0.0
        %v1017 = vmax.f32 %v985, 0.0
        %v1018 = vmax.f32 %v986, 0.0
        %v1019 = vmax.f32 %v987, 0.0
        %v1020 = vmax.f32 %v988, 0.0
        %v1021 = vmax.f32 %v989, 0.0
        %v1022 = vmax.f32 %v990, 0.0
        %v1023 = vmax.f32 %v991, 0.0
        %v1024 = vmax.f32 %v992, 0.0
        %v1025 = vmax.f32 %v993, 0.0
        %v1026 = vmax.f32 %v994, 0.0
        %v1027 = vmax.f32 %v995, 0.0
        %v1028 = vpack.c.bf16 %v997, %v996
        %v1029 = vpack.c.bf16 %v999, %v998
        %v1030 = vpack.c.bf16 %v1001, %v1000
        %v1031 = vpack.c.bf16 %v1003, %v1002
        %v1032 = vpack.c.bf16 %v1005, %v1004
        %v1033 = vpack.c.bf16 %v1007, %v1006
        %v1034 = vpack.c.bf16 %v1009, %v1008
        %v1035 = vpack.c.bf16 %v1011, %v1010
        %v1036 = vpack.c.bf16 %v1013, %v1012
        %v1037 = vpack.c.bf16 %v1015, %v1014
        %v1038 = vpack.c.bf16 %v1017, %v1016
        %v1039 = vpack.c.bf16 %v1019, %v1018
        %v1040 = vpack.c.bf16 %v1021, %v1020
        %v1041 = vpack.c.bf16 %v1023, %v1022
        %v1042 = vpack.c.bf16 %v1025, %v1024
        %v1043 = vpack.c.bf16 %v1027, %v1026
        %v1044 = vld [vmem:[%s5] sm:$0xf]
        %v1045 = vld [vmem:[%s5 + $0x4] sm:$0xf]
        %v1046 = vld [vmem:[%s5 + $0x8] sm:$0xf]
        %v1047 = vld [vmem:[%s5 + $0xc] sm:$0xf]
        %v1048 = vld [vmem:[%s5 + $0x10] sm:$0xf]
        %v1049 = vld [vmem:[%s5 + $0x14] sm:$0xf]
        %v1050 = vld [vmem:[%s5 + $0x18] sm:$0xf]
        %v1051 = vld [vmem:[%s5 + $0x1c] sm:$0xf]
        %v1052 = vld [vmem:[%s6] sm:$0x1]
        %v1054 = vlaneseq
        %v1055 = vshrl.u32 %v1054, 7
        %v1056 = vsub.s32 0, %v1055
        %v1057 = vrot.slane %v1052, %v1056
        %v1067 = vunpack.c.l.b16 %v1044
        %v1068 = vunpack.c.l.b16 %v1045
        %v1069 = vunpack.c.l.b16 %v1046
        %v1070 = vunpack.c.l.b16 %v1047
        %v1071 = vunpack.c.l.b16 %v1048
        %v1072 = vunpack.c.l.b16 %v1049
        %v1073 = vunpack.c.l.b16 %v1050
        %v1074 = vunpack.c.l.b16 %v1051
        %v1075 = vpack.c.b16 %v1068, %v1067
        %v1076 = vpack.c.b16 %v1070, %v1069
        %v1077 = vpack.c.b16 %v1072, %v1071
        %v1078 = vpack.c.b16 %v1074, %v1073
        %vm1083 = vcmask 523264
        %v1085 = vsel %vm1083, %v1028, 0
        %v1088 = vsel %vm1083, %v1029, 0
        %v1091 = vsel %vm1083, %v1030, 0
        %v1094 = vsel %vm1083, %v1031, 0
        %v1097 = vsel %vm1083, %v1032, 0
        %v1100 = vsel %vm1083, %v1033, 0
        %v1103 = vsel %vm1083, %v1034, 0
        %v1106 = vsel %vm1083, %v1035, 0
        %v1109 = vsel %vm1083, %v1036, 0
        %v1112 = vsel %vm1083, %v1037, 0
        %v1115 = vsel %vm1083, %v1038, 0
        %v1118 = vsel %vm1083, %v1039, 0
        %v1121 = vsel %vm1083, %v1040, 0
        %v1124 = vsel %vm1083, %v1041, 0
        %v1127 = vsel %vm1083, %v1042, 0
        %v1130 = vsel %vm1083, %v1043, 0
        %1132 = vmatprep.subr.bf16.mxu0 0
        %1133 = vmatpush1.bf16.msra.mxu0 %v1075
        %1134 = vmatprep.subr.bf16.mxu0 0
        %1135 = vmatpush1.bf16.msra.mxu0 %v1076
        %1136 = vmatprep.subr.bf16.mxu0 0
        %1137 = vmatpush1.bf16.msra.mxu0 %v1077
        %1138 = vmatprep.subr.bf16.mxu0 0
        %1139 = vmatpush1.bf16.msra.mxu0 %v1078
        %1140 = vmatprep.subr.bf16.mxu0 0
        %1141 = vmatpush1.bf16.msra.mxu0 0
        %1142 = vmatprep.subr.bf16.mxu0 0
        %1143 = vmatpush1.bf16.msra.mxu0 0
        %1144 = vmatprep.subr.bf16.mxu0 0
        %1145 = vmatpush1.bf16.msra.mxu0 0
        %1146 = vmatprep.subr.bf16.mxu0 0
        %1147 = vmatpush1.bf16.msra.mxu0 0
        %1148 = vmatprep.subr.bf16.mxu0 0
        %1149 = vmatpush1.bf16.msra.mxu0 0
        %1150 = vmatprep.subr.bf16.mxu0 0
        %1151 = vmatpush1.bf16.msra.mxu0 0
        %1152 = vmatprep.subr.bf16.mxu0 0
        %1153 = vmatpush1.bf16.msra.mxu0 0
        %1154 = vmatprep.subr.bf16.mxu0 0
        %1155 = vmatpush1.bf16.msra.mxu0 0
        %1156 = vmatprep.subr.bf16.mxu0 0
        %1157 = vmatpush1.bf16.msra.mxu0 0
        %1158 = vmatprep.subr.bf16.mxu0 0
        %1159 = vmatpush1.bf16.msra.mxu0 0
        %1160 = vmatprep.subr.bf16.mxu0 0
        %1161 = vmatpush1.bf16.msra.mxu0 0
        %1162 = vmatprep.subr.bf16.mxu0 0
        %1163 = vmatpush1.bf16.msra.mxu0 0
        %1164 = vmatprep.mubr.bf16.mxu0 0
        %1165 = vmatmul.mubr.bf16.gmra.mrb[0].mxu0 %v1085
        %v1166 = vpop.f32.mrb[0].mxu0
        %v1167 = vadd.f32 %v1057, %v1166
        %v1168 = vpop.f32.mrb[0].mxu0
        %v1169 = vpop.f32.mrb[0].mxu0
        %v1170 = vadd.f32 %v1057, %v1169
        %v1171 = vpop.f32.mrb[0].mxu0
        %1172 = vmatprep.mubr.bf16.mxu0 0
        %1173 = vmatmul.mubr.bf16.gmra.mrb[0].mxu0 %v1088
        %v1174 = vpop.f32.mrb[0].mxu0
        %v1175 = vadd.f32 %v1057, %v1174
        %v1176 = vpop.f32.mrb[0].mxu0
        %v1177 = vpop.f32.mrb[0].mxu0
        %v1178 = vadd.f32 %v1057, %v1177
        %v1179 = vpop.f32.mrb[0].mxu0
        %1180 = vmatprep.mubr.bf16.mxu0 0
        %1181 = vmatmul.mubr.bf16.gmra.mrb[0].mxu0 %v1091
        %v1182 = vpop.f32.mrb[0].mxu0
        %v1183 = vadd.f32 %v1057, %v1182
        %v1184 = vpop.f32.mrb[0].mxu0
        %v1185 = vpop.f32.mrb[0].mxu0
        %v1186 = vadd.f32 %v1057, %v1185
        %v1187 = vpop.f32.mrb[0].mxu0
        %1188 = vmatprep.mubr.bf16.mxu0 0
        %1189 = vmatmul.mubr.bf16.gmra.mrb[0].mxu0 %v1094
        %v1190 = vpop.f32.mrb[0].mxu0
        %v1191 = vadd.f32 %v1057, %v1190
        %v1192 = vpop.f32.mrb[0].mxu0
        %v1193 = vpop.f32.mrb[0].mxu0
        %v1194 = vadd.f32 %v1057, %v1193
        %v1195 = vpop.f32.mrb[0].mxu0
        %1196 = vmatprep.mubr.bf16.mxu0 0
        %1197 = vmatmul.mubr.bf16.gmra.mrb[0].mxu0 %v1097
        %v1198 = vpop.f32.mrb[0].mxu0
        %v1199 = vadd.f32 %v1057, %v1198
        %v1200 = vpop.f32.mrb[0].mxu0
        %v1201 = vpop.f32.mrb[0].mxu0
        %v1202 = vadd.f32 %v1057, %v1201
        %v1203 = vpop.f32.mrb[0].mxu0
        %1204 = vmatprep.mubr.bf16.mxu0 0
        %1205 = vmatmul.mubr.bf16.gmra.mrb[0].mxu0 %v1100
        %v1206 = vpop.f32.mrb[0].mxu0
        %v1207 = vadd.f32 %v1057, %v1206
        %v1208 = vpop.f32.mrb[0].mxu0
        %v1209 = vpop.f32.mrb[0].mxu0
        %v1210 = vadd.f32 %v1057, %v1209
        %v1211 = vpop.f32.mrb[0].mxu0
        %1212 = vmatprep.mubr.bf16.mxu0 0
        %1213 = vmatmul.mubr.bf16.gmra.mrb[0].mxu0 %v1103
        %v1214 = vpop.f32.mrb[0].mxu0
        %v1215 = vadd.f32 %v1057, %v1214
        %v1216 = vpop.f32.mrb[0].mxu0
        %v1217 = vpop.f32.mrb[0].mxu0
        %v1218 = vadd.f32 %v1057, %v1217
        %v1219 = vpop.f32.mrb[0].mxu0
        %1220 = vmatprep.mubr.bf16.mxu0 0
        %1221 = vmatmul.mubr.bf16.gmra.mrb[0].mxu0 %v1106
        %v1222 = vpop.f32.mrb[0].mxu0
        %v1223 = vadd.f32 %v1057, %v1222
        %v1224 = vpop.f32.mrb[0].mxu0
        %v1225 = vpop.f32.mrb[0].mxu0
        %v1226 = vadd.f32 %v1057, %v1225
        %v1227 = vpop.f32.mrb[0].mxu0
        %1228 = vmatprep.mubr.bf16.mxu0 0
        %1229 = vmatmul.mubr.bf16.gmra.mrb[0].mxu0 %v1109
        %v1230 = vpop.f32.mrb[0].mxu0
        %v1231 = vadd.f32 %v1057, %v1230
        %v1232 = vpop.f32.mrb[0].mxu0
        %v1233 = vpop.f32.mrb[0].mxu0
        %v1234 = vadd.f32 %v1057, %v1233
        %v1235 = vpop.f32.mrb[0].mxu0
        %1236 = vmatprep.mubr.bf16.mxu0 0
        %1237 = vmatmul.mubr.bf16.gmra.mrb[0].mxu0 %v1112
        %v1238 = vpop.f32.mrb[0].mxu0
        %v1239 = vadd.f32 %v1057, %v1238
        %v1240 = vpop.f32.mrb[0].mxu0
        %v1241 = vpop.f32.mrb[0].mxu0
        %v1242 = vadd.f32 %v1057, %v1241
        %v1243 = vpop.f32.mrb[0].mxu0
        %1244 = vmatprep.mubr.bf16.mxu0 0
        %1245 = vmatmul.mubr.bf16.gmra.mrb[0].mxu0 %v1115
        %v1246 = vpop.f32.mrb[0].mxu0
        %v1247 = vadd.f32 %v1057, %v1246
        %v1248 = vpop.f32.mrb[0].mxu0
        %v1249 = vpop.f32.mrb[0].mxu0
        %v1250 = vadd.f32 %v1057, %v1249
        %v1251 = vpop.f32.mrb[0].mxu0
        %1252 = vmatprep.mubr.bf16.mxu0 0
        %1253 = vmatmul.mubr.bf16.gmra.mrb[0].mxu0 %v1118
        %v1254 = vpop.f32.mrb[0].mxu0
        %v1255 = vadd.f32 %v1057, %v1254
        %v1256 = vpop.f32.mrb[0].mxu0
        %v1257 = vpop.f32.mrb[0].mxu0
        %v1258 = vadd.f32 %v1057, %v1257
        %v1259 = vpop.f32.mrb[0].mxu0
        %1260 = vmatprep.mubr.bf16.mxu0 0
        %1261 = vmatmul.mubr.bf16.gmra.mrb[0].mxu0 %v1121
        %v1262 = vpop.f32.mrb[0].mxu0
        %v1263 = vadd.f32 %v1057, %v1262
        %v1264 = vpop.f32.mrb[0].mxu0
        %v1265 = vpop.f32.mrb[0].mxu0
        %v1266 = vadd.f32 %v1057, %v1265
        %v1267 = vpop.f32.mrb[0].mxu0
        %1268 = vmatprep.mubr.bf16.mxu0 0
        %1269 = vmatmul.mubr.bf16.gmra.mrb[0].mxu0 %v1124
        %v1270 = vpop.f32.mrb[0].mxu0
        %v1271 = vadd.f32 %v1057, %v1270
        %v1272 = vpop.f32.mrb[0].mxu0
        %v1273 = vpop.f32.mrb[0].mxu0
        %v1274 = vadd.f32 %v1057, %v1273
        %v1275 = vpop.f32.mrb[0].mxu0
        %1276 = vmatprep.mubr.bf16.mxu0 0
        %1277 = vmatmul.mubr.bf16.gmra.mrb[0].mxu0 %v1127
        %v1278 = vpop.f32.mrb[0].mxu0
        %v1279 = vadd.f32 %v1057, %v1278
        %v1280 = vpop.f32.mrb[0].mxu0
        %v1281 = vpop.f32.mrb[0].mxu0
        %v1282 = vadd.f32 %v1057, %v1281
        %v1283 = vpop.f32.mrb[0].mxu0
        %1284 = vmatprep.mubr.bf16.mxu0 0
        %1285 = vmatmul.mubr.bf16.gmra.mrb[0].mxu0 %v1130
        %v1286 = vpop.f32.mrb[0].mxu0
        %v1287 = vadd.f32 %v1057, %v1286
        %v1288 = vpop.f32.mrb[0].mxu0
        %v1289 = vpop.f32.mrb[0].mxu0
        %v1290 = vadd.f32 %v1057, %v1289
        %v1291 = vpop.f32.mrb[0].mxu0
        %1292 = vdwg.mxu0
        %v1293 = vmax.f32 %v1167, 0.0
        %v1294 = vmax.f32 %v1170, 0.0
        %v1295 = vmax.f32 %v1175, 0.0
        %v1296 = vmax.f32 %v1178, 0.0
        %v1297 = vmax.f32 %v1183, 0.0
        %v1298 = vmax.f32 %v1186, 0.0
        %v1299 = vmax.f32 %v1191, 0.0
        %v1300 = vmax.f32 %v1194, 0.0
        %v1301 = vmax.f32 %v1199, 0.0
        %v1302 = vmax.f32 %v1202, 0.0
        %v1303 = vmax.f32 %v1207, 0.0
        %v1304 = vmax.f32 %v1210, 0.0
        %v1305 = vmax.f32 %v1215, 0.0
        %v1306 = vmax.f32 %v1218, 0.0
        %v1307 = vmax.f32 %v1223, 0.0
        %v1308 = vmax.f32 %v1226, 0.0
        %v1309 = vmax.f32 %v1231, 0.0
        %v1310 = vmax.f32 %v1234, 0.0
        %v1311 = vmax.f32 %v1239, 0.0
        %v1312 = vmax.f32 %v1242, 0.0
        %v1313 = vmax.f32 %v1247, 0.0
        %v1314 = vmax.f32 %v1250, 0.0
        %v1315 = vmax.f32 %v1255, 0.0
        %v1316 = vmax.f32 %v1258, 0.0
        %v1317 = vmax.f32 %v1263, 0.0
        %v1318 = vmax.f32 %v1266, 0.0
        %v1319 = vmax.f32 %v1271, 0.0
        %v1320 = vmax.f32 %v1274, 0.0
        %v1321 = vmax.f32 %v1279, 0.0
        %v1322 = vmax.f32 %v1282, 0.0
        %v1323 = vmax.f32 %v1287, 0.0
        %v1324 = vmax.f32 %v1290, 0.0
        %v1325 = vpack.c.bf16 %v1294, %v1293
        %v1326 = vpack.c.bf16 %v1296, %v1295
        %v1327 = vpack.c.bf16 %v1298, %v1297
        %v1328 = vpack.c.bf16 %v1300, %v1299
        %v1329 = vpack.c.bf16 %v1302, %v1301
        %v1330 = vpack.c.bf16 %v1304, %v1303
        %v1331 = vpack.c.bf16 %v1306, %v1305
        %v1332 = vpack.c.bf16 %v1308, %v1307
        %v1333 = vpack.c.bf16 %v1310, %v1309
        %v1334 = vpack.c.bf16 %v1312, %v1311
        %v1335 = vpack.c.bf16 %v1314, %v1313
        %v1336 = vpack.c.bf16 %v1316, %v1315
        %v1337 = vpack.c.bf16 %v1318, %v1317
        %v1338 = vpack.c.bf16 %v1320, %v1319
        %v1339 = vpack.c.bf16 %v1322, %v1321
        %v1340 = vpack.c.bf16 %v1324, %v1323
        %v1341 = vld [vmem:[%s7] sm:$0xff]
        %v1342 = vld [vmem:[%s7 + $0x8] sm:$0xff]
        %v1343 = vld [vmem:[%s7 + $0x10] sm:$0xff]
        %v1344 = vld [vmem:[%s7 + $0x18] sm:$0xff]
        %v1345 = vld [vmem:[%s7 + $0x20] sm:$0xff]
        %v1346 = vld [vmem:[%s7 + $0x28] sm:$0xff]
        %v1347 = vld [vmem:[%s7 + $0x30] sm:$0xff]
        %v1348 = vld [vmem:[%s7 + $0x38] sm:$0xff]
        %v1349 = vld [vmem:[%s7 + $0x40] sm:$0xff]
        %v1350 = vld [vmem:[%s7 + $0x48] sm:$0xff]
        %v1351 = vld [vmem:[%s7 + $0x50] sm:$0xff]
        %v1352 = vld [vmem:[%s7 + $0x58] sm:$0xff]
        %v1353 = vld [vmem:[%s7 + $0x60] sm:$0xff]
        %v1354 = vld [vmem:[%s7 + $0x68] sm:$0xff]
        %v1355 = vld [vmem:[%s7 + $0x70] sm:$0xff]
        %v1356 = vld [vmem:[%s7 + $0x78] sm:$0xff]
        %v1357 = vld [vmem:[%s7 + $0x80] sm:$0xff]
        %v1358 = vld [vmem:[%s7 + $0x88] sm:$0xff]
        %v1359 = vld [vmem:[%s7 + $0x90] sm:$0xff]
        %v1360 = vld [vmem:[%s7 + $0x98] sm:$0xff]
        %v1361 = vld [vmem:[%s7 + $0xa0] sm:$0xff]
        %v1362 = vld [vmem:[%s7 + $0xa8] sm:$0xff]
        %v1363 = vld [vmem:[%s7 + $0xb0] sm:$0xff]
        %v1364 = vld [vmem:[%s7 + $0xb8] sm:$0xff]
        %v1365 = vld [vmem:[%s7 + $0xc0] sm:$0xff]
        %v1366 = vld [vmem:[%s7 + $0xc8] sm:$0xff]
        %v1367 = vld [vmem:[%s7 + $0xd0] sm:$0xff]
        %v1368 = vld [vmem:[%s7 + $0xd8] sm:$0xff]
        %v1369 = vld [vmem:[%s7 + $0xe0] sm:$0xff]
        %v1370 = vld [vmem:[%s7 + $0xe8] sm:$0xff]
        %v1371 = vld [vmem:[%s7 + $0xf0] sm:$0xff]
        %v1372 = vld [vmem:[%s7 + $0xf8] sm:$0xff]
        %v1373 = vld [vmem:[%s7 + $0x100] sm:$0xff]
        %v1374 = vld [vmem:[%s7 + $0x108] sm:$0xff]
        %v1375 = vld [vmem:[%s7 + $0x110] sm:$0xff]
        %v1376 = vld [vmem:[%s7 + $0x118] sm:$0xff]
        %v1377 = vld [vmem:[%s7 + $0x120] sm:$0xff]
        %v1378 = vld [vmem:[%s7 + $0x128] sm:$0xff]
        %v1379 = vld [vmem:[%s7 + $0x130] sm:$0xff]
        %v1380 = vld [vmem:[%s7 + $0x138] sm:$0xff]
        %v1381 = vld [vmem:[%s7 + $0x140] sm:$0xff]
        %v1382 = vld [vmem:[%s7 + $0x148] sm:$0xff]
        %v1383 = vld [vmem:[%s7 + $0x150] sm:$0xff]
        %v1384 = vld [vmem:[%s7 + $0x158] sm:$0xff]
        %v1385 = vld [vmem:[%s7 + $0x160] sm:$0xff]
        %v1386 = vld [vmem:[%s7 + $0x168] sm:$0xff]
        %v1387 = vld [vmem:[%s7 + $0x170] sm:$0xff]
        %v1388 = vld [vmem:[%s7 + $0x178] sm:$0xff]
        %v1389 = vld [vmem:[%s7 + $0x180] sm:$0xff]
        %v1390 = vld [vmem:[%s7 + $0x188] sm:$0xff]
        %v1391 = vld [vmem:[%s7 + $0x190] sm:$0xff]
        %v1392 = vld [vmem:[%s7 + $0x198] sm:$0xff]
        %v1393 = vld [vmem:[%s7 + $0x1a0] sm:$0xff]
        %v1394 = vld [vmem:[%s7 + $0x1a8] sm:$0xff]
        %v1395 = vld [vmem:[%s7 + $0x1b0] sm:$0xff]
        %v1396 = vld [vmem:[%s7 + $0x1b8] sm:$0xff]
        %v1397 = vld [vmem:[%s7 + $0x1c0] sm:$0xff]
        %v1398 = vld [vmem:[%s7 + $0x1c8] sm:$0xff]
        %v1399 = vld [vmem:[%s7 + $0x1d0] sm:$0xff]
        %v1400 = vld [vmem:[%s7 + $0x1d8] sm:$0xff]
        %v1401 = vld [vmem:[%s7 + $0x1e0] sm:$0xff]
        %v1402 = vld [vmem:[%s7 + $0x1e8] sm:$0xff]
        %v1403 = vld [vmem:[%s7 + $0x1f0] sm:$0xff]
        %v1404 = vld [vmem:[%s7 + $0x1f8] sm:$0xff]
        %v1405 = vld [vmem:[%s8] sm:$0xff]
        %v1407 = vlaneseq
        %v1408 = vshrl.u32 %v1407, 7
        %v1409 = vsub.s32 0, %v1408
        %v1410 = vrot.slane %v1405, %v1409
        %v1411 = vlaneseq
        %v1412 = vshrl.u32 %v1411, 7
        %v1413 = vsub.s32 1, %v1412
        %v1414 = vrot.slane %v1405, %v1413
        %v1415 = vlaneseq
        %v1416 = vshrl.u32 %v1415, 7
        %v1417 = vsub.s32 2, %v1416
        %v1418 = vrot.slane %v1405, %v1417
        %v1419 = vlaneseq
        %v1420 = vshrl.u32 %v1419, 7
        %v1421 = vsub.s32 3, %v1420
        %v1422 = vrot.slane %v1405, %v1421
        %v1423 = vlaneseq
        %v1424 = vshrl.u32 %v1423, 7
        %v1425 = vsub.s32 4, %v1424
        %v1426 = vrot.slane %v1405, %v1425
        %v1427 = vlaneseq
        %v1428 = vshrl.u32 %v1427, 7
        %v1429 = vsub.s32 5, %v1428
        %v1430 = vrot.slane %v1405, %v1429
        %v1431 = vlaneseq
        %v1432 = vshrl.u32 %v1431, 7
        %v1433 = vsub.s32 6, %v1432
        %v1434 = vrot.slane %v1405, %v1433
        %v1435 = vlaneseq
        %v1436 = vshrl.u32 %v1435, 7
        %v1437 = vsub.s32 7, %v1436
        %v1438 = vrot.slane %v1405, %v1437
        %v1511 = vunpack.c.l.b16 %v1341
        %v1512 = vunpack.c.h.b16 %v1341
        %v1513 = vunpack.c.l.b16 %v1342
        %v1514 = vunpack.c.h.b16 %v1342
        %v1515 = vunpack.c.l.b16 %v1343
        %v1516 = vunpack.c.h.b16 %v1343
        %v1517 = vunpack.c.l.b16 %v1344
        %v1518 = vunpack.c.h.b16 %v1344
        %v1519 = vunpack.c.l.b16 %v1345
        %v1520 = vunpack.c.h.b16 %v1345
        %v1521 = vunpack.c.l.b16 %v1346
        %v1522 = vunpack.c.h.b16 %v1346
        %v1523 = vunpack.c.l.b16 %v1347
        %v1524 = vunpack.c.h.b16 %v1347
        %v1525 = vunpack.c.l.b16 %v1348
        %v1526 = vunpack.c.h.b16 %v1348
        %v1527 = vunpack.c.l.b16 %v1349
        %v1528 = vunpack.c.h.b16 %v1349
        %v1529 = vunpack.c.l.b16 %v1350
        %v1530 = vunpack.c.h.b16 %v1350
        %v1531 = vunpack.c.l.b16 %v1351
        %v1532 = vunpack.c.h.b16 %v1351
        %v1533 = vunpack.c.l.b16 %v1352
        %v1534 = vunpack.c.h.b16 %v1352
        %v1535 = vunpack.c.l.b16 %v1353
        %v1536 = vunpack.c.h.b16 %v1353
        %v1537 = vunpack.c.l.b16 %v1354
        %v1538 = vunpack.c.h.b16 %v1354
        %v1539 = vunpack.c.l.b16 %v1355
        %v1540 = vunpack.c.h.b16 %v1355
        %v1541 = vunpack.c.l.b16 %v1356
        %v1542 = vunpack.c.h.b16 %v1356
        %v1543 = vunpack.c.l.b16 %v1357
        %v1544 = vunpack.c.h.b16 %v1357
        %v1545 = vunpack.c.l.b16 %v1358
        %v1546 = vunpack.c.h.b16 %v1358
        %v1547 = vunpack.c.l.b16 %v1359
        %v1548 = vunpack.c.h.b16 %v1359
        %v1549 = vunpack.c.l.b16 %v1360
        %v1550 = vunpack.c.h.b16 %v1360
        %v1551 = vunpack.c.l.b16 %v1361
        %v1552 = vunpack.c.h.b16 %v1361
        %v1553 = vunpack.c.l.b16 %v1362
        %v1554 = vunpack.c.h.b16 %v1362
        %v1555 = vunpack.c.l.b16 %v1363
        %v1556 = vunpack.c.h.b16 %v1363
        %v1557 = vunpack.c.l.b16 %v1364
        %v1558 = vunpack.c.h.b16 %v1364
        %v1559 = vunpack.c.l.b16 %v1365
        %v1560 = vunpack.c.h.b16 %v1365
        %v1561 = vunpack.c.l.b16 %v1366
        %v1562 = vunpack.c.h.b16 %v1366
        %v1563 = vunpack.c.l.b16 %v1367
        %v1564 = vunpack.c.h.b16 %v1367
        %v1565 = vunpack.c.l.b16 %v1368
        %v1566 = vunpack.c.h.b16 %v1368
        %v1567 = vunpack.c.l.b16 %v1369
        %v1568 = vunpack.c.h.b16 %v1369
        %v1569 = vunpack.c.l.b16 %v1370
        %v1570 = vunpack.c.h.b16 %v1370
        %v1571 = vunpack.c.l.b16 %v1371
        %v1572 = vunpack.c.h.b16 %v1371
        %v1573 = vunpack.c.l.b16 %v1372
        %v1574 = vunpack.c.h.b16 %v1372
        %v1575 = vunpack.c.l.b16 %v1373
        %v1576 = vunpack.c.h.b16 %v1373
        %v1577 = vunpack.c.l.b16 %v1374
        %v1578 = vunpack.c.h.b16 %v1374
        %v1579 = vunpack.c.l.b16 %v1375
        %v1580 = vunpack.c.h.b16 %v1375
        %v1581 = vunpack.c.l.b16 %v1376
        %v1582 = vunpack.c.h.b16 %v1376
        %v1583 = vunpack.c.l.b16 %v1377
        %v1584 = vunpack.c.h.b16 %v1377
        %v1585 = vunpack.c.l.b16 %v1378
        %v1586 = vunpack.c.h.b16 %v1378
        %v1587 = vunpack.c.l.b16 %v1379
        %v1588 = vunpack.c.h.b16 %v1379
        %v1589 = vunpack.c.l.b16 %v1380
        %v1590 = vunpack.c.h.b16 %v1380
        %v1591 = vunpack.c.l.b16 %v1381
        %v1592 = vunpack.c.h.b16 %v1381
        %v1593 = vunpack.c.l.b16 %v1382
        %v1594 = vunpack.c.h.b16 %v1382
        %v1595 = vunpack.c.l.b16 %v1383
        %v1596 = vunpack.c.h.b16 %v1383
        %v1597 = vunpack.c.l.b16 %v1384
        %v1598 = vunpack.c.h.b16 %v1384
        %v1599 = vunpack.c.l.b16 %v1385
        %v1600 = vunpack.c.h.b16 %v1385
        %v1601 = vunpack.c.l.b16 %v1386
        %v1602 = vunpack.c.h.b16 %v1386
        %v1603 = vunpack.c.l.b16 %v1387
        %v1604 = vunpack.c.h.b16 %v1387
        %v1605 = vunpack.c.l.b16 %v1388
        %v1606 = vunpack.c.h.b16 %v1388
        %v1607 = vunpack.c.l.b16 %v1389
        %v1608 = vunpack.c.h.b16 %v1389
        %v1609 = vunpack.c.l.b16 %v1390
        %v1610 = vunpack.c.h.b16 %v1390
        %v1611 = vunpack.c.l.b16 %v1391
        %v1612 = vunpack.c.h.b16 %v1391
        %v1613 = vunpack.c.l.b16 %v1392
        %v1614 = vunpack.c.h.b16 %v1392
        %v1615 = vunpack.c.l.b16 %v1393
        %v1616 = vunpack.c.h.b16 %v1393
        %v1617 = vunpack.c.l.b16 %v1394
        %v1618 = vunpack.c.h.b16 %v1394
        %v1619 = vunpack.c.l.b16 %v1395
        %v1620 = vunpack.c.h.b16 %v1395
        %v1621 = vunpack.c.l.b16 %v1396
        %v1622 = vunpack.c.h.b16 %v1396
        %v1623 = vunpack.c.l.b16 %v1397
        %v1624 = vunpack.c.h.b16 %v1397
        %v1625 = vunpack.c.l.b16 %v1398
        %v1626 = vunpack.c.h.b16 %v1398
        %v1627 = vunpack.c.l.b16 %v1399
        %v1628 = vunpack.c.h.b16 %v1399
        %v1629 = vunpack.c.l.b16 %v1400
        %v1630 = vunpack.c.h.b16 %v1400
        %v1631 = vunpack.c.l.b16 %v1401
        %v1632 = vunpack.c.h.b16 %v1401
        %v1633 = vunpack.c.l.b16 %v1402
        %v1634 = vunpack.c.h.b16 %v1402
        %v1635 = vunpack.c.l.b16 %v1403
        %v1636 = vunpack.c.h.b16 %v1403
        %v1637 = vunpack.c.l.b16 %v1404
        %v1638 = vunpack.c.h.b16 %v1404
        %v1639 = vpack.c.b16 %v1519, %v1511
        %v1640 = vpack.c.b16 %v1520, %v1512
        %v1641 = vpack.c.b16 %v1521, %v1513
        %v1642 = vpack.c.b16 %v1522, %v1514
        %v1643 = vpack.c.b16 %v1523, %v1515
        %v1644 = vpack.c.b16 %v1524, %v1516
        %v1645 = vpack.c.b16 %v1525, %v1517
        %v1646 = vpack.c.b16 %v1526, %v1518
        %v1647 = vpack.c.b16 %v1535, %v1527
        %v1648 = vpack.c.b16 %v1536, %v1528
        %v1649 = vpack.c.b16 %v1537, %v1529
        %v1650 = vpack.c.b16 %v1538, %v1530
        %v1651 = vpack.c.b16 %v1539, %v1531
        %v1652 = vpack.c.b16 %v1540, %v1532
        %v1653 = vpack.c.b16 %v1541, %v1533
        %v1654 = vpack.c.b16 %v1542, %v1534
        %v1655 = vpack.c.b16 %v1551, %v1543
        %v1656 = vpack.c.b16 %v1552, %v1544
        %v1657 = vpack.c.b16 %v1553, %v1545
        %v1658 = vpack.c.b16 %v1554, %v1546
        %v1659 = vpack.c.b16 %v1555, %v1547
        %v1660 = vpack.c.b16 %v1556, %v1548
        %v1661 = vpack.c.b16 %v1557, %v1549
        %v1662 = vpack.c.b16 %v1558, %v1550
        %v1663 = vpack.c.b16 %v1567, %v1559
        %v1664 = vpack.c.b16 %v1568, %v1560
        %v1665 = vpack.c.b16 %v1569, %v1561
        %v1666 = vpack.c.b16 %v1570, %v1562
        %v1667 = vpack.c.b16 %v1571, %v1563
        %v1668 = vpack.c.b16 %v1572, %v1564
        %v1669 = vpack.c.b16 %v1573, %v1565
        %v1670 = vpack.c.b16 %v1574, %v1566
        %v1671 = vpack.c.b16 %v1583, %v1575
        %v1672 = vpack.c.b16 %v1584, %v1576
        %v1673 = vpack.c.b16 %v1585, %v1577
        %v1674 = vpack.c.b16 %v1586, %v1578
        %v1675 = vpack.c.b16 %v1587, %v1579
        %v1676 = vpack.c.b16 %v1588, %v1580
        %v1677 = vpack.c.b16 %v1589, %v1581
        %v1678 = vpack.c.b16 %v1590, %v1582
        %v1679 = vpack.c.b16 %v1599, %v1591
        %v1680 = vpack.c.b16 %v1600, %v1592
        %v1681 = vpack.c.b16 %v1601, %v1593
        %v1682 = vpack.c.b16 %v1602, %v1594
        %v1683 = vpack.c.b16 %v1603, %v1595
        %v1684 = vpack.c.b16 %v1604, %v1596
        %v1685 = vpack.c.b16 %v1605, %v1597
        %v1686 = vpack.c.b16 %v1606, %v1598
        %v1687 = vpack.c.b16 %v1615, %v1607
        %v1688 = vpack.c.b16 %v1616, %v1608
        %v1689 = vpack.c.b16 %v1617, %v1609
        %v1690 = vpack.c.b16 %v1618, %v1610
        %v1691 = vpack.c.b16 %v1619, %v1611
        %v1692 = vpack.c.b16 %v1620, %v1612
        %v1693 = vpack.c.b16 %v1621, %v1613
        %v1694 = vpack.c.b16 %v1622, %v1614
        %v1695 = vpack.c.b16 %v1631, %v1623
        %v1696 = vpack.c.b16 %v1632, %v1624
        %v1697 = vpack.c.b16 %v1633, %v1625
        %v1698 = vpack.c.b16 %v1634, %v1626
        %v1699 = vpack.c.b16 %v1635, %v1627
        %v1700 = vpack.c.b16 %v1636, %v1628
        %v1701 = vpack.c.b16 %v1637, %v1629
        %v1702 = vpack.c.b16 %v1638, %v1630
        %1767 = vmatprep.subr.bf16.mxu0 %v1640
        %1768 = vmatpush1.bf16.msra.mxu0 %v1639
        %1769 = vmatprep.subr.bf16.mxu0 %v1648
        %1770 = vmatpush1.bf16.msra.mxu0 %v1647
        %1771 = vmatprep.subr.bf16.mxu0 %v1656
        %1772 = vmatpush1.bf16.msra.mxu0 %v1655
        %1773 = vmatprep.subr.bf16.mxu0 %v1664
        %1774 = vmatpush1.bf16.msra.mxu0 %v1663
        %1775 = vmatprep.subr.bf16.mxu0 %v1672
        %1776 = vmatpush1.bf16.msra.mxu0 %v1671
        %1777 = vmatprep.subr.bf16.mxu0 %v1680
        %1778 = vmatpush1.bf16.msra.mxu0 %v1679
        %1779 = vmatprep.subr.bf16.mxu0 %v1688
        %1780 = vmatpush1.bf16.msra.mxu0 %v1687
        %1781 = vmatprep.subr.bf16.mxu0 %v1696
        %1782 = vmatpush1.bf16.msra.mxu0 %v1695
        %1783 = vmatprep.subr.bf16.mxu0 0
        %1784 = vmatpush1.bf16.msra.mxu0 0
        %1785 = vmatprep.subr.bf16.mxu0 0
        %1786 = vmatpush1.bf16.msra.mxu0 0
        %1787 = vmatprep.subr.bf16.mxu0 0
        %1788 = vmatpush1.bf16.msra.mxu0 0
        %1789 = vmatprep.subr.bf16.mxu0 0
        %1790 = vmatpush1.bf16.msra.mxu0 0
        %1791 = vmatprep.subr.bf16.mxu0 0
        %1792 = vmatpush1.bf16.msra.mxu0 0
        %1793 = vmatprep.subr.bf16.mxu0 0
        %1794 = vmatpush1.bf16.msra.mxu0 0
        %1795 = vmatprep.subr.bf16.mxu0 0
        %1796 = vmatpush1.bf16.msra.mxu0 0
        %1797 = vmatprep.subr.bf16.mxu0 0
        %1798 = vmatpush1.bf16.msra.mxu0 0
        %1799 = vmatprep.mubr.bf16.mxu0 0
        %1800 = vmatmul.mubr.bf16.gmra.mrb[0].mxu0 %v1325
        %v1801 = vpop.f32.mrb[0].mxu0
        %v1802 = vadd.f32 %v1410, %v1801
        %v1803 = vpop.f32.mrb[0].mxu0
        %v1804 = vadd.f32 %v1414, %v1803
        %v1805 = vpop.f32.mrb[0].mxu0
        %v1806 = vadd.f32 %v1410, %v1805
        %v1807 = vpop.f32.mrb[0].mxu0
        %v1808 = vadd.f32 %v1414, %v1807
        %1809 = vmatprep.mubr.bf16.mxu0 0
        %1810 = vmatmul.mubr.bf16.gmra.mrb[0].mxu0 %v1326
        %v1811 = vpop.f32.mrb[0].mxu0
        %v1812 = vadd.f32 %v1410, %v1811
        %v1813 = vpop.f32.mrb[0].mxu0
        %v1814 = vadd.f32 %v1414, %v1813
        %v1815 = vpop.f32.mrb[0].mxu0
        %v1816 = vadd.f32 %v1410, %v1815
        %v1817 = vpop.f32.mrb[0].mxu0
        %v1818 = vadd.f32 %v1414, %v1817
        %1819 = vmatprep.mubr.bf16.mxu0 0
        %1820 = vmatmul.mubr.bf16.gmra.mrb[0].mxu0 %v1327
        %v1821 = vpop.f32.mrb[0].mxu0
        %v1822 = vadd.f32 %v1410, %v1821
        %v1823 = vpop.f32.mrb[0].mxu0
        %v1824 = vadd.f32 %v1414, %v1823
        %v1825 = vpop.f32.mrb[0].mxu0
        %v1826 = vadd.f32 %v1410, %v1825
        %v1827 = vpop.f32.mrb[0].mxu0
        %v1828 = vadd.f32 %v1414, %v1827
        %1829 = vmatprep.mubr.bf16.mxu0 0
        %1830 = vmatmul.mubr.bf16.gmra.mrb[0].mxu0 %v1328
        %v1831 = vpop.f32.mrb[0].mxu0
        %v1832 = vadd.f32 %v1410, %v1831
        %v1833 = vpop.f32.mrb[0].mxu0
        %v1834 = vadd.f32 %v1414, %v1833
        %v1835 = vpop.f32.mrb[0].mxu0
        %v1836 = vadd.f32 %v1410, %v1835
        %v1837 = vpop.f32.mrb[0].mxu0
        %v1838 = vadd.f32 %v1414, %v1837
        %1839 = vmatprep.mubr.bf16.mxu0 0
        %1840 = vmatmul.mubr.bf16.gmra.mrb[0].mxu0 %v1329
        %v1841 = vpop.f32.mrb[0].mxu0
        %v1842 = vadd.f32 %v1410, %v1841
        %v1843 = vpop.f32.mrb[0].mxu0
        %v1844 = vadd.f32 %v1414, %v1843
        %v1845 = vpop.f32.mrb[0].mxu0
        %v1846 = vadd.f32 %v1410, %v1845
        %v1847 = vpop.f32.mrb[0].mxu0
        %v1848 = vadd.f32 %v1414, %v1847
        %1849 = vmatprep.mubr.bf16.mxu0 0
        %1850 = vmatmul.mubr.bf16.gmra.mrb[0].mxu0 %v1330
        %v1851 = vpop.f32.mrb[0].mxu0
        %v1852 = vadd.f32 %v1410, %v1851
        %v1853 = vpop.f32.mrb[0].mxu0
        %v1854 = vadd.f32 %v1414, %v1853
        %v1855 = vpop.f32.mrb[0].mxu0
        %v1856 = vadd.f32 %v1410, %v1855
        %v1857 = vpop.f32.mrb[0].mxu0
        %v1858 = vadd.f32 %v1414, %v1857
        %1859 = vmatprep.mubr.bf16.mxu0 0
        %1860 = vmatmul.mubr.bf16.gmra.mrb[0].mxu0 %v1331
        %v1861 = vpop.f32.mrb[0].mxu0
        %v1862 = vadd.f32 %v1410, %v1861
        %v1863 = vpop.f32.mrb[0].mxu0
        %v1864 = vadd.f32 %v1414, %v1863
        %v1865 = vpop.f32.mrb[0].mxu0
        %v1866 = vadd.f32 %v1410, %v1865
        %v1867 = vpop.f32.mrb[0].mxu0
        %v1868 = vadd.f32 %v1414, %v1867
        %1869 = vmatprep.mubr.bf16.mxu0 0
        %1870 = vmatmul.mubr.bf16.gmra.mrb[0].mxu0 %v1332
        %v1871 = vpop.f32.mrb[0].mxu0
        %v1872 = vadd.f32 %v1410, %v1871
        %v1873 = vpop.f32.mrb[0].mxu0
        %v1874 = vadd.f32 %v1414, %v1873
        %v1875 = vpop.f32.mrb[0].mxu0
        %v1876 = vadd.f32 %v1410, %v1875
        %v1877 = vpop.f32.mrb[0].mxu0
        %v1878 = vadd.f32 %v1414, %v1877
        %1879 = vmatprep.mubr.bf16.mxu0 0
        %1880 = vmatmul.mubr.bf16.gmra.mrb[0].mxu0 %v1333
        %v1881 = vpop.f32.mrb[0].mxu0
        %v1882 = vadd.f32 %v1410, %v1881
        %v1883 = vpop.f32.mrb[0].mxu0
        %v1884 = vadd.f32 %v1414, %v1883
        %v1885 = vpop.f32.mrb[0].mxu0
        %v1886 = vadd.f32 %v1410, %v1885
        %v1887 = vpop.f32.mrb[0].mxu0
        %v1888 = vadd.f32 %v1414, %v1887
        %1889 = vmatprep.mubr.bf16.mxu0 0
        %1890 = vmatmul.mubr.bf16.gmra.mrb[0].mxu0 %v1334
        %v1891 = vpop.f32.mrb[0].mxu0
        %v1892 = vadd.f32 %v1410, %v1891
        %v1893 = vpop.f32.mrb[0].mxu0
        %v1894 = vadd.f32 %v1414, %v1893
        %v1895 = vpop.f32.mrb[0].mxu0
        %v1896 = vadd.f32 %v1410, %v1895
        %v1897 = vpop.f32.mrb[0].mxu0
        %v1898 = vadd.f32 %v1414, %v1897
        %1899 = vmatprep.mubr.bf16.mxu0 0
        %1900 = vmatmul.mubr.bf16.gmra.mrb[0].mxu0 %v1335
        %v1901 = vpop.f32.mrb[0].mxu0
        %v1902 = vadd.f32 %v1410, %v1901
        %v1903 = vpop.f32.mrb[0].mxu0
        %v1904 = vadd.f32 %v1414, %v1903
        %v1905 = vpop.f32.mrb[0].mxu0
        %v1906 = vadd.f32 %v1410, %v1905
        %v1907 = vpop.f32.mrb[0].mxu0
        %v1908 = vadd.f32 %v1414, %v1907
        %1909 = vmatprep.mubr.bf16.mxu0 0
        %1910 = vmatmul.mubr.bf16.gmra.mrb[0].mxu0 %v1336
        %v1911 = vpop.f32.mrb[0].mxu0
        %v1912 = vadd.f32 %v1410, %v1911
        %v1913 = vpop.f32.mrb[0].mxu0
        %v1914 = vadd.f32 %v1414, %v1913
        %v1915 = vpop.f32.mrb[0].mxu0
        %v1916 = vadd.f32 %v1410, %v1915
        %v1917 = vpop.f32.mrb[0].mxu0
        %v1918 = vadd.f32 %v1414, %v1917
        %1919 = vmatprep.mubr.bf16.mxu0 0
        %1920 = vmatmul.mubr.bf16.gmra.mrb[0].mxu0 %v1337
        %v1921 = vpop.f32.mrb[0].mxu0
        %v1922 = vadd.f32 %v1410, %v1921
        %v1923 = vpop.f32.mrb[0].mxu0
        %v1924 = vadd.f32 %v1414, %v1923
        %v1925 = vpop.f32.mrb[0].mxu0
        %v1926 = vadd.f32 %v1410, %v1925
        %v1927 = vpop.f32.mrb[0].mxu0
        %v1928 = vadd.f32 %v1414, %v1927
        %1929 = vmatprep.mubr.bf16.mxu0 0
        %1930 = vmatmul.mubr.bf16.gmra.mrb[0].mxu0 %v1338
        %v1931 = vpop.f32.mrb[0].mxu0
        %v1932 = vadd.f32 %v1410, %v1931
        %v1933 = vpop.f32.mrb[0].mxu0
        %v1934 = vadd.f32 %v1414, %v1933
        %v1935 = vpop.f32.mrb[0].mxu0
        %v1936 = vadd.f32 %v1410, %v1935
        %v1937 = vpop.f32.mrb[0].mxu0
        %v1938 = vadd.f32 %v1414, %v1937
        %1939 = vmatprep.mubr.bf16.mxu0 0
        %1940 = vmatmul.mubr.bf16.gmra.mrb[0].mxu0 %v1339
        %v1941 = vpop.f32.mrb[0].mxu0
        %v1942 = vadd.f32 %v1410, %v1941
        %v1943 = vpop.f32.mrb[0].mxu0
        %v1944 = vadd.f32 %v1414, %v1943
        %v1945 = vpop.f32.mrb[0].mxu0
        %v1946 = vadd.f32 %v1410, %v1945
        %v1947 = vpop.f32.mrb[0].mxu0
        %v1948 = vadd.f32 %v1414, %v1947
        %1949 = vmatprep.mubr.bf16.mxu0 0
        %1950 = vmatmul.mubr.bf16.gmra.mrb[0].mxu0 %v1340
        %v1951 = vpop.f32.mrb[0].mxu0
        %v1952 = vadd.f32 %v1410, %v1951
        %v1953 = vpop.f32.mrb[0].mxu0
        %v1954 = vadd.f32 %v1414, %v1953
        %v1955 = vpop.f32.mrb[0].mxu0
        %v1956 = vadd.f32 %v1410, %v1955
        %v1957 = vpop.f32.mrb[0].mxu0
        %v1958 = vadd.f32 %v1414, %v1957
        %1959 = vdwg.mxu0
        %1960 = vmatprep.subr.bf16.mxu0 %v1642
        %1961 = vmatpush1.bf16.msra.mxu0 %v1641
        %1962 = vmatprep.subr.bf16.mxu0 %v1650
        %1963 = vmatpush1.bf16.msra.mxu0 %v1649
        %1964 = vmatprep.subr.bf16.mxu0 %v1658
        %1965 = vmatpush1.bf16.msra.mxu0 %v1657
        %1966 = vmatprep.subr.bf16.mxu0 %v1666
        %1967 = vmatpush1.bf16.msra.mxu0 %v1665
        %1968 = vmatprep.subr.bf16.mxu0 %v1674
        %1969 = vmatpush1.bf16.msra.mxu0 %v1673
        %1970 = vmatprep.subr.bf16.mxu0 %v1682
        %1971 = vmatpush1.bf16.msra.mxu0 %v1681
        %1972 = vmatprep.subr.bf16.mxu0 %v1690
        %1973 = vmatpush1.bf16.msra.mxu0 %v1689
        %1974 = vmatprep.subr.bf16.mxu0 %v1698
        %1975 = vmatpush1.bf16.msra.mxu0 %v1697
        %1976 = vmatprep.subr.bf16.mxu0 0
        %1977 = vmatpush1.bf16.msra.mxu0 0
        %1978 = vmatprep.subr.bf16.mxu0 0
        %1979 = vmatpush1.bf16.msra.mxu0 0
        %1980 = vmatprep.subr.bf16.mxu0 0
        %1981 = vmatpush1.bf16.msra.mxu0 0
        %1982 = vmatprep.subr.bf16.mxu0 0
        %1983 = vmatpush1.bf16.msra.mxu0 0
        %1984 = vmatprep.subr.bf16.mxu0 0
        %1985 = vmatpush1.bf16.msra.mxu0 0
        %1986 = vmatprep.subr.bf16.mxu0 0
        %1987 = vmatpush1.bf16.msra.mxu0 0
        %1988 = vmatprep.subr.bf16.mxu0 0
        %1989 = vmatpush1.bf16.msra.mxu0 0
        %1990 = vmatprep.subr.bf16.mxu0 0
        %1991 = vmatpush1.bf16.msra.mxu0 0
        %1992 = vmatprep.mubr.bf16.mxu0 0
        %1993 = vmatmul.mubr.bf16.gmra.mrb[0].mxu0 %v1325
        %v1994 = vpop.f32.mrb[0].mxu0
        %v1995 = vadd.f32 %v1418, %v1994
        %v1996 = vpop.f32.mrb[0].mxu0
        %v1997 = vadd.f32 %v1422, %v1996
        %v1998 = vpop.f32.mrb[0].mxu0
        %v1999 = vadd.f32 %v1418, %v1998
        %v2000 = vpop.f32.mrb[0].mxu0
        %v2001 = vadd.f32 %v1422, %v2000
        %2002 = vmatprep.mubr.bf16.mxu0 0
        %2003 = vmatmul.mubr.bf16.gmra.mrb[0].mxu0 %v1326
        %v2004 = vpop.f32.mrb[0].mxu0
        %v2005 = vadd.f32 %v1418, %v2004
        %v2006 = vpop.f32.mrb[0].mxu0
        %v2007 = vadd.f32 %v1422, %v2006
        %v2008 = vpop.f32.mrb[0].mxu0
        %v2009 = vadd.f32 %v1418, %v2008
        %v2010 = vpop.f32.mrb[0].mxu0
        %v2011 = vadd.f32 %v1422, %v2010
        %2012 = vmatprep.mubr.bf16.mxu0 0
        %2013 = vmatmul.mubr.bf16.gmra.mrb[0].mxu0 %v1327
        %v2014 = vpop.f32.mrb[0].mxu0
        %v2015 = vadd.f32 %v1418, %v2014
        %v2016 = vpop.f32.mrb[0].mxu0
        %v2017 = vadd.f32 %v1422, %v2016
        %v2018 = vpop.f32.mrb[0].mxu0
        %v2019 = vadd.f32 %v1418, %v2018
        %v2020 = vpop.f32.mrb[0].mxu0
        %v2021 = vadd.f32 %v1422, %v2020
        %2022 = vmatprep.mubr.bf16.mxu0 0
        %2023 = vmatmul.mubr.bf16.gmra.mrb[0].mxu0 %v1328
        %v2024 = vpop.f32.mrb[0].mxu0
        %v2025 = vadd.f32 %v1418, %v2024
        %v2026 = vpop.f32.mrb[0].mxu0
        %v2027 = vadd.f32 %v1422, %v2026
        %v2028 = vpop.f32.mrb[0].mxu0
        %v2029 = vadd.f32 %v1418, %v2028
        %v2030 = vpop.f32.mrb[0].mxu0
        %v2031 = vadd.f32 %v1422, %v2030
        %2032 = vmatprep.mubr.bf16.mxu0 0
        %2033 = vmatmul.mubr.bf16.gmra.mrb[0].mxu0 %v1329
        %v2034 = vpop.f32.mrb[0].mxu0
        %v2035 = vadd.f32 %v1418, %v2034
        %v2036 = vpop.f32.mrb[0].mxu0
        %v2037 = vadd.f32 %v1422, %v2036
        %v2038 = vpop.f32.mrb[0].mxu0
        %v2039 = vadd.f32 %v1418, %v2038
        %v2040 = vpop.f32.mrb[0].mxu0
        %v2041 = vadd.f32 %v1422, %v2040
        %2042 = vmatprep.mubr.bf16.mxu0 0
        %2043 = vmatmul.mubr.bf16.gmra.mrb[0].mxu0 %v1330
        %v2044 = vpop.f32.mrb[0].mxu0
        %v2045 = vadd.f32 %v1418, %v2044
        %v2046 = vpop.f32.mrb[0].mxu0
        %v2047 = vadd.f32 %v1422, %v2046
        %v2048 = vpop.f32.mrb[0].mxu0
        %v2049 = vadd.f32 %v1418, %v2048
        %v2050 = vpop.f32.mrb[0].mxu0
        %v2051 = vadd.f32 %v1422, %v2050
        %2052 = vmatprep.mubr.bf16.mxu0 0
        %2053 = vmatmul.mubr.bf16.gmra.mrb[0].mxu0 %v1331
        %v2054 = vpop.f32.mrb[0].mxu0
        %v2055 = vadd.f32 %v1418, %v2054
        %v2056 = vpop.f32.mrb[0].mxu0
        %v2057 = vadd.f32 %v1422, %v2056
        %v2058 = vpop.f32.mrb[0].mxu0
        %v2059 = vadd.f32 %v1418, %v2058
        %v2060 = vpop.f32.mrb[0].mxu0
        %v2061 = vadd.f32 %v1422, %v2060
        %2062 = vmatprep.mubr.bf16.mxu0 0
        %2063 = vmatmul.mubr.bf16.gmra.mrb[0].mxu0 %v1332
        %v2064 = vpop.f32.mrb[0].mxu0
        %v2065 = vadd.f32 %v1418, %v2064
        %v2066 = vpop.f32.mrb[0].mxu0
        %v2067 = vadd.f32 %v1422, %v2066
        %v2068 = vpop.f32.mrb[0].mxu0
        %v2069 = vadd.f32 %v1418, %v2068
        %v2070 = vpop.f32.mrb[0].mxu0
        %v2071 = vadd.f32 %v1422, %v2070
        %2072 = vmatprep.mubr.bf16.mxu0 0
        %2073 = vmatmul.mubr.bf16.gmra.mrb[0].mxu0 %v1333
        %v2074 = vpop.f32.mrb[0].mxu0
        %v2075 = vadd.f32 %v1418, %v2074
        %v2076 = vpop.f32.mrb[0].mxu0
        %v2077 = vadd.f32 %v1422, %v2076
        %v2078 = vpop.f32.mrb[0].mxu0
        %v2079 = vadd.f32 %v1418, %v2078
        %v2080 = vpop.f32.mrb[0].mxu0
        %v2081 = vadd.f32 %v1422, %v2080
        %2082 = vmatprep.mubr.bf16.mxu0 0
        %2083 = vmatmul.mubr.bf16.gmra.mrb[0].mxu0 %v1334
        %v2084 = vpop.f32.mrb[0].mxu0
        %v2085 = vadd.f32 %v1418, %v2084
        %v2086 = vpop.f32.mrb[0].mxu0
        %v2087 = vadd.f32 %v1422, %v2086
        %v2088 = vpop.f32.mrb[0].mxu0
        %v2089 = vadd.f32 %v1418, %v2088
        %v2090 = vpop.f32.mrb[0].mxu0
        %v2091 = vadd.f32 %v1422, %v2090
        %2092 = vmatprep.mubr.bf16.mxu0 0
        %2093 = vmatmul.mubr.bf16.gmra.mrb[0].mxu0 %v1335
        %v2094 = vpop.f32.mrb[0].mxu0
        %v2095 = vadd.f32 %v1418, %v2094
        %v2096 = vpop.f32.mrb[0].mxu0
        %v2097 = vadd.f32 %v1422, %v2096
        %v2098 = vpop.f32.mrb[0].mxu0
        %v2099 = vadd.f32 %v1418, %v2098
        %v2100 = vpop.f32.mrb[0].mxu0
        %v2101 = vadd.f32 %v1422, %v2100
        %2102 = vmatprep.mubr.bf16.mxu0 0
        %2103 = vmatmul.mubr.bf16.gmra.mrb[0].mxu0 %v1336
        %v2104 = vpop.f32.mrb[0].mxu0
        %v2105 = vadd.f32 %v1418, %v2104
        %v2106 = vpop.f32.mrb[0].mxu0
        %v2107 = vadd.f32 %v1422, %v2106
        %v2108 = vpop.f32.mrb[0].mxu0
        %v2109 = vadd.f32 %v1418, %v2108
        %v2110 = vpop.f32.mrb[0].mxu0
        %v2111 = vadd.f32 %v1422, %v2110
        %2112 = vmatprep.mubr.bf16.mxu0 0
        %2113 = vmatmul.mubr.bf16.gmra.mrb[0].mxu0 %v1337
        %v2114 = vpop.f32.mrb[0].mxu0
        %v2115 = vadd.f32 %v1418, %v2114
        %v2116 = vpop.f32.mrb[0].mxu0
        %v2117 = vadd.f32 %v1422, %v2116
        %v2118 = vpop.f32.mrb[0].mxu0
        %v2119 = vadd.f32 %v1418, %v2118
        %v2120 = vpop.f32.mrb[0].mxu0
        %v2121 = vadd.f32 %v1422, %v2120
        %2122 = vmatprep.mubr.bf16.mxu0 0
        %2123 = vmatmul.mubr.bf16.gmra.mrb[0].mxu0 %v1338
        %v2124 = vpop.f32.mrb[0].mxu0
        %v2125 = vadd.f32 %v1418, %v2124
        %v2126 = vpop.f32.mrb[0].mxu0
        %v2127 = vadd.f32 %v1422, %v2126
        %v2128 = vpop.f32.mrb[0].mxu0
        %v2129 = vadd.f32 %v1418, %v2128
        %v2130 = vpop.f32.mrb[0].mxu0
        %v2131 = vadd.f32 %v1422, %v2130
        %2132 = vmatprep.mubr.bf16.mxu0 0
        %2133 = vmatmul.mubr.bf16.gmra.mrb[0].mxu0 %v1339
        %v2134 = vpop.f32.mrb[0].mxu0
        %v2135 = vadd.f32 %v1418, %v2134
        %v2136 = vpop.f32.mrb[0].mxu0
        %v2137 = vadd.f32 %v1422, %v2136
        %v2138 = vpop.f32.mrb[0].mxu0
        %v2139 = vadd.f32 %v1418, %v2138
        %v2140 = vpop.f32.mrb[0].mxu0
        %v2141 = vadd.f32 %v1422, %v2140
        %2142 = vmatprep.mubr.bf16.mxu0 0
        %2143 = vmatmul.mubr.bf16.gmra.mrb[0].mxu0 %v1340
        %v2144 = vpop.f32.mrb[0].mxu0
        %v2145 = vadd.f32 %v1418, %v2144
        %v2146 = vpop.f32.mrb[0].mxu0
        %v2147 = vadd.f32 %v1422, %v2146
        %v2148 = vpop.f32.mrb[0].mxu0
        %v2149 = vadd.f32 %v1418, %v2148
        %v2150 = vpop.f32.mrb[0].mxu0
        %v2151 = vadd.f32 %v1422, %v2150
        %2152 = vdwg.mxu0
        %2153 = vmatprep.subr.bf16.mxu0 %v1644
        %2154 = vmatpush1.bf16.msra.mxu0 %v1643
        %2155 = vmatprep.subr.bf16.mxu0 %v1652
        %2156 = vmatpush1.bf16.msra.mxu0 %v1651
        %2157 = vmatprep.subr.bf16.mxu0 %v1660
        %2158 = vmatpush1.bf16.msra.mxu0 %v1659
        %2159 = vmatprep.subr.bf16.mxu0 %v1668
        %2160 = vmatpush1.bf16.msra.mxu0 %v1667
        %2161 = vmatprep.subr.bf16.mxu0 %v1676
        %2162 = vmatpush1.bf16.msra.mxu0 %v1675
        %2163 = vmatprep.subr.bf16.mxu0 %v1684
        %2164 = vmatpush1.bf16.msra.mxu0 %v1683
        %2165 = vmatprep.subr.bf16.mxu0 %v1692
        %2166 = vmatpush1.bf16.msra.mxu0 %v1691
        %2167 = vmatprep.subr.bf16.mxu0 %v1700
        %2168 = vmatpush1.bf16.msra.mxu0 %v1699
        %2169 = vmatprep.subr.bf16.mxu0 0
        %2170 = vmatpush1.bf16.msra.mxu0 0
        %2171 = vmatprep.subr.bf16.mxu0 0
        %2172 = vmatpush1.bf16.msra.mxu0 0
        %2173 = vmatprep.subr.bf16.mxu0 0
        %2174 = vmatpush1.bf16.msra.mxu0 0
        %2175 = vmatprep.subr.bf16.mxu0 0
        %2176 = vmatpush1.bf16.msra.mxu0 0
        %2177 = vmatprep.subr.bf16.mxu0 0
        %2178 = vmatpush1.bf16.msra.mxu0 0
        %2179 = vmatprep.subr.bf16.mxu0 0
        %2180 = vmatpush1.bf16.msra.mxu0 0
        %2181 = vmatprep.subr.bf16.mxu0 0
        %2182 = vmatpush1.bf16.msra.mxu0 0
        %2183 = vmatprep.subr.bf16.mxu0 0
        %2184 = vmatpush1.bf16.msra.mxu0 0
        %2185 = vmatprep.mubr.bf16.mxu0 0
        %2186 = vmatmul.mubr.bf16.gmra.mrb[0].mxu0 %v1325
        %v2187 = vpop.f32.mrb[0].mxu0
        %v2188 = vadd.f32 %v1426, %v2187
        %v2189 = vpop.f32.mrb[0].mxu0
        %v2190 = vadd.f32 %v1430, %v2189
        %v2191 = vpop.f32.mrb[0].mxu0
        %v2192 = vadd.f32 %v1426, %v2191
        %v2193 = vpop.f32.mrb[0].mxu0
        %v2194 = vadd.f32 %v1430, %v2193
        %2195 = vmatprep.mubr.bf16.mxu0 0
        %2196 = vmatmul.mubr.bf16.gmra.mrb[0].mxu0 %v1326
        %v2197 = vpop.f32.mrb[0].mxu0
        %v2198 = vadd.f32 %v1426, %v2197
        %v2199 = vpop.f32.mrb[0].mxu0
        %v2200 = vadd.f32 %v1430, %v2199
        %v2201 = vpop.f32.mrb[0].mxu0
        %v2202 = vadd.f32 %v1426, %v2201
        %v2203 = vpop.f32.mrb[0].mxu0
        %v2204 = vadd.f32 %v1430, %v2203
        %2205 = vmatprep.mubr.bf16.mxu0 0
        %2206 = vmatmul.mubr.bf16.gmra.mrb[0].mxu0 %v1327
        %v2207 = vpop.f32.mrb[0].mxu0
        %v2208 = vadd.f32 %v1426, %v2207
        %v2209 = vpop.f32.mrb[0].mxu0
        %v2210 = vadd.f32 %v1430, %v2209
        %v2211 = vpop.f32.mrb[0].mxu0
        %v2212 = vadd.f32 %v1426, %v2211
        %v2213 = vpop.f32.mrb[0].mxu0
        %v2214 = vadd.f32 %v1430, %v2213
        %2215 = vmatprep.mubr.bf16.mxu0 0
        %2216 = vmatmul.mubr.bf16.gmra.mrb[0].mxu0 %v1328
        %v2217 = vpop.f32.mrb[0].mxu0
        %v2218 = vadd.f32 %v1426, %v2217
        %v2219 = vpop.f32.mrb[0].mxu0
        %v2220 = vadd.f32 %v1430, %v2219
        %v2221 = vpop.f32.mrb[0].mxu0
        %v2222 = vadd.f32 %v1426, %v2221
        %v2223 = vpop.f32.mrb[0].mxu0
        %v2224 = vadd.f32 %v1430, %v2223
        %2225 = vmatprep.mubr.bf16.mxu0 0
        %2226 = vmatmul.mubr.bf16.gmra.mrb[0].mxu0 %v1329
        %v2227 = vpop.f32.mrb[0].mxu0
        %v2228 = vadd.f32 %v1426, %v2227
        %v2229 = vpop.f32.mrb[0].mxu0
        %v2230 = vadd.f32 %v1430, %v2229
        %v2231 = vpop.f32.mrb[0].mxu0
        %v2232 = vadd.f32 %v1426, %v2231
        %v2233 = vpop.f32.mrb[0].mxu0
        %v2234 = vadd.f32 %v1430, %v2233
        %2235 = vmatprep.mubr.bf16.mxu0 0
        %2236 = vmatmul.mubr.bf16.gmra.mrb[0].mxu0 %v1330
        %v2237 = vpop.f32.mrb[0].mxu0
        %v2238 = vadd.f32 %v1426, %v2237
        %v2239 = vpop.f32.mrb[0].mxu0
        %v2240 = vadd.f32 %v1430, %v2239
        %v2241 = vpop.f32.mrb[0].mxu0
        %v2242 = vadd.f32 %v1426, %v2241
        %v2243 = vpop.f32.mrb[0].mxu0
        %v2244 = vadd.f32 %v1430, %v2243
        %2245 = vmatprep.mubr.bf16.mxu0 0
        %2246 = vmatmul.mubr.bf16.gmra.mrb[0].mxu0 %v1331
        %v2247 = vpop.f32.mrb[0].mxu0
        %v2248 = vadd.f32 %v1426, %v2247
        %v2249 = vpop.f32.mrb[0].mxu0
        %v2250 = vadd.f32 %v1430, %v2249
        %v2251 = vpop.f32.mrb[0].mxu0
        %v2252 = vadd.f32 %v1426, %v2251
        %v2253 = vpop.f32.mrb[0].mxu0
        %v2254 = vadd.f32 %v1430, %v2253
        %2255 = vmatprep.mubr.bf16.mxu0 0
        %2256 = vmatmul.mubr.bf16.gmra.mrb[0].mxu0 %v1332
        %v2257 = vpop.f32.mrb[0].mxu0
        %v2258 = vadd.f32 %v1426, %v2257
        %v2259 = vpop.f32.mrb[0].mxu0
        %v2260 = vadd.f32 %v1430, %v2259
        %v2261 = vpop.f32.mrb[0].mxu0
        %v2262 = vadd.f32 %v1426, %v2261
        %v2263 = vpop.f32.mrb[0].mxu0
        %v2264 = vadd.f32 %v1430, %v2263
        %2265 = vmatprep.mubr.bf16.mxu0 0
        %2266 = vmatmul.mubr.bf16.gmra.mrb[0].mxu0 %v1333
        %v2267 = vpop.f32.mrb[0].mxu0
        %v2268 = vadd.f32 %v1426, %v2267
        %v2269 = vpop.f32.mrb[0].mxu0
        %v2270 = vadd.f32 %v1430, %v2269
        %v2271 = vpop.f32.mrb[0].mxu0
        %v2272 = vadd.f32 %v1426, %v2271
        %v2273 = vpop.f32.mrb[0].mxu0
        %v2274 = vadd.f32 %v1430, %v2273
        %2275 = vmatprep.mubr.bf16.mxu0 0
        %2276 = vmatmul.mubr.bf16.gmra.mrb[0].mxu0 %v1334
        %v2277 = vpop.f32.mrb[0].mxu0
        %v2278 = vadd.f32 %v1426, %v2277
        %v2279 = vpop.f32.mrb[0].mxu0
        %v2280 = vadd.f32 %v1430, %v2279
        %v2281 = vpop.f32.mrb[0].mxu0
        %v2282 = vadd.f32 %v1426, %v2281
        %v2283 = vpop.f32.mrb[0].mxu0
        %v2284 = vadd.f32 %v1430, %v2283
        %2285 = vmatprep.mubr.bf16.mxu0 0
        %2286 = vmatmul.mubr.bf16.gmra.mrb[0].mxu0 %v1335
        %v2287 = vpop.f32.mrb[0].mxu0
        %v2288 = vadd.f32 %v1426, %v2287
        %v2289 = vpop.f32.mrb[0].mxu0
        %v2290 = vadd.f32 %v1430, %v2289
        %v2291 = vpop.f32.mrb[0].mxu0
        %v2292 = vadd.f32 %v1426, %v2291
        %v2293 = vpop.f32.mrb[0].mxu0
        %v2294 = vadd.f32 %v1430, %v2293
        %2295 = vmatprep.mubr.bf16.mxu0 0
        %2296 = vmatmul.mubr.bf16.gmra.mrb[0].mxu0 %v1336
        %v2297 = vpop.f32.mrb[0].mxu0
        %v2298 = vadd.f32 %v1426, %v2297
        %v2299 = vpop.f32.mrb[0].mxu0
        %v2300 = vadd.f32 %v1430, %v2299
        %v2301 = vpop.f32.mrb[0].mxu0
        %v2302 = vadd.f32 %v1426, %v2301
        %v2303 = vpop.f32.mrb[0].mxu0
        %v2304 = vadd.f32 %v1430, %v2303
        %2305 = vmatprep.mubr.bf16.mxu0 0
        %2306 = vmatmul.mubr.bf16.gmra.mrb[0].mxu0 %v1337
        %v2307 = vpop.f32.mrb[0].mxu0
        %v2308 = vadd.f32 %v1426, %v2307
        %v2309 = vpop.f32.mrb[0].mxu0
        %v2310 = vadd.f32 %v1430, %v2309
        %v2311 = vpop.f32.mrb[0].mxu0
        %v2312 = vadd.f32 %v1426, %v2311
        %v2313 = vpop.f32.mrb[0].mxu0
        %v2314 = vadd.f32 %v1430, %v2313
        %2315 = vmatprep.mubr.bf16.mxu0 0
        %2316 = vmatmul.mubr.bf16.gmra.mrb[0].mxu0 %v1338
        %v2317 = vpop.f32.mrb[0].mxu0
        %v2318 = vadd.f32 %v1426, %v2317
        %v2319 = vpop.f32.mrb[0].mxu0
        %v2320 = vadd.f32 %v1430, %v2319
        %v2321 = vpop.f32.mrb[0].mxu0
        %v2322 = vadd.f32 %v1426, %v2321
        %v2323 = vpop.f32.mrb[0].mxu0
        %v2324 = vadd.f32 %v1430, %v2323
        %2325 = vmatprep.mubr.bf16.mxu0 0
        %2326 = vmatmul.mubr.bf16.gmra.mrb[0].mxu0 %v1339
        %v2327 = vpop.f32.mrb[0].mxu0
        %v2328 = vadd.f32 %v1426, %v2327
        %v2329 = vpop.f32.mrb[0].mxu0
        %v2330 = vadd.f32 %v1430, %v2329
        %v2331 = vpop.f32.mrb[0].mxu0
        %v2332 = vadd.f32 %v1426, %v2331
        %v2333 = vpop.f32.mrb[0].mxu0
        %v2334 = vadd.f32 %v1430, %v2333
        %2335 = vmatprep.mubr.bf16.mxu0 0
        %2336 = vmatmul.mubr.bf16.gmra.mrb[0].mxu0 %v1340
        %v2337 = vpop.f32.mrb[0].mxu0
        %v2338 = vadd.f32 %v1426, %v2337
        %v2339 = vpop.f32.mrb[0].mxu0
        %v2340 = vadd.f32 %v1430, %v2339
        %v2341 = vpop.f32.mrb[0].mxu0
        %v2342 = vadd.f32 %v1426, %v2341
        %v2343 = vpop.f32.mrb[0].mxu0
        %v2344 = vadd.f32 %v1430, %v2343
        %2345 = vdwg.mxu0
        %2346 = vmatprep.subr.bf16.mxu0 %v1646
        %2347 = vmatpush1.bf16.msra.mxu0 %v1645
        %2348 = vmatprep.subr.bf16.mxu0 %v1654
        %2349 = vmatpush1.bf16.msra.mxu0 %v1653
        %2350 = vmatprep.subr.bf16.mxu0 %v1662
        %2351 = vmatpush1.bf16.msra.mxu0 %v1661
        %2352 = vmatprep.subr.bf16.mxu0 %v1670
        %2353 = vmatpush1.bf16.msra.mxu0 %v1669
        %2354 = vmatprep.subr.bf16.mxu0 %v1678
        %2355 = vmatpush1.bf16.msra.mxu0 %v1677
        %2356 = vmatprep.subr.bf16.mxu0 %v1686
        %2357 = vmatpush1.bf16.msra.mxu0 %v1685
        %2358 = vmatprep.subr.bf16.mxu0 %v1694
        %2359 = vmatpush1.bf16.msra.mxu0 %v1693
        %2360 = vmatprep.subr.bf16.mxu0 %v1702
        %2361 = vmatpush1.bf16.msra.mxu0 %v1701
        %2362 = vmatprep.subr.bf16.mxu0 0
        %2363 = vmatpush1.bf16.msra.mxu0 0
        %2364 = vmatprep.subr.bf16.mxu0 0
        %2365 = vmatpush1.bf16.msra.mxu0 0
        %2366 = vmatprep.subr.bf16.mxu0 0
        %2367 = vmatpush1.bf16.msra.mxu0 0
        %2368 = vmatprep.subr.bf16.mxu0 0
        %2369 = vmatpush1.bf16.msra.mxu0 0
        %2370 = vmatprep.subr.bf16.mxu0 0
        %2371 = vmatpush1.bf16.msra.mxu0 0
        %2372 = vmatprep.subr.bf16.mxu0 0
        %2373 = vmatpush1.bf16.msra.mxu0 0
        %2374 = vmatprep.subr.bf16.mxu0 0
        %2375 = vmatpush1.bf16.msra.mxu0 0
        %2376 = vmatprep.subr.bf16.mxu0 0
        %2377 = vmatpush1.bf16.msra.mxu0 0
        %2378 = vmatprep.mubr.bf16.mxu0 0
        %2379 = vmatmul.mubr.bf16.gmra.mrb[0].mxu0 %v1325
        %v2380 = vpop.f32.mrb[0].mxu0
        %v2381 = vadd.f32 %v1434, %v2380
        %v2382 = vpop.f32.mrb[0].mxu0
        %v2383 = vadd.f32 %v1438, %v2382
        %v2384 = vpop.f32.mrb[0].mxu0
        %v2385 = vadd.f32 %v1434, %v2384
        %v2386 = vpop.f32.mrb[0].mxu0
        %v2387 = vadd.f32 %v1438, %v2386
        %2388 = vmatprep.mubr.bf16.mxu0 0
        %2389 = vmatmul.mubr.bf16.gmra.mrb[0].mxu0 %v1326
        %v2390 = vpop.f32.mrb[0].mxu0
        %v2391 = vadd.f32 %v1434, %v2390
        %v2392 = vpop.f32.mrb[0].mxu0
        %v2393 = vadd.f32 %v1438, %v2392
        %v2394 = vpop.f32.mrb[0].mxu0
        %v2395 = vadd.f32 %v1434, %v2394
        %v2396 = vpop.f32.mrb[0].mxu0
        %v2397 = vadd.f32 %v1438, %v2396
        %2398 = vmatprep.mubr.bf16.mxu0 0
        %2399 = vmatmul.mubr.bf16.gmra.mrb[0].mxu0 %v1327
        %v2400 = vpop.f32.mrb[0].mxu0
        %v2401 = vadd.f32 %v1434, %v2400
        %v2402 = vpop.f32.mrb[0].mxu0
        %v2403 = vadd.f32 %v1438, %v2402
        %v2404 = vpop.f32.mrb[0].mxu0
        %v2405 = vadd.f32 %v1434, %v2404
        %v2406 = vpop.f32.mrb[0].mxu0
        %v2407 = vadd.f32 %v1438, %v2406
        %2408 = vmatprep.mubr.bf16.mxu0 0
        %2409 = vmatmul.mubr.bf16.gmra.mrb[0].mxu0 %v1328
        %v2410 = vpop.f32.mrb[0].mxu0
        %v2411 = vadd.f32 %v1434, %v2410
        %v2412 = vpop.f32.mrb[0].mxu0
        %v2413 = vadd.f32 %v1438, %v2412
        %v2414 = vpop.f32.mrb[0].mxu0
        %v2415 = vadd.f32 %v1434, %v2414
        %v2416 = vpop.f32.mrb[0].mxu0
        %v2417 = vadd.f32 %v1438, %v2416
        %2418 = vmatprep.mubr.bf16.mxu0 0
        %2419 = vmatmul.mubr.bf16.gmra.mrb[0].mxu0 %v1329
        %v2420 = vpop.f32.mrb[0].mxu0
        %v2421 = vadd.f32 %v1434, %v2420
        %v2422 = vpop.f32.mrb[0].mxu0
        %v2423 = vadd.f32 %v1438, %v2422
        %v2424 = vpop.f32.mrb[0].mxu0
        %v2425 = vadd.f32 %v1434, %v2424
        %v2426 = vpop.f32.mrb[0].mxu0
        %v2427 = vadd.f32 %v1438, %v2426
        %2428 = vmatprep.mubr.bf16.mxu0 0
        %2429 = vmatmul.mubr.bf16.gmra.mrb[0].mxu0 %v1330
        %v2430 = vpop.f32.mrb[0].mxu0
        %v2431 = vadd.f32 %v1434, %v2430
        %v2432 = vpop.f32.mrb[0].mxu0
        %v2433 = vadd.f32 %v1438, %v2432
        %v2434 = vpop.f32.mrb[0].mxu0
        %v2435 = vadd.f32 %v1434, %v2434
        %v2436 = vpop.f32.mrb[0].mxu0
        %v2437 = vadd.f32 %v1438, %v2436
        %2438 = vmatprep.mubr.bf16.mxu0 0
        %2439 = vmatmul.mubr.bf16.gmra.mrb[0].mxu0 %v1331
        %v2440 = vpop.f32.mrb[0].mxu0
        %v2441 = vadd.f32 %v1434, %v2440
        %v2442 = vpop.f32.mrb[0].mxu0
        %v2443 = vadd.f32 %v1438, %v2442
        %v2444 = vpop.f32.mrb[0].mxu0
        %v2445 = vadd.f32 %v1434, %v2444
        %v2446 = vpop.f32.mrb[0].mxu0
        %v2447 = vadd.f32 %v1438, %v2446
        %2448 = vmatprep.mubr.bf16.mxu0 0
        %2449 = vmatmul.mubr.bf16.gmra.mrb[0].mxu0 %v1332
        %v2450 = vpop.f32.mrb[0].mxu0
        %v2451 = vadd.f32 %v1434, %v2450
        %v2452 = vpop.f32.mrb[0].mxu0
        %v2453 = vadd.f32 %v1438, %v2452
        %v2454 = vpop.f32.mrb[0].mxu0
        %v2455 = vadd.f32 %v1434, %v2454
        %v2456 = vpop.f32.mrb[0].mxu0
        %v2457 = vadd.f32 %v1438, %v2456
        %2458 = vmatprep.mubr.bf16.mxu0 0
        %2459 = vmatmul.mubr.bf16.gmra.mrb[0].mxu0 %v1333
        %v2460 = vpop.f32.mrb[0].mxu0
        %v2461 = vadd.f32 %v1434, %v2460
        %v2462 = vpop.f32.mrb[0].mxu0
        %v2463 = vadd.f32 %v1438, %v2462
        %v2464 = vpop.f32.mrb[0].mxu0
        %v2465 = vadd.f32 %v1434, %v2464
        %v2466 = vpop.f32.mrb[0].mxu0
        %v2467 = vadd.f32 %v1438, %v2466
        %2468 = vmatprep.mubr.bf16.mxu0 0
        %2469 = vmatmul.mubr.bf16.gmra.mrb[0].mxu0 %v1334
        %v2470 = vpop.f32.mrb[0].mxu0
        %v2471 = vadd.f32 %v1434, %v2470
        %v2472 = vpop.f32.mrb[0].mxu0
        %v2473 = vadd.f32 %v1438, %v2472
        %v2474 = vpop.f32.mrb[0].mxu0
        %v2475 = vadd.f32 %v1434, %v2474
        %v2476 = vpop.f32.mrb[0].mxu0
        %v2477 = vadd.f32 %v1438, %v2476
        %2478 = vmatprep.mubr.bf16.mxu0 0
        %2479 = vmatmul.mubr.bf16.gmra.mrb[0].mxu0 %v1335
        %v2480 = vpop.f32.mrb[0].mxu0
        %v2481 = vadd.f32 %v1434, %v2480
        %v2482 = vpop.f32.mrb[0].mxu0
        %v2483 = vadd.f32 %v1438, %v2482
        %v2484 = vpop.f32.mrb[0].mxu0
        %v2485 = vadd.f32 %v1434, %v2484
        %v2486 = vpop.f32.mrb[0].mxu0
        %v2487 = vadd.f32 %v1438, %v2486
        %2488 = vmatprep.mubr.bf16.mxu0 0
        %2489 = vmatmul.mubr.bf16.gmra.mrb[0].mxu0 %v1336
        %v2490 = vpop.f32.mrb[0].mxu0
        %v2491 = vadd.f32 %v1434, %v2490
        %v2492 = vpop.f32.mrb[0].mxu0
        %v2493 = vadd.f32 %v1438, %v2492
        %v2494 = vpop.f32.mrb[0].mxu0
        %v2495 = vadd.f32 %v1434, %v2494
        %v2496 = vpop.f32.mrb[0].mxu0
        %v2497 = vadd.f32 %v1438, %v2496
        %2498 = vmatprep.mubr.bf16.mxu0 0
        %2499 = vmatmul.mubr.bf16.gmra.mrb[0].mxu0 %v1337
        %v2500 = vpop.f32.mrb[0].mxu0
        %v2501 = vadd.f32 %v1434, %v2500
        %v2502 = vpop.f32.mrb[0].mxu0
        %v2503 = vadd.f32 %v1438, %v2502
        %v2504 = vpop.f32.mrb[0].mxu0
        %v2505 = vadd.f32 %v1434, %v2504
        %v2506 = vpop.f32.mrb[0].mxu0
        %v2507 = vadd.f32 %v1438, %v2506
        %2508 = vmatprep.mubr.bf16.mxu0 0
        %2509 = vmatmul.mubr.bf16.gmra.mrb[0].mxu0 %v1338
        %v2510 = vpop.f32.mrb[0].mxu0
        %v2511 = vadd.f32 %v1434, %v2510
        %v2512 = vpop.f32.mrb[0].mxu0
        %v2513 = vadd.f32 %v1438, %v2512
        %v2514 = vpop.f32.mrb[0].mxu0
        %v2515 = vadd.f32 %v1434, %v2514
        %v2516 = vpop.f32.mrb[0].mxu0
        %v2517 = vadd.f32 %v1438, %v2516
        %2518 = vmatprep.mubr.bf16.mxu0 0
        %2519 = vmatmul.mubr.bf16.gmra.mrb[0].mxu0 %v1339
        %v2520 = vpop.f32.mrb[0].mxu0
        %v2521 = vadd.f32 %v1434, %v2520
        %v2522 = vpop.f32.mrb[0].mxu0
        %v2523 = vadd.f32 %v1438, %v2522
        %v2524 = vpop.f32.mrb[0].mxu0
        %v2525 = vadd.f32 %v1434, %v2524
        %v2526 = vpop.f32.mrb[0].mxu0
        %v2527 = vadd.f32 %v1438, %v2526
        %2528 = vmatprep.mubr.bf16.mxu0 0
        %2529 = vmatmul.mubr.bf16.gmra.mrb[0].mxu0 %v1340
        %v2530 = vpop.f32.mrb[0].mxu0
        %v2531 = vadd.f32 %v1434, %v2530
        %v2532 = vpop.f32.mrb[0].mxu0
        %v2533 = vadd.f32 %v1438, %v2532
        %v2534 = vpop.f32.mrb[0].mxu0
        %v2535 = vadd.f32 %v1434, %v2534
        %v2536 = vpop.f32.mrb[0].mxu0
        %v2537 = vadd.f32 %v1438, %v2536
        %2538 = vdwg.mxu0
        %s2539 = smul.u32 %s29, 128
        %s2540 = sld [smem:[#allocation3 + %s2539]]
        %s2541 = sadd.s32 %s2539, 1
        %s2542 = sld [smem:[#allocation3 + %s2541]]
        %v2543 = vld [vmem:[%s327] sm:$0xff]
        %v2544 = vld [vmem:[%s327 + $0x8] sm:$0xff]
        %v2545 = vld [vmem:[%s327 + $0x10] sm:$0xff]
        %v2546 = vld [vmem:[%s327 + $0x18] sm:$0xff]
        %v2547 = vld [vmem:[%s327 + $0x20] sm:$0xff]
        %v2548 = vld [vmem:[%s327 + $0x28] sm:$0xff]
        %v2549 = vld [vmem:[%s327 + $0x30] sm:$0xff]
        %v2550 = vld [vmem:[%s327 + $0x38] sm:$0xff]
        %v2551 = vld [vmem:[%s327 + $0x40] sm:$0xff]
        %v2552 = vld [vmem:[%s327 + $0x48] sm:$0xff]
        %v2553 = vld [vmem:[%s327 + $0x50] sm:$0xff]
        %v2554 = vld [vmem:[%s327 + $0x58] sm:$0xff]
        %v2555 = vld [vmem:[%s327 + $0x60] sm:$0xff]
        %v2556 = vld [vmem:[%s327 + $0x68] sm:$0xff]
        %v2557 = vld [vmem:[%s327 + $0x70] sm:$0xff]
        %v2558 = vld [vmem:[%s327 + $0x78] sm:$0xff]
        %v2559 = vld [vmem:[%s327 + $0x80] sm:$0xff]
        %v2560 = vld [vmem:[%s327 + $0x88] sm:$0xff]
        %v2561 = vld [vmem:[%s327 + $0x90] sm:$0xff]
        %v2562 = vld [vmem:[%s327 + $0x98] sm:$0xff]
        %v2563 = vld [vmem:[%s327 + $0xa0] sm:$0xff]
        %v2564 = vld [vmem:[%s327 + $0xa8] sm:$0xff]
        %v2565 = vld [vmem:[%s327 + $0xb0] sm:$0xff]
        %v2566 = vld [vmem:[%s327 + $0xb8] sm:$0xff]
        %v2567 = vld [vmem:[%s327 + $0xc0] sm:$0xff]
        %v2568 = vld [vmem:[%s327 + $0xc8] sm:$0xff]
        %v2569 = vld [vmem:[%s327 + $0xd0] sm:$0xff]
        %v2570 = vld [vmem:[%s327 + $0xd8] sm:$0xff]
        %v2571 = vld [vmem:[%s327 + $0xe0] sm:$0xff]
        %v2572 = vld [vmem:[%s327 + $0xe8] sm:$0xff]
        %v2573 = vld [vmem:[%s327 + $0xf0] sm:$0xff]
        %v2574 = vld [vmem:[%s327 + $0xf8] sm:$0xff]
        %v2575 = vlaneseq
        %v2576 = vshrl.u32 %v2575, 7
        %s2577 = sadd.s32 %s2542, 1
        // While loop
        $region53: #{tpu_custom_call.1} parent=51 // loop_pre_header
          _
        $region54: #{tpu_custom_call.1} parent=51 // loop_header
          %s2579 = sphi %s2540, %s2581
          %p2580 = scmp.ge.s32.totalorder %s2579, %s2577
          %v2584 = vphi -inf, %v3340
          %v2585 = vphi -inf, %v3341
          %v2586 = vphi -inf, %v3342
          %v2587 = vphi -inf, %v3343
          %v2588 = vphi -inf, %v3344
          %v2589 = vphi -inf, %v3345
          %v2590 = vphi -inf, %v3346
          %v2591 = vphi -inf, %v3347
        $region55: #{tpu_custom_call.1} parent=51 // loop_header_branch
          %2583 = sbr.rel (%p2580) target = $region59
        $region56: #{tpu_custom_call.1} parent=51 // loop_body
          %v2592 = vstv %s2579
          %vm2593 = vcmp.eq.s32.totalorder %v2543, %v2592
          %vm2594 = vcmp.eq.s32.totalorder %v2544, %v2592
          %vm2595 = vcmp.eq.s32.totalorder %v2545, %v2592
          %vm2596 = vcmp.eq.s32.totalorder %v2546, %v2592
          %vm2597 = vcmp.eq.s32.totalorder %v2547, %v2592
          %vm2598 = vcmp.eq.s32.totalorder %v2548, %v2592
          %vm2599 = vcmp.eq.s32.totalorder %v2549, %v2592
          %vm2600 = vcmp.eq.s32.totalorder %v2550, %v2592
          %vm2601 = vcmp.eq.s32.totalorder %v2551, %v2592
          %vm2602 = vcmp.eq.s32.totalorder %v2552, %v2592
          %vm2603 = vcmp.eq.s32.totalorder %v2553, %v2592
          %vm2604 = vcmp.eq.s32.totalorder %v2554, %v2592
          %vm2605 = vcmp.eq.s32.totalorder %v2555, %v2592
          %vm2606 = vcmp.eq.s32.totalorder %v2556, %v2592
          %vm2607 = vcmp.eq.s32.totalorder %v2557, %v2592
          %vm2608 = vcmp.eq.s32.totalorder %v2558, %v2592
          %vm2609 = vcmp.eq.s32.totalorder %v2559, %v2592
          %vm2610 = vcmp.eq.s32.totalorder %v2560, %v2592
          %vm2611 = vcmp.eq.s32.totalorder %v2561, %v2592
          %vm2612 = vcmp.eq.s32.totalorder %v2562, %v2592
          %vm2613 = vcmp.eq.s32.totalorder %v2563, %v2592
          %vm2614 = vcmp.eq.s32.totalorder %v2564, %v2592
          %vm2615 = vcmp.eq.s32.totalorder %v2565, %v2592
          %vm2616 = vcmp.eq.s32.totalorder %v2566, %v2592
          %vm2617 = vcmp.eq.s32.totalorder %v2567, %v2592
          %vm2618 = vcmp.eq.s32.totalorder %v2568, %v2592
          %vm2619 = vcmp.eq.s32.totalorder %v2569, %v2592
          %vm2620 = vcmp.eq.s32.totalorder %v2570, %v2592
          %vm2621 = vcmp.eq.s32.totalorder %v2571, %v2592
          %vm2622 = vcmp.eq.s32.totalorder %v2572, %v2592
          %vm2623 = vcmp.eq.s32.totalorder %v2573, %v2592
          %vm2624 = vcmp.eq.s32.totalorder %v2574, %v2592
          %v2625 = vsel %vm2593, 1, 0
          %v2626 = vsel %vm2594, 1, 0
          %v2627 = vsel %vm2595, 1, 0
          %v2628 = vsel %vm2596, 1, 0
          %v2629 = vsel %vm2597, 1, 0
          %v2630 = vsel %vm2598, 1, 0
          %v2631 = vsel %vm2599, 1, 0
          %v2632 = vsel %vm2600, 1, 0
          %v2633 = vsel %vm2601, 1, 0
          %v2634 = vsel %vm2602, 1, 0
          %v2635 = vsel %vm2603, 1, 0
          %v2636 = vsel %vm2604, 1, 0
          %v2637 = vsel %vm2605, 1, 0
          %v2638 = vsel %vm2606, 1, 0
          %v2639 = vsel %vm2607, 1, 0
          %v2640 = vsel %vm2608, 1, 0
          %v2641 = vsel %vm2609, 1, 0
          %v2642 = vsel %vm2610, 1, 0
          %v2643 = vsel %vm2611, 1, 0
          %v2644 = vsel %vm2612, 1, 0
          %v2645 = vsel %vm2613, 1, 0
          %v2646 = vsel %vm2614, 1, 0
          %v2647 = vsel %vm2615, 1, 0
          %v2648 = vsel %vm2616, 1, 0
          %v2649 = vsel %vm2617, 1, 0
          %v2650 = vsel %vm2618, 1, 0
          %v2651 = vsel %vm2619, 1, 0
          %v2652 = vsel %vm2620, 1, 0
          %v2653 = vsel %vm2621, 1, 0
          %v2654 = vsel %vm2622, 1, 0
          %v2655 = vsel %vm2623, 1, 0
          %v2656 = vsel %vm2624, 1, 0
          %2657 = vset.pattern.permute.xlu0 0
          %2658 = vperm.xlu0 %2657, %v2625
          %v2659 = vpop.permute.xlu0 %2658
          %2660 = vset.pattern.permute.xlu0 0
          %2661 = vperm.xlu0 %2660, %v2626
          %v2662 = vpop.permute.xlu0 %2661
          %2663 = vset.pattern.permute.xlu0 0
          %2664 = vperm.xlu0 %2663, %v2627
          %v2665 = vpop.permute.xlu0 %2664
          %2666 = vset.pattern.permute.xlu0 0
          %2667 = vperm.xlu0 %2666, %v2628
          %v2668 = vpop.permute.xlu0 %2667
          %2669 = vset.pattern.permute.xlu0 0
          %2670 = vperm.xlu0 %2669, %v2629
          %v2671 = vpop.permute.xlu0 %2670
          %2672 = vset.pattern.permute.xlu0 0
          %2673 = vperm.xlu0 %2672, %v2630
          %v2674 = vpop.permute.xlu0 %2673
          %2675 = vset.pattern.permute.xlu0 0
          %2676 = vperm.xlu0 %2675, %v2631
          %v2677 = vpop.permute.xlu0 %2676
          %2678 = vset.pattern.permute.xlu0 0
          %2679 = vperm.xlu0 %2678, %v2632
          %v2680 = vpop.permute.xlu0 %2679
          %2681 = vset.pattern.permute.xlu0 0
          %2682 = vperm.xlu0 %2681, %v2633
          %v2683 = vpop.permute.xlu0 %2682
          %2684 = vset.pattern.permute.xlu0 0
          %2685 = vperm.xlu0 %2684, %v2634
          %v2686 = vpop.permute.xlu0 %2685
          %2687 = vset.pattern.permute.xlu0 0
          %2688 = vperm.xlu0 %2687, %v2635
          %v2689 = vpop.permute.xlu0 %2688
          %2690 = vset.pattern.permute.xlu0 0
          %2691 = vperm.xlu0 %2690, %v2636
          %v2692 = vpop.permute.xlu0 %2691
          %2693 = vset.pattern.permute.xlu0 0
          %2694 = vperm.xlu0 %2693, %v2637
          %v2695 = vpop.permute.xlu0 %2694
          %2696 = vset.pattern.permute.xlu0 0
          %2697 = vperm.xlu0 %2696, %v2638
          %v2698 = vpop.permute.xlu0 %2697
          %2699 = vset.pattern.permute.xlu0 0
          %2700 = vperm.xlu0 %2699, %v2639
          %v2701 = vpop.permute.xlu0 %2700
          %2702 = vset.pattern.permute.xlu0 0
          %2703 = vperm.xlu0 %2702, %v2640
          %v2704 = vpop.permute.xlu0 %2703
          %2705 = vset.pattern.permute.xlu0 0
          %2706 = vperm.xlu0 %2705, %v2641
          %v2707 = vpop.permute.xlu0 %2706
          %2708 = vset.pattern.permute.xlu0 0
          %2709 = vperm.xlu0 %2708, %v2642
          %v2710 = vpop.permute.xlu0 %2709
          %2711 = vset.pattern.permute.xlu0 0
          %2712 = vperm.xlu0 %2711, %v2643
          %v2713 = vpop.permute.xlu0 %2712
          %2714 = vset.pattern.permute.xlu0 0
          %2715 = vperm.xlu0 %2714, %v2644
          %v2716 = vpop.permute.xlu0 %2715
          %2717 = vset.pattern.permute.xlu0 0
          %2718 = vperm.xlu0 %2717, %v2645
          %v2719 = vpop.permute.xlu0 %2718
          %2720 = vset.pattern.permute.xlu0 0
          %2721 = vperm.xlu0 %2720, %v2646
          %v2722 = vpop.permute.xlu0 %2721
          %2723 = vset.pattern.permute.xlu0 0
          %2724 = vperm.xlu0 %2723, %v2647
          %v2725 = vpop.permute.xlu0 %2724
          %2726 = vset.pattern.permute.xlu0 0
          %2727 = vperm.xlu0 %2726, %v2648
          %v2728 = vpop.permute.xlu0 %2727
          %2729 = vset.pattern.permute.xlu0 0
          %2730 = vperm.xlu0 %2729, %v2649
          %v2731 = vpop.permute.xlu0 %2730
          %2732 = vset.pattern.permute.xlu0 0
          %2733 = vperm.xlu0 %2732, %v2650
          %v2734 = vpop.permute.xlu0 %2733
          %2735 = vset.pattern.permute.xlu0 0
          %2736 = vperm.xlu0 %2735, %v2651
          %v2737 = vpop.permute.xlu0 %2736
          %2738 = vset.pattern.permute.xlu0 0
          %2739 = vperm.xlu0 %2738, %v2652
          %v2740 = vpop.permute.xlu0 %2739
          %2741 = vset.pattern.permute.xlu0 0
          %2742 = vperm.xlu0 %2741, %v2653
          %v2743 = vpop.permute.xlu0 %2742
          %2744 = vset.pattern.permute.xlu0 0
          %2745 = vperm.xlu0 %2744, %v2654
          %v2746 = vpop.permute.xlu0 %2745
          %2747 = vset.pattern.permute.xlu0 0
          %2748 = vperm.xlu0 %2747, %v2655
          %v2749 = vpop.permute.xlu0 %2748
          %2750 = vset.pattern.permute.xlu0 0
          %2751 = vperm.xlu0 %2750, %v2656
          %v2752 = vpop.permute.xlu0 %2751
          %vm2753 = vcmp.eq.s32.totalorder %v2659, 1
          %vm2754 = vcmp.eq.s32.totalorder %v2662, 1
          %vm2755 = vcmp.eq.s32.totalorder %v2665, 1
          %vm2756 = vcmp.eq.s32.totalorder %v2668, 1
          %vm2757 = vcmp.eq.s32.totalorder %v2671, 1
          %vm2758 = vcmp.eq.s32.totalorder %v2674, 1
          %vm2759 = vcmp.eq.s32.totalorder %v2677, 1
          %vm2760 = vcmp.eq.s32.totalorder %v2680, 1
          %vm2761 = vcmp.eq.s32.totalorder %v2683, 1
          %vm2762 = vcmp.eq.s32.totalorder %v2686, 1
          %vm2763 = vcmp.eq.s32.totalorder %v2689, 1
          %vm2764 = vcmp.eq.s32.totalorder %v2692, 1
          %vm2765 = vcmp.eq.s32.totalorder %v2695, 1
          %vm2766 = vcmp.eq.s32.totalorder %v2698, 1
          %vm2767 = vcmp.eq.s32.totalorder %v2701, 1
          %vm2768 = vcmp.eq.s32.totalorder %v2704, 1
          %vm2769 = vcmp.eq.s32.totalorder %v2707, 1
          %vm2770 = vcmp.eq.s32.totalorder %v2710, 1
          %vm2771 = vcmp.eq.s32.totalorder %v2713, 1
          %vm2772 = vcmp.eq.s32.totalorder %v2716, 1
          %vm2773 = vcmp.eq.s32.totalorder %v2719, 1
          %vm2774 = vcmp.eq.s32.totalorder %v2722, 1
          %vm2775 = vcmp.eq.s32.totalorder %v2725, 1
          %vm2776 = vcmp.eq.s32.totalorder %v2728, 1
          %vm2777 = vcmp.eq.s32.totalorder %v2731, 1
          %vm2778 = vcmp.eq.s32.totalorder %v2734, 1
          %vm2779 = vcmp.eq.s32.totalorder %v2737, 1
          %vm2780 = vcmp.eq.s32.totalorder %v2740, 1
          %vm2781 = vcmp.eq.s32.totalorder %v2743, 1
          %vm2782 = vcmp.eq.s32.totalorder %v2746, 1
          %vm2783 = vcmp.eq.s32.totalorder %v2749, 1
          %vm2784 = vcmp.eq.s32.totalorder %v2752, 1
          %v2785 = vsel %vm2753, %v1802, -inf
          %v2786 = vsel %vm2753, %v1804, -inf
          %v2787 = vsel %vm2753, %v1995, -inf
          %v2788 = vsel %vm2753, %v1997, -inf
          %v2789 = vsel %vm2753, %v2188, -inf
          %v2790 = vsel %vm2753, %v2190, -inf
          %v2791 = vsel %vm2753, %v2381, -inf
          %v2792 = vsel %vm2753, %v2383, -inf
          %v2793 = vsel %vm2754, %v1806, -inf
          %v2794 = vsel %vm2754, %v1808, -inf
          %v2795 = vsel %vm2754, %v1999, -inf
          %v2796 = vsel %vm2754, %v2001, -inf
          %v2797 = vsel %vm2754, %v2192, -inf
          %v2798 = vsel %vm2754, %v2194, -inf
          %v2799 = vsel %vm2754, %v2385, -inf
          %v2800 = vsel %vm2754, %v2387, -inf
          %v2801 = vsel %vm2755, %v1812, -inf
          %v2802 = vsel %vm2755, %v1814, -inf
          %v2803 = vsel %vm2755, %v2005, -inf
          %v2804 = vsel %vm2755, %v2007, -inf
          %v2805 = vsel %vm2755, %v2198, -inf
          %v2806 = vsel %vm2755, %v2200, -inf
          %v2807 = vsel %vm2755, %v2391, -inf
          %v2808 = vsel %vm2755, %v2393, -inf
          %v2809 = vsel %vm2756, %v1816, -inf
          %v2810 = vsel %vm2756, %v1818, -inf
          %v2811 = vsel %vm2756, %v2009, -inf
          %v2812 = vsel %vm2756, %v2011, -inf
          %v2813 = vsel %vm2756, %v2202, -inf
          %v2814 = vsel %vm2756, %v2204, -inf
          %v2815 = vsel %vm2756, %v2395, -inf
          %v2816 = vsel %vm2756, %v2397, -inf
          %v2817 = vsel %vm2757, %v1822, -inf
          %v2818 = vsel %vm2757, %v1824, -inf
          %v2819 = vsel %vm2757, %v2015, -inf
          %v2820 = vsel %vm2757, %v2017, -inf
          %v2821 = vsel %vm2757, %v2208, -inf
          %v2822 = vsel %vm2757, %v2210, -inf
          %v2823 = vsel %vm2757, %v2401, -inf
          %v2824 = vsel %vm2757, %v2403, -inf
          %v2825 = vsel %vm2758, %v1826, -inf
          %v2826 = vsel %vm2758, %v1828, -inf
          %v2827 = vsel %vm2758, %v2019, -inf
          %v2828 = vsel %vm2758, %v2021, -inf
          %v2829 = vsel %vm2758, %v2212, -inf
          %v2830 = vsel %vm2758, %v2214, -inf
          %v2831 = vsel %vm2758, %v2405, -inf
          %v2832 = vsel %vm2758, %v2407, -inf
          %v2833 = vsel %vm2759, %v1832, -inf
          %v2834 = vsel %vm2759, %v1834, -inf
          %v2835 = vsel %vm2759, %v2025, -inf
          %v2836 = vsel %vm2759, %v2027, -inf
          %v2837 = vsel %vm2759, %v2218, -inf
          %v2838 = vsel %vm2759, %v2220, -inf
          %v2839 = vsel %vm2759, %v2411, -inf
          %v2840 = vsel %vm2759, %v2413, -inf
          %v2841 = vsel %vm2760, %v1836, -inf
          %v2842 = vsel %vm2760, %v1838, -inf
          %v2843 = vsel %vm2760, %v2029, -inf
          %v2844 = vsel %vm2760, %v2031, -inf
          %v2845 = vsel %vm2760, %v2222, -inf
          %v2846 = vsel %vm2760, %v2224, -inf
          %v2847 = vsel %vm2760, %v2415, -inf
          %v2848 = vsel %vm2760, %v2417, -inf
          %v2849 = vsel %vm2761, %v1842, -inf
          %v2850 = vsel %vm2761, %v1844, -inf
          %v2851 = vsel %vm2761, %v2035, -inf
          %v2852 = vsel %vm2761, %v2037, -inf
          %v2853 = vsel %vm2761, %v2228, -inf
          %v2854 = vsel %vm2761, %v2230, -inf
          %v2855 = vsel %vm2761, %v2421, -inf
          %v2856 = vsel %vm2761, %v2423, -inf
          %v2857 = vsel %vm2762, %v1846, -inf
          %v2858 = vsel %vm2762, %v1848, -inf
          %v2859 = vsel %vm2762, %v2039, -inf
          %v2860 = vsel %vm2762, %v2041, -inf
          %v2861 = vsel %vm2762, %v2232, -inf
          %v2862 = vsel %vm2762, %v2234, -inf
          %v2863 = vsel %vm2762, %v2425, -inf
          %v2864 = vsel %vm2762, %v2427, -inf
          %v2865 = vsel %vm2763, %v1852, -inf
          %v2866 = vsel %vm2763, %v1854, -inf
          %v2867 = vsel %vm2763, %v2045, -inf
          %v2868 = vsel %vm2763, %v2047, -inf
          %v2869 = vsel %vm2763, %v2238, -inf
          %v2870 = vsel %vm2763, %v2240, -inf
          %v2871 = vsel %vm2763, %v2431, -inf
          %v2872 = vsel %vm2763, %v2433, -inf
          %v2873 = vsel %vm2764, %v1856, -inf
          %v2874 = vsel %vm2764, %v1858, -inf
          %v2875 = vsel %vm2764, %v2049, -inf
          %v2876 = vsel %vm2764, %v2051, -inf
          %v2877 = vsel %vm2764, %v2242, -inf
          %v2878 = vsel %vm2764, %v2244, -inf
          %v2879 = vsel %vm2764, %v2435, -inf
          %v2880 = vsel %vm2764, %v2437, -inf
          %v2881 = vsel %vm2765, %v1862, -inf
          %v2882 = vsel %vm2765, %v1864, -inf
          %v2883 = vsel %vm2765, %v2055, -inf
          %v2884 = vsel %vm2765, %v2057, -inf
          %v2885 = vsel %vm2765, %v2248, -inf
          %v2886 = vsel %vm2765, %v2250, -inf
          %v2887 = vsel %vm2765, %v2441, -inf
          %v2888 = vsel %vm2765, %v2443, -inf
          %v2889 = vsel %vm2766, %v1866, -inf
          %v2890 = vsel %vm2766, %v1868, -inf
          %v2891 = vsel %vm2766, %v2059, -inf
          %v2892 = vsel %vm2766, %v2061, -inf
          %v2893 = vsel %vm2766, %v2252, -inf
          %v2894 = vsel %vm2766, %v2254, -inf
          %v2895 = vsel %vm2766, %v2445, -inf
          %v2896 = vsel %vm2766, %v2447, -inf
          %v2897 = vsel %vm2767, %v1872, -inf
          %v2898 = vsel %vm2767, %v1874, -inf
          %v2899 = vsel %vm2767, %v2065, -inf
          %v2900 = vsel %vm2767, %v2067, -inf
          %v2901 = vsel %vm2767, %v2258, -inf
          %v2902 = vsel %vm2767, %v2260, -inf
          %v2903 = vsel %vm2767, %v2451, -inf
          %v2904 = vsel %vm2767, %v2453, -inf
          %v2905 = vsel %vm2768, %v1876, -inf
          %v2906 = vsel %vm2768, %v1878, -inf
          %v2907 = vsel %vm2768, %v2069, -inf
          %v2908 = vsel %vm2768, %v2071, -inf
          %v2909 = vsel %vm2768, %v2262, -inf
          %v2910 = vsel %vm2768, %v2264, -inf
          %v2911 = vsel %vm2768, %v2455, -inf
          %v2912 = vsel %vm2768, %v2457, -inf
          %v2913 = vsel %vm2769, %v1882, -inf
          %v2914 = vsel %vm2769, %v1884, -inf
          %v2915 = vsel %vm2769, %v2075, -inf
          %v2916 = vsel %vm2769, %v2077, -inf
          %v2917 = vsel %vm2769, %v2268, -inf
          %v2918 = vsel %vm2769, %v2270, -inf
          %v2919 = vsel %vm2769, %v2461, -inf
          %v2920 = vsel %vm2769, %v2463, -inf
          %v2921 = vsel %vm2770, %v1886, -inf
          %v2922 = vsel %vm2770, %v1888, -inf
          %v2923 = vsel %vm2770, %v2079, -inf
          %v2924 = vsel %vm2770, %v2081, -inf
          %v2925 = vsel %vm2770, %v2272, -inf
          %v2926 = vsel %vm2770, %v2274, -inf
          %v2927 = vsel %vm2770, %v2465, -inf
          %v2928 = vsel %vm2770, %v2467, -inf
          %v2929 = vsel %vm2771, %v1892, -inf
          %v2930 = vsel %vm2771, %v1894, -inf
          %v2931 = vsel %vm2771, %v2085, -inf
          %v2932 = vsel %vm2771, %v2087, -inf
          %v2933 = vsel %vm2771, %v2278, -inf
          %v2934 = vsel %vm2771, %v2280, -inf
          %v2935 = vsel %vm2771, %v2471, -inf
          %v2936 = vsel %vm2771, %v2473, -inf
          %v2937 = vsel %vm2772, %v1896, -inf
          %v2938 = vsel %vm2772, %v1898, -inf
          %v2939 = vsel %vm2772, %v2089, -inf
          %v2940 = vsel %vm2772, %v2091, -inf
          %v2941 = vsel %vm2772, %v2282, -inf
          %v2942 = vsel %vm2772, %v2284, -inf
          %v2943 = vsel %vm2772, %v2475, -inf
          %v2944 = vsel %vm2772, %v2477, -inf
          %v2945 = vsel %vm2773, %v1902, -inf
          %v2946 = vsel %vm2773, %v1904, -inf
          %v2947 = vsel %vm2773, %v2095, -inf
          %v2948 = vsel %vm2773, %v2097, -inf
          %v2949 = vsel %vm2773, %v2288, -inf
          %v2950 = vsel %vm2773, %v2290, -inf
          %v2951 = vsel %vm2773, %v2481, -inf
          %v2952 = vsel %vm2773, %v2483, -inf
          %v2953 = vsel %vm2774, %v1906, -inf
          %v2954 = vsel %vm2774, %v1908, -inf
          %v2955 = vsel %vm2774, %v2099, -inf
          %v2956 = vsel %vm2774, %v2101, -inf
          %v2957 = vsel %vm2774, %v2292, -inf
          %v2958 = vsel %vm2774, %v2294, -inf
          %v2959 = vsel %vm2774, %v2485, -inf
          %v2960 = vsel %vm2774, %v2487, -inf
          %v2961 = vsel %vm2775, %v1912, -inf
          %v2962 = vsel %vm2775, %v1914, -inf
          %v2963 = vsel %vm2775, %v2105, -inf
          %v2964 = vsel %vm2775, %v2107, -inf
          %v2965 = vsel %vm2775, %v2298, -inf
          %v2966 = vsel %vm2775, %v2300, -inf
          %v2967 = vsel %vm2775, %v2491, -inf
          %v2968 = vsel %vm2775, %v2493, -inf
          %v2969 = vsel %vm2776, %v1916, -inf
          %v2970 = vsel %vm2776, %v1918, -inf
          %v2971 = vsel %vm2776, %v2109, -inf
          %v2972 = vsel %vm2776, %v2111, -inf
          %v2973 = vsel %vm2776, %v2302, -inf
          %v2974 = vsel %vm2776, %v2304, -inf
          %v2975 = vsel %vm2776, %v2495, -inf
          %v2976 = vsel %vm2776, %v2497, -inf
          %v2977 = vsel %vm2777, %v1922, -inf
          %v2978 = vsel %vm2777, %v1924, -inf
          %v2979 = vsel %vm2777, %v2115, -inf
          %v2980 = vsel %vm2777, %v2117, -inf
          %v2981 = vsel %vm2777, %v2308, -inf
          %v2982 = vsel %vm2777, %v2310, -inf
          %v2983 = vsel %vm2777, %v2501, -inf
          %v2984 = vsel %vm2777, %v2503, -inf
          %v2985 = vsel %vm2778, %v1926, -inf
          %v2986 = vsel %vm2778, %v1928, -inf
          %v2987 = vsel %vm2778, %v2119, -inf
          %v2988 = vsel %vm2778, %v2121, -inf
          %v2989 = vsel %vm2778, %v2312, -inf
          %v2990 = vsel %vm2778, %v2314, -inf
          %v2991 = vsel %vm2778, %v2505, -inf
          %v2992 = vsel %vm2778, %v2507, -inf
          %v2993 = vsel %vm2779, %v1932, -inf
          %v2994 = vsel %vm2779, %v1934, -inf
          %v2995 = vsel %vm2779, %v2125, -inf
          %v2996 = vsel %vm2779, %v2127, -inf
          %v2997 = vsel %vm2779, %v2318, -inf
          %v2998 = vsel %vm2779, %v2320, -inf
          %v2999 = vsel %vm2779, %v2511, -inf
          %v3000 = vsel %vm2779, %v2513, -inf
          %v3001 = vsel %vm2780, %v1936, -inf
          %v3002 = vsel %vm2780, %v1938, -inf
          %v3003 = vsel %vm2780, %v2129, -inf
          %v3004 = vsel %vm2780, %v2131, -inf
          %v3005 = vsel %vm2780, %v2322, -inf
          %v3006 = vsel %vm2780, %v2324, -inf
          %v3007 = vsel %vm2780, %v2515, -inf
          %v3008 = vsel %vm2780, %v2517, -inf
          %v3009 = vsel %vm2781, %v1942, -inf
          %v3010 = vsel %vm2781, %v1944, -inf
          %v3011 = vsel %vm2781, %v2135, -inf
          %v3012 = vsel %vm2781, %v2137, -inf
          %v3013 = vsel %vm2781, %v2328, -inf
          %v3014 = vsel %vm2781, %v2330, -inf
          %v3015 = vsel %vm2781, %v2521, -inf
          %v3016 = vsel %vm2781, %v2523, -inf
          %v3017 = vsel %vm2782, %v1946, -inf
          %v3018 = vsel %vm2782, %v1948, -inf
          %v3019 = vsel %vm2782, %v2139, -inf
          %v3020 = vsel %vm2782, %v2141, -inf
          %v3021 = vsel %vm2782, %v2332, -inf
          %v3022 = vsel %vm2782, %v2334, -inf
          %v3023 = vsel %vm2782, %v2525, -inf
          %v3024 = vsel %vm2782, %v2527, -inf
          %v3025 = vsel %vm2783, %v1952, -inf
          %v3026 = vsel %vm2783, %v1954, -inf
          %v3027 = vsel %vm2783, %v2145, -inf
          %v3028 = vsel %vm2783, %v2147, -inf
          %v3029 = vsel %vm2783, %v2338, -inf
          %v3030 = vsel %vm2783, %v2340, -inf
          %v3031 = vsel %vm2783, %v2531, -inf
          %v3032 = vsel %vm2783, %v2533, -inf
          %v3033 = vsel %vm2784, %v1956, -inf
          %v3034 = vsel %vm2784, %v1958, -inf
          %v3035 = vsel %vm2784, %v2149, -inf
          %v3036 = vsel %vm2784, %v2151, -inf
          %v3037 = vsel %vm2784, %v2342, -inf
          %v3038 = vsel %vm2784, %v2344, -inf
          %v3039 = vsel %vm2784, %v2535, -inf
          %v3040 = vsel %vm2784, %v2537, -inf
          %v3041 = vmax.f32 %v2785, %v2793
          %v3042 = vmax.f32 %v3041, %v2801
          %v3043 = vmax.f32 %v3042, %v2809
          %v3044 = vmax.f32 %v3043, %v2817
          %v3045 = vmax.f32 %v3044, %v2825
          %v3046 = vmax.f32 %v3045, %v2833
          %v3047 = vmax.f32 %v3046, %v2841
          %v3048 = vmax.f32 %v3047, %v2849
          %v3049 = vmax.f32 %v3048, %v2857
          %v3050 = vmax.f32 %v3049, %v2865
          %v3051 = vmax.f32 %v3050, %v2873
          %v3052 = vmax.f32 %v3051, %v2881
          %v3053 = vmax.f32 %v3052, %v2889
          %v3054 = vmax.f32 %v3053, %v2897
          %v3055 = vmax.f32 %v3054, %v2905
          %v3056 = vmax.f32 %v3055, %v2913
          %v3057 = vmax.f32 %v3056, %v2921
          %v3058 = vmax.f32 %v3057, %v2929
          %v3059 = vmax.f32 %v3058, %v2937
          %v3060 = vmax.f32 %v3059, %v2945
          %v3061 = vmax.f32 %v3060, %v2953
          %v3062 = vmax.f32 %v3061, %v2961
          %v3063 = vmax.f32 %v3062, %v2969
          %v3064 = vmax.f32 %v3063, %v2977
          %v3065 = vmax.f32 %v3064, %v2985
          %v3066 = vmax.f32 %v3065, %v2993
          %v3067 = vmax.f32 %v3066, %v3001
          %v3068 = vmax.f32 %v3067, %v3009
          %v3069 = vmax.f32 %v3068, %v3017
          %v3070 = vmax.f32 %v3069, %v3025
          %v3071 = vmax.f32 %v3070, %v3033
          %v3072 = vrot.slane %v3071, 4
          %v3073 = vmax.f32 %v3071, %v3072
          %v3074 = vrot.slane %v3073, 2
          %v3075 = vmax.f32 %v3073, %v3074
          %v3076 = vrot.slane %v3075, 1
          %v3077 = vmax.f32 %v3075, %v3076
          %v3078 = vmax.f32 %v2786, %v2794
          %v3079 = vmax.f32 %v3078, %v2802
          %v3080 = vmax.f32 %v3079, %v2810
          %v3081 = vmax.f32 %v3080, %v2818
          %v3082 = vmax.f32 %v3081, %v2826
          %v3083 = vmax.f32 %v3082, %v2834
          %v3084 = vmax.f32 %v3083, %v2842
          %v3085 = vmax.f32 %v3084, %v2850
          %v3086 = vmax.f32 %v3085, %v2858
          %v3087 = vmax.f32 %v3086, %v2866
          %v3088 = vmax.f32 %v3087, %v2874
          %v3089 = vmax.f32 %v3088, %v2882
          %v3090 = vmax.f32 %v3089, %v2890
          %v3091 = vmax.f32 %v3090, %v2898
          %v3092 = vmax.f32 %v3091, %v2906
          %v3093 = vmax.f32 %v3092, %v2914
          %v3094 = vmax.f32 %v3093, %v2922
          %v3095 = vmax.f32 %v3094, %v2930
          %v3096 = vmax.f32 %v3095, %v2938
          %v3097 = vmax.f32 %v3096, %v2946
          %v3098 = vmax.f32 %v3097, %v2954
          %v3099 = vmax.f32 %v3098, %v2962
          %v3100 = vmax.f32 %v3099, %v2970
          %v3101 = vmax.f32 %v3100, %v2978
          %v3102 = vmax.f32 %v3101, %v2986
          %v3103 = vmax.f32 %v3102, %v2994
          %v3104 = vmax.f32 %v3103, %v3002
          %v3105 = vmax.f32 %v3104, %v3010
          %v3106 = vmax.f32 %v3105, %v3018
          %v3107 = vmax.f32 %v3106, %v3026
          %v3108 = vmax.f32 %v3107, %v3034
          %v3109 = vrot.slane %v3108, 4
          %v3110 = vmax.f32 %v3108, %v3109
          %v3111 = vrot.slane %v3110, 2
          %v3112 = vmax.f32 %v3110, %v3111
          %v3113 = vrot.slane %v3112, 1
          %v3114 = vmax.f32 %v3112, %v3113
          %v3115 = vmax.f32 %v2787, %v2795
          %v3116 = vmax.f32 %v3115, %v2803
          %v3117 = vmax.f32 %v3116, %v2811
          %v3118 = vmax.f32 %v3117, %v2819
          %v3119 = vmax.f32 %v3118, %v2827
          %v3120 = vmax.f32 %v3119, %v2835
          %v3121 = vmax.f32 %v3120, %v2843
          %v3122 = vmax.f32 %v3121, %v2851
          %v3123 = vmax.f32 %v3122, %v2859
          %v3124 = vmax.f32 %v3123, %v2867
          %v3125 = vmax.f32 %v3124, %v2875
          %v3126 = vmax.f32 %v3125, %v2883
          %v3127 = vmax.f32 %v3126, %v2891
          %v3128 = vmax.f32 %v3127, %v2899
          %v3129 = vmax.f32 %v3128, %v2907
          %v3130 = vmax.f32 %v3129, %v2915
          %v3131 = vmax.f32 %v3130, %v2923
          %v3132 = vmax.f32 %v3131, %v2931
          %v3133 = vmax.f32 %v3132, %v2939
          %v3134 = vmax.f32 %v3133, %v2947
          %v3135 = vmax.f32 %v3134, %v2955
          %v3136 = vmax.f32 %v3135, %v2963
          %v3137 = vmax.f32 %v3136, %v2971
          %v3138 = vmax.f32 %v3137, %v2979
          %v3139 = vmax.f32 %v3138, %v2987
          %v3140 = vmax.f32 %v3139, %v2995
          %v3141 = vmax.f32 %v3140, %v3003
          %v3142 = vmax.f32 %v3141, %v3011
          %v3143 = vmax.f32 %v3142, %v3019
          %v3144 = vmax.f32 %v3143, %v3027
          %v3145 = vmax.f32 %v3144, %v3035
          %v3146 = vrot.slane %v3145, 4
          %v3147 = vmax.f32 %v3145, %v3146
          %v3148 = vrot.slane %v3147, 2
          %v3149 = vmax.f32 %v3147, %v3148
          %v3150 = vrot.slane %v3149, 1
          %v3151 = vmax.f32 %v3149, %v3150
          %v3152 = vmax.f32 %v2788, %v2796
          %v3153 = vmax.f32 %v3152, %v2804
          %v3154 = vmax.f32 %v3153, %v2812
          %v3155 = vmax.f32 %v3154, %v2820
          %v3156 = vmax.f32 %v3155, %v2828
          %v3157 = vmax.f32 %v3156, %v2836
          %v3158 = vmax.f32 %v3157, %v2844
          %v3159 = vmax.f32 %v3158, %v2852
          %v3160 = vmax.f32 %v3159, %v2860
          %v3161 = vmax.f32 %v3160, %v2868
          %v3162 = vmax.f32 %v3161, %v2876
          %v3163 = vmax.f32 %v3162, %v2884
          %v3164 = vmax.f32 %v3163, %v2892
          %v3165 = vmax.f32 %v3164, %v2900
          %v3166 = vmax.f32 %v3165, %v2908
          %v3167 = vmax.f32 %v3166, %v2916
          %v3168 = vmax.f32 %v3167, %v2924
          %v3169 = vmax.f32 %v3168, %v2932
          %v3170 = vmax.f32 %v3169, %v2940
          %v3171 = vmax.f32 %v3170, %v2948
          %v3172 = vmax.f32 %v3171, %v2956
          %v3173 = vmax.f32 %v3172, %v2964
          %v3174 = vmax.f32 %v3173, %v2972
          %v3175 = vmax.f32 %v3174, %v2980
          %v3176 = vmax.f32 %v3175, %v2988
          %v3177 = vmax.f32 %v3176, %v2996
          %v3178 = vmax.f32 %v3177, %v3004
          %v3179 = vmax.f32 %v3178, %v3012
          %v3180 = vmax.f32 %v3179, %v3020
          %v3181 = vmax.f32 %v3180, %v3028
          %v3182 = vmax.f32 %v3181, %v3036
          %v3183 = vrot.slane %v3182, 4
          %v3184 = vmax.f32 %v3182, %v3183
          %v3185 = vrot.slane %v3184, 2
          %v3186 = vmax.f32 %v3184, %v3185
          %v3187 = vrot.slane %v3186, 1
          %v3188 = vmax.f32 %v3186, %v3187
          %v3189 = vmax.f32 %v2789, %v2797
          %v3190 = vmax.f32 %v3189, %v2805
          %v3191 = vmax.f32 %v3190, %v2813
          %v3192 = vmax.f32 %v3191, %v2821
          %v3193 = vmax.f32 %v3192, %v2829
          %v3194 = vmax.f32 %v3193, %v2837
          %v3195 = vmax.f32 %v3194, %v2845
          %v3196 = vmax.f32 %v3195, %v2853
          %v3197 = vmax.f32 %v3196, %v2861
          %v3198 = vmax.f32 %v3197, %v2869
          %v3199 = vmax.f32 %v3198, %v2877
          %v3200 = vmax.f32 %v3199, %v2885
          %v3201 = vmax.f32 %v3200, %v2893
          %v3202 = vmax.f32 %v3201, %v2901
          %v3203 = vmax.f32 %v3202, %v2909
          %v3204 = vmax.f32 %v3203, %v2917
          %v3205 = vmax.f32 %v3204, %v2925
          %v3206 = vmax.f32 %v3205, %v2933
          %v3207 = vmax.f32 %v3206, %v2941
          %v3208 = vmax.f32 %v3207, %v2949
          %v3209 = vmax.f32 %v3208, %v2957
          %v3210 = vmax.f32 %v3209, %v2965
          %v3211 = vmax.f32 %v3210, %v2973
          %v3212 = vmax.f32 %v3211, %v2981
          %v3213 = vmax.f32 %v3212, %v2989
          %v3214 = vmax.f32 %v3213, %v2997
          %v3215 = vmax.f32 %v3214, %v3005
          %v3216 = vmax.f32 %v3215, %v3013
          %v3217 = vmax.f32 %v3216, %v3021
          %v3218 = vmax.f32 %v3217, %v3029
          %v3219 = vmax.f32 %v3218, %v3037
          %v3220 = vrot.slane %v3219, 4
          %v3221 = vmax.f32 %v3219, %v3220
          %v3222 = vrot.slane %v3221, 2
          %v3223 = vmax.f32 %v3221, %v3222
          %v3224 = vrot.slane %v3223, 1
          %v3225 = vmax.f32 %v3223, %v3224
          %v3226 = vmax.f32 %v2790, %v2798
          %v3227 = vmax.f32 %v3226, %v2806
          %v3228 = vmax.f32 %v3227, %v2814
          %v3229 = vmax.f32 %v3228, %v2822
          %v3230 = vmax.f32 %v3229, %v2830
          %v3231 = vmax.f32 %v3230, %v2838
          %v3232 = vmax.f32 %v3231, %v2846
          %v3233 = vmax.f32 %v3232, %v2854
          %v3234 = vmax.f32 %v3233, %v2862
          %v3235 = vmax.f32 %v3234, %v2870
          %v3236 = vmax.f32 %v3235, %v2878
          %v3237 = vmax.f32 %v3236, %v2886
          %v3238 = vmax.f32 %v3237, %v2894
          %v3239 = vmax.f32 %v3238, %v2902
          %v3240 = vmax.f32 %v3239, %v2910
          %v3241 = vmax.f32 %v3240, %v2918
          %v3242 = vmax.f32 %v3241, %v2926
          %v3243 = vmax.f32 %v3242, %v2934
          %v3244 = vmax.f32 %v3243, %v2942
          %v3245 = vmax.f32 %v3244, %v2950
          %v3246 = vmax.f32 %v3245, %v2958
          %v3247 = vmax.f32 %v3246, %v2966
          %v3248 = vmax.f32 %v3247, %v2974
          %v3249 = vmax.f32 %v3248, %v2982
          %v3250 = vmax.f32 %v3249, %v2990
          %v3251 = vmax.f32 %v3250, %v2998
          %v3252 = vmax.f32 %v3251, %v3006
          %v3253 = vmax.f32 %v3252, %v3014
          %v3254 = vmax.f32 %v3253, %v3022
          %v3255 = vmax.f32 %v3254, %v3030
          %v3256 = vmax.f32 %v3255, %v3038
          %v3257 = vrot.slane %v3256, 4
          %v3258 = vmax.f32 %v3256, %v3257
          %v3259 = vrot.slane %v3258, 2
          %v3260 = vmax.f32 %v3258, %v3259
          %v3261 = vrot.slane %v3260, 1
          %v3262 = vmax.f32 %v3260, %v3261
          %v3263 = vmax.f32 %v2791, %v2799
          %v3264 = vmax.f32 %v3263, %v2807
          %v3265 = vmax.f32 %v3264, %v2815
          %v3266 = vmax.f32 %v3265, %v2823
          %v3267 = vmax.f32 %v3266, %v2831
          %v3268 = vmax.f32 %v3267, %v2839
          %v3269 = vmax.f32 %v3268, %v2847
          %v3270 = vmax.f32 %v3269, %v2855
          %v3271 = vmax.f32 %v3270, %v2863
          %v3272 = vmax.f32 %v3271, %v2871
          %v3273 = vmax.f32 %v3272, %v2879
          %v3274 = vmax.f32 %v3273, %v2887
          %v3275 = vmax.f32 %v3274, %v2895
          %v3276 = vmax.f32 %v3275, %v2903
          %v3277 = vmax.f32 %v3276, %v2911
          %v3278 = vmax.f32 %v3277, %v2919
          %v3279 = vmax.f32 %v3278, %v2927
          %v3280 = vmax.f32 %v3279, %v2935
          %v3281 = vmax.f32 %v3280, %v2943
          %v3282 = vmax.f32 %v3281, %v2951
          %v3283 = vmax.f32 %v3282, %v2959
          %v3284 = vmax.f32 %v3283, %v2967
          %v3285 = vmax.f32 %v3284, %v2975
          %v3286 = vmax.f32 %v3285, %v2983
          %v3287 = vmax.f32 %v3286, %v2991
          %v3288 = vmax.f32 %v3287, %v2999
          %v3289 = vmax.f32 %v3288, %v3007
          %v3290 = vmax.f32 %v3289, %v3015
          %v3291 = vmax.f32 %v3290, %v3023
          %v3292 = vmax.f32 %v3291, %v3031
          %v3293 = vmax.f32 %v3292, %v3039
          %v3294 = vrot.slane %v3293, 4
          %v3295 = vmax.f32 %v3293, %v3294
          %v3296 = vrot.slane %v3295, 2
          %v3297 = vmax.f32 %v3295, %v3296
          %v3298 = vrot.slane %v3297, 1
          %v3299 = vmax.f32 %v3297, %v3298
          %v3300 = vmax.f32 %v2792, %v2800
          %v3301 = vmax.f32 %v3300, %v2808
          %v3302 = vmax.f32 %v3301, %v2816
          %v3303 = vmax.f32 %v3302, %v2824
          %v3304 = vmax.f32 %v3303, %v2832
          %v3305 = vmax.f32 %v3304, %v2840
          %v3306 = vmax.f32 %v3305, %v2848
          %v3307 = vmax.f32 %v3306, %v2856
          %v3308 = vmax.f32 %v3307, %v2864
          %v3309 = vmax.f32 %v3308, %v2872
          %v3310 = vmax.f32 %v3309, %v2880
          %v3311 = vmax.f32 %v3310, %v2888
          %v3312 = vmax.f32 %v3311, %v2896
          %v3313 = vmax.f32 %v3312, %v2904
          %v3314 = vmax.f32 %v3313, %v2912
          %v3315 = vmax.f32 %v3314, %v2920
          %v3316 = vmax.f32 %v3315, %v2928
          %v3317 = vmax.f32 %v3316, %v2936
          %v3318 = vmax.f32 %v3317, %v2944
          %v3319 = vmax.f32 %v3318, %v2952
          %v3320 = vmax.f32 %v3319, %v2960
          %v3321 = vmax.f32 %v3320, %v2968
          %v3322 = vmax.f32 %v3321, %v2976
          %v3323 = vmax.f32 %v3322, %v2984
          %v3324 = vmax.f32 %v3323, %v2992
          %v3325 = vmax.f32 %v3324, %v3000
          %v3326 = vmax.f32 %v3325, %v3008
          %v3327 = vmax.f32 %v3326, %v3016
          %v3328 = vmax.f32 %v3327, %v3024
          %v3329 = vmax.f32 %v3328, %v3032
          %v3330 = vmax.f32 %v3329, %v3040
          %v3331 = vrot.slane %v3330, 4
          %v3332 = vmax.f32 %v3330, %v3331
          %v3333 = vrot.slane %v3332, 2
          %v3334 = vmax.f32 %v3332, %v3333
          %v3335 = vrot.slane %v3334, 1
          %v3336 = vmax.f32 %v3334, %v3335
          %vm3337 = vcmp.eq.s32.totalorder %v2576, %v2592
          %v3338 = vsel %vm3337, 1, 0
          %vm3339 = vcmp.eq.s32.totalorder %v3338, 1
          %v3340 = vsel %vm3339, %v3077, %v2584
          %v3341 = vsel %vm3339, %v3114, %v2585
          %v3342 = vsel %vm3339, %v3151, %v2586
          %v3343 = vsel %vm3339, %v3188, %v2587
          %v3344 = vsel %vm3339, %v3225, %v2588
          %v3345 = vsel %vm3339, %v3262, %v2589
          %v3346 = vsel %vm3339, %v3299, %v2590
          %v3347 = vsel %vm3339, %v3336, %v2591
        $region57: #{tpu_custom_call.1} parent=51 // loop_footer
          %s2581 = sadd.s32 %s2579, 1
        $region58: #{tpu_custom_call.1} parent=51 // loop_footer_branch
          %2578 = sbr.rel target = $region54
        $region59: #{tpu_custom_call.1} parent=51 // loop_exit
          _
        %v3356 = vcombine.low %v2584, %v2585
        %v3357 = vcombine.low %v2586, %v2587
        %v3359 = vunpack.c.l.s4 1983009808
        %v3360 = vunpack.c.0.s8 %v3359
        %v3361 = vlaneseq
        %v3362 = vshrl.u32 %v3361, 7
        %v3363 = vsub.s32 %v3360, %v3362
        %v3364 = vrot.slane %v3356, %v3363
        %v3366 = vunpack.c.l.s4 1983009808
        %v3367 = vunpack.c.0.s8 %v3366
        %v3368 = vlaneseq
        %v3369 = vshrl.u32 %v3368, 7
        %v3370 = vsub.s32 %v3367, %v3369
        %v3371 = vrot.slane %v3357, %v3370
        %v3372 = vcombine.low %v3364, %v3371
        %v3373 = vcombine.low %v2588, %v2589
        %v3374 = vcombine.low %v2590, %v2591
        %v3376 = vunpack.c.l.s4 1983009808
        %v3377 = vunpack.c.0.s8 %v3376
        %v3378 = vlaneseq
        %v3379 = vshrl.u32 %v3378, 7
        %v3380 = vsub.s32 %v3377, %v3379
        %v3381 = vrot.slane %v3373, %v3380
        %v3383 = vunpack.c.l.s4 1983009808
        %v3384 = vunpack.c.0.s8 %v3383
        %v3385 = vlaneseq
        %v3386 = vshrl.u32 %v3385, 7
        %v3387 = vsub.s32 %v3384, %v3386
        %v3388 = vrot.slane %v3374, %v3387
        %v3389 = vcombine.low %v3381, %v3388
        %3392 = vst [vmem:[%s322] sm:$0xff] %v3372
        %3393 = vst [vmem:[%s322 + $0x8] sm:$0xff] %v3389
        %s3394 = sand.u32 %s215, 1
        %s3395 = scalar_lea.sflag [#allocation5], %s3394
        %s3396 = sand.u32 %s215, 1
        %s3397 = smul.addr %s3396, 16
        %s3398 = scalar_lea.vmem [#allocation4], %s3397
        // Predicated region
        $region60: #{tpu_custom_call.1} parent=51 // pred_check
          %p3399 = pneg %p225
        $region61: #{tpu_custom_call.1} parent=51 // pred_check_branch
          %3401 = sbr.rel (%p3399) target = $region63
        $region62: #{tpu_custom_call.1} parent=51 // pred_region
          %s3403 = ssub.s32 256, 256
          %3404 = vsyncadd %s3395, %s3403
          %s3405 = smul.addr %s29, 8
          %s3406 = smul.addr %s3405, 32
          %s3407 = scalar_lea.hbm %s9, %s3406
          %s3409 = sshll.u32 %s3398, 4
          %s3410 = int_to_ptr.vmem [resolvable:$true] %s3409
          %3412 = dma.vmem_to_hbm [thread:$0]  %s3410, 256, %s3407, %s3395
        $region63: #{tpu_custom_call.1} parent=51 // pred_fallthru
          _
      $region52: #{tpu_custom_call.1} parent=5 // pred_fallthru
        _
      %p3413 = scmp.le.s32.totalorder 2, %s24
      // Predicated region
      $region64: #{tpu_custom_call.1} parent=5 // pred_check
        %p3414 = pneg %p3413
      $region65: #{tpu_custom_call.1} parent=5 // pred_check_branch
        %3416 = sbr.rel (%p3414) target = $region67
      $region66: #{tpu_custom_call.1} parent=5 // pred_region
        %s3417 = ssub.s32 %s24, 2
        // Predicated region
        $region68: #{tpu_custom_call.1} parent=66 // pred_check
          %p3418 = pneg %p231
        $region69: #{tpu_custom_call.1} parent=66 // pred_check_branch
          %3420 = sbr.rel (%p3418) target = $region71
        $region70: #{tpu_custom_call.1} parent=66 // pred_region
          %s3421 = sand.u32 %s216, 1
          %s3422 = scalar_lea.sflag [#allocation5], %s3421
          %s3423 = sand.u32 %s216, 1
          %s3424 = smul.addr %s3423, 16
          %s3425 = scalar_lea.vmem [#allocation4], %s3424
          %3426 = dma.done %s3422, 256
        $region71: #{tpu_custom_call.1} parent=66 // pred_fallthru
          _
      $region67: #{tpu_custom_call.1} parent=5 // pred_fallthru
        _
    $region6: #{tpu_custom_call.1} parent=1 // loop_footer
      %s28 = sadd.s32 1, %s24
    $region7: #{tpu_custom_call.1} parent=1 // loop_footer_branch
      %23 = sbr.rel target = $region3
    $region8: #{tpu_custom_call.1} parent=1 // loop_exit
      _
    %3427 = vsyncpa [#allocation5], 1
    %s3428 = scalar_lea.sflag [#allocation5], 1
    %3429 = vsyncpa %s3428, 1

</llo_original>
